<compile_context>
chip_gen: v5e
topology: v5e:2x2
jax: 0.10.0
libtpu: 0.0.40
codegen_flags: <defaults>
</compile_context>

<pallas_src>
import functools

import jax
import jax.numpy as jnp
from jax.experimental import pallas as pl
from jax.experimental.pallas import tpu as pltpu

LANE = 128  # pad channel / class dims to the 128-lane vreg width


def _round_up(x, m):
    return (x + m - 1) // m * m


def _is_pow2(n):
    return n > 0 and (n & (n - 1)) == 0


def _vmod(x, d):
    # Vector int modulo by a static divisor; bit-AND when d is a power of two
    # (guaranteed-supported VPU op).  TODO(synk): general divisor path unused
    # for the pow2 spatial sizes exercised here.
    return (x & (d - 1)) if _is_pow2(d) else x % d


def _vdiv(x, d):
    return (x >> (int(d).bit_length() - 1)) if _is_pow2(d) else x // d


# ---------------------------------------------------------------------------
# Fused kernel: conv1(im2col matmul)+BN+ReLU -> conv2(roll-im2col, one K=9*128
# matmul)+BN+ReLU -> global-avg-pool (matmul) -> FC.  One grid step per BB
# images (batch-blocked).
# ---------------------------------------------------------------------------
def _fused_timmnet_kernel(xcol_ref, w1_ref, s1_ref, t1_ref, w2_ref, s2_ref,
                          t2_ref, pool_ref, wfc_ref, bfc_ref, o_ref, tap_ref,
                          *, H, W):
    HW = H * W
    M = xcol_ref.shape[0]          # BB * H * W rows (BB images per grid step)
    C1P = w1_ref.shape[-1]         # conv1 out channels (padded to 128)

    # ---- conv1: one im2col matmul (M, 128) x (128, 128), bf16 on the MXU ----
    a1 = jnp.dot(xcol_ref[...], w1_ref[...],
                 preferred_element_type=jnp.float32)             # (M, C1P) f32
    y1 = jnp.maximum(a1 * s1_ref[...] + t1_ref[...], 0.0)         # BN + ReLU

    # ---- conv2 im2col: 9 taps via sublane rolls + edge masks (all aligned) --
    # Flat row p = img*HW + h*W + w.  Tap (dh, dw) of output row p is
    # y1[p + dh*W + dw]; it is valid iff 0 <= h+dh < H and 0 <= w+dw < W, and
    # every row that would wrap across an image/array boundary is exactly one
    # of the masked (invalid) rows, so a whole-array roll is safe.
    row = jax.lax.broadcasted_iota(jnp.int32, (M, 1), 0)
    h_pos = _vdiv(_vmod(row, HW), W)
    w_pos = _vmod(row, W)
    for kh in range(3):
        for kw in range(3):
            dh, dw = kh - 1, kw - 1
            delta = dh * W + dw
            t = kh * 3 + kw
            if delta == 0:
                tap_ref[:, t * C1P:(t + 1) * C1P] = y1.astype(tap_ref.dtype)
            else:
                rolled = pltpu.roll(y1, shift=(-delta) % M, axis=0)
                valid = ((h_pos + dh >= 0) & (h_pos + dh < H) &
                         (w_pos + dw >= 0) & (w_pos + dw < W))
                # TODO(synk): rolling a single bf16 copy of y1 would drop these
                # per-tap f32->bf16 cast passes; kept f32 since packed sublane
                # rotates are the riskier lowering path.
                tap_ref[:, t * C1P:(t + 1) * C1P] = jnp.where(
                    valid, rolled, 0.0).astype(tap_ref.dtype)

    # ---- conv2: single (M, 9*C1P) x (9*C1P, C2P) bf16 matmul ----------------
    a2 = jnp.dot(tap_ref[...], w2_ref[...],
                 preferred_element_type=jnp.float32)              # (M, C2P) f32
    y2 = jnp.maximum(a2 * s2_ref[...] + t2_ref[...], 0.0)

    # ---- global average pool as a matmul against the precomputed operand ----
    pooled = jnp.dot(pool_ref[...], y2,
                     preferred_element_type=jnp.float32)          # (BB*8, C2P)

    # ---- FC head (f32, tiny) -------------------------------------------------
    logits = jnp.dot(pooled, wfc_ref[...],
                     preferred_element_type=jnp.float32) + bfc_ref[...]
    o_ref[...] = logits.astype(o_ref.dtype)                       # (BB*8, 128)


# ---------------------------------------------------------------------------
# Parameter construction / padding to the lane-dense layout
# ---------------------------------------------------------------------------
def init_params(key, cin=4, c1=32, c2=32, num_classes=10):
    ks = jax.random.split(key, 8)
    p = {}
    p["w1"] = 0.1 * jax.random.normal(ks[0], (3, 3, cin, c1), jnp.float32)
    p["scale1"] = 1.0 + 0.01 * jax.random.normal(ks[1], (c1,), jnp.float32)
    p["shift1"] = 0.01 * jax.random.normal(ks[2], (c1,), jnp.float32)
    p["w2"] = 0.1 * jax.random.normal(ks[3], (3, 3, c1, c2), jnp.float32)
    p["scale2"] = 1.0 + 0.01 * jax.random.normal(ks[4], (c2,), jnp.float32)
    p["shift2"] = 0.01 * jax.random.normal(ks[5], (c2,), jnp.float32)
    p["w_fc"] = 0.1 * jax.random.normal(ks[6], (c2, num_classes), jnp.float32)
    p["b_fc"] = 0.01 * jax.random.normal(ks[7], (num_classes,), jnp.float32)
    return p


def pad_params(p):
    """Zero-pad channels/classes to 128 lanes; conv weights bf16, FC/BN f32."""
    _, _, cin, c1 = p["w1"].shape
    c2 = p["w2"].shape[-1]
    nc = p["w_fc"].shape[-1]
    K1, K1P = 9 * cin, _round_up(9 * cin, LANE)
    C1P, C2P, NCP = _round_up(c1, LANE), _round_up(c2, LANE), _round_up(nc, LANE)

    w1 = jnp.pad(p["w1"].reshape(K1, c1),
                 ((0, K1P - K1), (0, C1P - c1))).astype(jnp.bfloat16)
    s1 = jnp.pad(p["scale1"], (0, C1P - c1)).reshape(1, C1P).astype(jnp.float32)
    t1 = jnp.pad(p["shift1"], (0, C1P - c1)).reshape(1, C1P).astype(jnp.float32)
    # conv2 weights flattened to (9*C1P, C2P): conv2 becomes a single K=9*128
    # matmul against the in-kernel im2col tap tensor (tap t = kh*3 + kw).
    w2 = jnp.pad(p["w2"], ((0, 0), (0, 0), (0, C1P - c1), (0, C2P - c2)))
    w2 = w2.reshape(9 * C1P, C2P).astype(jnp.bfloat16)
    s2 = jnp.pad(p["scale2"], (0, C2P - c2)).reshape(1, C2P).astype(jnp.float32)
    t2 = jnp.pad(p["shift2"], (0, C2P - c2)).reshape(1, C2P).astype(jnp.float32)
    wfc = jnp.pad(p["w_fc"], ((0, C2P - c2), (0, NCP - nc))).astype(jnp.float32)
    bfc = jnp.pad(p["b_fc"], (0, NCP - nc)).reshape(1, NCP).astype(jnp.float32)
    return dict(w1=w1, scale1=s1, shift1=t1, w2=w2, scale2=s2, shift2=t2,
                w_fc=wfc, b_fc=bfc)


# ---------------------------------------------------------------------------
# Forward: NCHW in, (B, num_classes) out — one fused pallas_call
# ---------------------------------------------------------------------------
@functools.partial(jax.jit, static_argnames=("num_classes",))
def timmnet_forward(x_nchw, pp, *, num_classes):
    x = jnp.transpose(x_nchw, (0, 2, 3, 1)).astype(jnp.float32)   # NCHW -> NHWC
    B, H, W, cin = x.shape
    HW = H * W
    K1P, C1P = pp["w1"].shape
    C2P = pp["w2"].shape[-1]
    NCP = pp["w_fc"].shape[-1]
    K1 = 9 * cin

    # conv1 im2col in plain JAX (activations are tiny at this size).
    # TODO(synk): for real timm-sized inputs, DMA the raw padded image and
    # build the taps in-kernel to avoid the ~9x HBM read inflation.
    xp = jnp.pad(x, ((0, 0), (1, 1), (1, 1), (0, 0)))
    taps = [xp[:, i:i + H, j:j + W, :] for i in range(3) for j in range(3)]
    xcol = jnp.stack(taps, axis=3).reshape(B, HW, K1)
    xcol = jnp.pad(xcol, ((0, 0), (0, 0), (0, K1P - K1)))
    xcol = xcol.reshape(B * HW, K1P).astype(jnp.bfloat16)

    # Batch blocking: 2 coarse grid steps (one per v7x TensorCore; near-minimal
    # per-step overhead on single-TC v5e/v6e), single step for odd/size-1 batch.
    num_steps = 2 if (B >= 2 and B % 2 == 0) else 1
    BB = B // num_steps
    M = BB * HW

    # GAP operand: row r of a step averages image r//8 of that step (8 sublane
    # replicas keep the final store an unmasked (8,128) tile per image).
    img_row = jnp.arange(BB * 8, dtype=jnp.int32) // 8
    img_col = jnp.arange(M, dtype=jnp.int32) // HW
    pool = jnp.where(img_row[:, None] == img_col[None, :],
                     jnp.float32(1.0 / HW), jnp.float32(0.0))

    flops = B * (2 * HW * K1P * C1P + 2 * HW * (9 * C1P) * C2P
                 + 2 * 8 * HW * C2P + 2 * 8 * C2P * NCP)
    bytes_accessed = (xcol.size * 2 + pp["w1"].size * 2 + pp["w2"].size * 2
                      + pp["w_fc"].size * 4 + pool.size * 4 + B * 8 * NCP * 4
                      + (2 * C1P + 2 * C2P + NCP) * 4)

    kernel = functools.partial(_fused_timmnet_kernel, H=H, W=W)

    out = pl.pallas_call(
        kernel,
        out_shape=jax.ShapeDtypeStruct((B * 8, NCP), jnp.float32),
        grid_spec=pltpu.PrefetchScalarGridSpec(
            num_scalar_prefetch=0,
            grid=(num_steps,),
            in_specs=[
                pl.BlockSpec((M, K1P), lambda b: (b, 0)),         # conv1 im2col
                pl.BlockSpec((K1P, C1P), lambda b: (0, 0)),       # w1
                pl.BlockSpec((1, C1P), lambda b: (0, 0)),         # scale1
                pl.BlockSpec((1, C1P), lambda b: (0, 0)),         # shift1
                pl.BlockSpec((9 * C1P, C2P), lambda b: (0, 0)),   # w2 (flat)
                pl.BlockSpec((1, C2P), lambda b: (0, 0)),         # scale2
                pl.BlockSpec((1, C2P), lambda b: (0, 0)),         # shift2
                pl.BlockSpec((BB * 8, M), lambda b: (0, 0)),      # GAP operand
                pl.BlockSpec((C2P, NCP), lambda b: (0, 0)),       # w_fc
                pl.BlockSpec((1, NCP), lambda b: (0, 0)),         # b_fc
            ],
            out_specs=pl.BlockSpec((BB * 8, NCP), lambda b: (b, 0)),
            scratch_shapes=[pltpu.VMEM((M, 9 * C1P), jnp.bfloat16)],  # conv2 taps
        ),
        compiler_params=pltpu.CompilerParams(
            dimension_semantics=("parallel",),       # v7x: 2 TCs split the steps
        ),
        cost_estimate=pl.CostEstimate(flops=flops, transcendentals=0,
                                      bytes_accessed=bytes_accessed),
    )(xcol, pp["w1"], pp["scale1"], pp["shift1"],
      pp["w2"], pp["scale2"], pp["shift2"], pool, pp["w_fc"], pp["b_fc"])

    return out.reshape(B, 8, NCP)[:, 0, :num_classes]   # drop replicas + pad


# ---------------------------------------------------------------------------
# Pure-JAX reference (f32) for correctness checking
# ---------------------------------------------------------------------------
def _reference_forward(x_nchw, p):
    x = jnp.transpose(x_nchw, (0, 2, 3, 1))

    def conv_bn_relu(x, w, s, t):
        y = jax.lax.conv_general_dilated(
            x, w, (1, 1), "SAME", dimension_numbers=("NHWC", "HWIO", "NHWC"))
        return jnp.maximum(y * s + t, 0.0)

    x = conv_bn_relu(x, p["w1"], p["scale1"], p["shift1"])
    x = conv_bn_relu(x, p["w2"], p["scale2"], p["shift2"])
    pooled = jnp.mean(x, axis=(1, 2))
    return pooled @ p["w_fc"] + p["b_fc"]


if __name__ == "__main__":
    key = jax.random.PRNGKey(0)
    k_x, k_p = jax.random.split(key)

    B, C, H, W = 2, 4, 16, 16
    NUM_CLASSES = 10
    x = jax.random.normal(k_x, (B, C, H, W), jnp.float32)
    params = init_params(k_p, cin=C, c1=32, c2=32, num_classes=NUM_CLASSES)
    padded = pad_params(params)

    out = timmnet_forward(x, padded, num_classes=NUM_CLASSES)
    out = jax.block_until_ready(out)
    assert out.shape == (B, NUM_CLASSES), out.shape
    assert bool(jnp.all(jnp.isfinite(out)))

    ref = _reference_forward(x, params)
    assert jnp.allclose(out, ref, rtol=5e-2, atol=5e-2), (
        float(jnp.max(jnp.abs(out - ref))))
    print("KERNEL_OK")
</pallas_src>

<mosaic_0001>
module attributes {stable_mosaic.version = 11 : i64} {
  func.func @_fused_timmnet_kernel(%arg0: i32, %arg1: memref<256x128xbf16, #tpu.memory_space<vmem>>, %arg2: memref<128x128xbf16, #tpu.memory_space<vmem>>, %arg3: memref<1x128xf32, #tpu.memory_space<vmem>>, %arg4: memref<1x128xf32, #tpu.memory_space<vmem>>, %arg5: memref<1152x128xbf16, #tpu.memory_space<vmem>>, %arg6: memref<1x128xf32, #tpu.memory_space<vmem>>, %arg7: memref<1x128xf32, #tpu.memory_space<vmem>>, %arg8: memref<8x256xf32, #tpu.memory_space<vmem>>, %arg9: memref<128x128xf32, #tpu.memory_space<vmem>>, %arg10: memref<1x128xf32, #tpu.memory_space<vmem>>, %arg11: memref<8x128xf32, #tpu.memory_space<vmem>>, %arg12: memref<256x1152xbf16, #tpu.memory_space<vmem>>) attributes {dimension_semantics = [#tpu.dimension_semantics<parallel>], iteration_bounds = array<i64: 2>, scalar_prefetch = 0 : i64, scratch_operands = 1 : i64, tpu.core_type = #tpu.core_type<tc>, window_params = [{transform_indices = @transform_0, window_bounds = array<i64: 256, 128>}, {pipeline_mode = #tpu.pipeline_mode<synchronous>, transform_indices = @transform_1, window_bounds = array<i64: 128, 128>}, {pipeline_mode = #tpu.pipeline_mode<synchronous>, transform_indices = @transform_2, window_bounds = array<i64: 1, 128>}, {pipeline_mode = #tpu.pipeline_mode<synchronous>, transform_indices = @transform_3, window_bounds = array<i64: 1, 128>}, {pipeline_mode = #tpu.pipeline_mode<synchronous>, transform_indices = @transform_4, window_bounds = array<i64: 1152, 128>}, {pipeline_mode = #tpu.pipeline_mode<synchronous>, transform_indices = @transform_5, window_bounds = array<i64: 1, 128>}, {pipeline_mode = #tpu.pipeline_mode<synchronous>, transform_indices = @transform_6, window_bounds = array<i64: 1, 128>}, {pipeline_mode = #tpu.pipeline_mode<synchronous>, transform_indices = @transform_7, window_bounds = array<i64: 8, 256>}, {pipeline_mode = #tpu.pipeline_mode<synchronous>, transform_indices = @transform_8, window_bounds = array<i64: 128, 128>}, {pipeline_mode = #tpu.pipeline_mode<synchronous>, transform_indices = @transform_9, window_bounds = array<i64: 1, 128>}, {transform_indices = @transform_10, window_bounds = array<i64: 8, 128>}]} {
    %c0 = arith.constant 0 : index
    %c0_0 = arith.constant 0 : index
    %0 = vector.load %arg1[%c0, %c0_0] : memref<256x128xbf16, #tpu.memory_space<vmem>>, vector<256x128xbf16>
    %c0_1 = arith.constant 0 : index
    %c0_2 = arith.constant 0 : index
    %1 = vector.load %arg2[%c0_1, %c0_2] : memref<128x128xbf16, #tpu.memory_space<vmem>>, vector<128x128xbf16>
    %cst = arith.constant dense<0.000000e+00> : vector<256x128xf32>
    %2 = tpu.matmul %0, %1, %cst {dimension_numbers = #tpu.dot_dimension_numbers<[1], [0], [0], [1], [0, 0, 1, 1], [], []>} : vector<256x128xbf16>, vector<128x128xbf16>, vector<256x128xf32> -> vector<256x128xf32>
    %c0_3 = arith.constant 0 : index
    %c0_4 = arith.constant 0 : index
    %3 = vector.load %arg3[%c0_3, %c0_4] : memref<1x128xf32, #tpu.memory_space<vmem>>, vector<1x128xf32>
    %4 = vector.broadcast %3 : vector<1x128xf32> to vector<256x128xf32>
    %5 = arith.mulf %2, %4 : vector<256x128xf32>
    %c0_5 = arith.constant 0 : index
    %c0_6 = arith.constant 0 : index
    %6 = vector.load %arg4[%c0_5, %c0_6] : memref<1x128xf32, #tpu.memory_space<vmem>>, vector<1x128xf32>
    %7 = vector.broadcast %6 : vector<1x128xf32> to vector<256x128xf32>
    %8 = arith.addf %5, %7 : vector<256x128xf32>
    %cst_7 = arith.constant 0.000000e+00 : f32
    %9 = vector.broadcast %cst_7 : f32 to vector<256x128xf32>
    %10 = arith.maximumf %8, %9 : vector<256x128xf32>
    %11 = tpu.iota {dimensions = array<i32: 0>} : vector<256x1xi32>
    %c255_i32 = arith.constant 255 : i32
    %12 = vector.broadcast %c255_i32 : i32 to vector<256x1xi32>
    %13 = arith.andi %11, %12 : vector<256x1xi32>
    %c4_i32 = arith.constant 4 : i32
    %14 = vector.broadcast %c4_i32 : i32 to vector<256x1xi32>
    %15 = arith.shrsi %13, %14 : vector<256x1xi32>
    %c15_i32 = arith.constant 15 : i32
    %16 = vector.broadcast %c15_i32 : i32 to vector<256x1xi32>
    %17 = arith.andi %11, %16 : vector<256x1xi32>
    %c17_i32 = arith.constant 17 : i32
    %18 = tpu.dynamic_rotate %10 by %c17_i32 dim 0 : vector<256x128xf32>, i32 -> vector<256x128xf32>
    %c-1_i32 = arith.constant -1 : i32
    %19 = vector.broadcast %c-1_i32 : i32 to vector<256x1xi32>
    %20 = arith.addi %15, %19 : vector<256x1xi32>
    %c0_i32 = arith.constant 0 : i32
    %21 = vector.broadcast %c0_i32 : i32 to vector<256x1xi32>
    %22 = arith.cmpi sge, %20, %21 : vector<256x1xi32>
    %c-1_i32_8 = arith.constant -1 : i32
    %23 = vector.broadcast %c-1_i32_8 : i32 to vector<256x1xi32>
    %24 = arith.addi %15, %23 : vector<256x1xi32>
    %c16_i32 = arith.constant 16 : i32
    %25 = vector.broadcast %c16_i32 : i32 to vector<256x1xi32>
    %26 = arith.cmpi slt, %24, %25 : vector<256x1xi32>
    %27 = arith.andi %22, %26 : vector<256x1xi1>
    %c-1_i32_9 = arith.constant -1 : i32
    %28 = vector.broadcast %c-1_i32_9 : i32 to vector<256x1xi32>
    %29 = arith.addi %17, %28 : vector<256x1xi32>
    %c0_i32_10 = arith.constant 0 : i32
    %30 = vector.broadcast %c0_i32_10 : i32 to vector<256x1xi32>
    %31 = arith.cmpi sge, %29, %30 : vector<256x1xi32>
    %32 = arith.andi %27, %31 : vector<256x1xi1>
    %c-1_i32_11 = arith.constant -1 : i32
    %33 = vector.broadcast %c-1_i32_11 : i32 to vector<256x1xi32>
    %34 = arith.addi %17, %33 : vector<256x1xi32>
    %c16_i32_12 = arith.constant 16 : i32
    %35 = vector.broadcast %c16_i32_12 : i32 to vector<256x1xi32>
    %36 = arith.cmpi slt, %34, %35 : vector<256x1xi32>
    %37 = arith.andi %32, %36 : vector<256x1xi1>
    %cst_13 = arith.constant 0.000000e+00 : f32
    %38 = vector.shape_cast %37 : vector<256x1xi1> to vector<256x1xi1>
    %39 = vector.broadcast %38 : vector<256x1xi1> to vector<256x128xi1>
    %40 = vector.broadcast %cst_13 : f32 to vector<256x128xf32>
    %41 = arith.select %39, %18, %40 : vector<256x128xi1>, vector<256x128xf32>
    %42 = arith.truncf %41 : vector<256x128xf32> to vector<256x128xbf16>
    %c0_14 = arith.constant 0 : index
    %c0_15 = arith.constant 0 : index
    %43 = vector.load %arg12[%c0_14, %c0_15] : memref<256x1152xbf16, #tpu.memory_space<vmem>>, vector<256x128xbf16>
    tpu.vector_store %arg12[%c0_14, %c0_15], %42 {strides = array<i32>} : memref<256x1152xbf16, #tpu.memory_space<vmem>>, vector<256x128xbf16>,
    %c16_i32_16 = arith.constant 16 : i32
    %44 = tpu.dynamic_rotate %10 by %c16_i32_16 dim 0 : vector<256x128xf32>, i32 -> vector<256x128xf32>
    %c-1_i32_17 = arith.constant -1 : i32
    %45 = vector.broadcast %c-1_i32_17 : i32 to vector<256x1xi32>
    %46 = arith.addi %15, %45 : vector<256x1xi32>
    %c0_i32_18 = arith.constant 0 : i32
    %47 = vector.broadcast %c0_i32_18 : i32 to vector<256x1xi32>
    %48 = arith.cmpi sge, %46, %47 : vector<256x1xi32>
    %c-1_i32_19 = arith.constant -1 : i32
    %49 = vector.broadcast %c-1_i32_19 : i32 to vector<256x1xi32>
    %50 = arith.addi %15, %49 : vector<256x1xi32>
    %c16_i32_20 = arith.constant 16 : i32
    %51 = vector.broadcast %c16_i32_20 : i32 to vector<256x1xi32>
    %52 = arith.cmpi slt, %50, %51 : vector<256x1xi32>
    %53 = arith.andi %48, %52 : vector<256x1xi1>
    %c0_i32_21 = arith.constant 0 : i32
    %54 = vector.broadcast %c0_i32_21 : i32 to vector<256x1xi32>
    %55 = arith.addi %17, %54 : vector<256x1xi32>
    %c0_i32_22 = arith.constant 0 : i32
    %56 = vector.broadcast %c0_i32_22 : i32 to vector<256x1xi32>
    %57 = arith.cmpi sge, %55, %56 : vector<256x1xi32>
    %58 = arith.andi %53, %57 : vector<256x1xi1>
    %c0_i32_23 = arith.constant 0 : i32
    %59 = vector.broadcast %c0_i32_23 : i32 to vector<256x1xi32>
    %60 = arith.addi %17, %59 : vector<256x1xi32>
    %c16_i32_24 = arith.constant 16 : i32
    %61 = vector.broadcast %c16_i32_24 : i32 to vector<256x1xi32>
    %62 = arith.cmpi slt, %60, %61 : vector<256x1xi32>
    %63 = arith.andi %58, %62 : vector<256x1xi1>
    %cst_25 = arith.constant 0.000000e+00 : f32
    %64 = vector.shape_cast %63 : vector<256x1xi1> to vector<256x1xi1>
    %65 = vector.broadcast %64 : vector<256x1xi1> to vector<256x128xi1>
    %66 = vector.broadcast %cst_25 : f32 to vector<256x128xf32>
    %67 = arith.select %65, %44, %66 : vector<256x128xi1>, vector<256x128xf32>
    %68 = arith.truncf %67 : vector<256x128xf32> to vector<256x128xbf16>
    %c0_26 = arith.constant 0 : index
    %c128 = arith.constant 128 : index
    %69 = vector.load %arg12[%c0_26, %c128] : memref<256x1152xbf16, #tpu.memory_space<vmem>>, vector<256x128xbf16>
    tpu.vector_store %arg12[%c0_26, %c128], %68 {strides = array<i32>} : memref<256x1152xbf16, #tpu.memory_space<vmem>>, vector<256x128xbf16>,
    %c15_i32_27 = arith.constant 15 : i32
    %70 = tpu.dynamic_rotate %10 by %c15_i32_27 dim 0 : vector<256x128xf32>, i32 -> vector<256x128xf32>
    %c-1_i32_28 = arith.constant -1 : i32
    %71 = vector.broadcast %c-1_i32_28 : i32 to vector<256x1xi32>
    %72 = arith.addi %15, %71 : vector<256x1xi32>
    %c0_i32_29 = arith.constant 0 : i32
    %73 = vector.broadcast %c0_i32_29 : i32 to vector<256x1xi32>
    %74 = arith.cmpi sge, %72, %73 : vector<256x1xi32>
    %c-1_i32_30 = arith.constant -1 : i32
    %75 = vector.broadcast %c-1_i32_30 : i32 to vector<256x1xi32>
    %76 = arith.addi %15, %75 : vector<256x1xi32>
    %c16_i32_31 = arith.constant 16 : i32
    %77 = vector.broadcast %c16_i32_31 : i32 to vector<256x1xi32>
    %78 = arith.cmpi slt, %76, %77 : vector<256x1xi32>
    %79 = arith.andi %74, %78 : vector<256x1xi1>
    %c1_i32 = arith.constant 1 : i32
    %80 = vector.broadcast %c1_i32 : i32 to vector<256x1xi32>
    %81 = arith.addi %17, %80 : vector<256x1xi32>
    %c0_i32_32 = arith.constant 0 : i32
    %82 = vector.broadcast %c0_i32_32 : i32 to vector<256x1xi32>
    %83 = arith.cmpi sge, %81, %82 : vector<256x1xi32>
    %84 = arith.andi %79, %83 : vector<256x1xi1>
    %c1_i32_33 = arith.constant 1 : i32
    %85 = vector.broadcast %c1_i32_33 : i32 to vector<256x1xi32>
    %86 = arith.addi %17, %85 : vector<256x1xi32>
    %c16_i32_34 = arith.constant 16 : i32
    %87 = vector.broadcast %c16_i32_34 : i32 to vector<256x1xi32>
    %88 = arith.cmpi slt, %86, %87 : vector<256x1xi32>
    %89 = arith.andi %84, %88 : vector<256x1xi1>
    %cst_35 = arith.constant 0.000000e+00 : f32
    %90 = vector.shape_cast %89 : vector<256x1xi1> to vector<256x1xi1>
    %91 = vector.broadcast %90 : vector<256x1xi1> to vector<256x128xi1>
    %92 = vector.broadcast %cst_35 : f32 to vector<256x128xf32>
    %93 = arith.select %91, %70, %92 : vector<256x128xi1>, vector<256x128xf32>
    %94 = arith.truncf %93 : vector<256x128xf32> to vector<256x128xbf16>
    %c0_36 = arith.constant 0 : index
    %c256 = arith.constant 256 : index
    %95 = vector.load %arg12[%c0_36, %c256] : memref<256x1152xbf16, #tpu.memory_space<vmem>>, vector<256x128xbf16>
    tpu.vector_store %arg12[%c0_36, %c256], %94 {strides = array<i32>} : memref<256x1152xbf16, #tpu.memory_space<vmem>>, vector<256x128xbf16>,
    %c1_i32_37 = arith.constant 1 : i32
    %96 = tpu.dynamic_rotate %10 by %c1_i32_37 dim 0 : vector<256x128xf32>, i32 -> vector<256x128xf32>
    %c0_i32_38 = arith.constant 0 : i32
    %97 = vector.broadcast %c0_i32_38 : i32 to vector<256x1xi32>
    %98 = arith.addi %15, %97 : vector<256x1xi32>
    %c0_i32_39 = arith.constant 0 : i32
    %99 = vector.broadcast %c0_i32_39 : i32 to vector<256x1xi32>
    %100 = arith.cmpi sge, %98, %99 : vector<256x1xi32>
    %c0_i32_40 = arith.constant 0 : i32
    %101 = vector.broadcast %c0_i32_40 : i32 to vector<256x1xi32>
    %102 = arith.addi %15, %101 : vector<256x1xi32>
    %c16_i32_41 = arith.constant 16 : i32
    %103 = vector.broadcast %c16_i32_41 : i32 to vector<256x1xi32>
    %104 = arith.cmpi slt, %102, %103 : vector<256x1xi32>
    %105 = arith.andi %100, %104 : vector<256x1xi1>
    %c-1_i32_42 = arith.constant -1 : i32
    %106 = vector.broadcast %c-1_i32_42 : i32 to vector<256x1xi32>
    %107 = arith.addi %17, %106 : vector<256x1xi32>
    %c0_i32_43 = arith.constant 0 : i32
    %108 = vector.broadcast %c0_i32_43 : i32 to vector<256x1xi32>
    %109 = arith.cmpi sge, %107, %108 : vector<256x1xi32>
    %110 = arith.andi %105, %109 : vector<256x1xi1>
    %c-1_i32_44 = arith.constant -1 : i32
    %111 = vector.broadcast %c-1_i32_44 : i32 to vector<256x1xi32>
    %112 = arith.addi %17, %111 : vector<256x1xi32>
    %c16_i32_45 = arith.constant 16 : i32
    %113 = vector.broadcast %c16_i32_45 : i32 to vector<256x1xi32>
    %114 = arith.cmpi slt, %112, %113 : vector<256x1xi32>
    %115 = arith.andi %110, %114 : vector<256x1xi1>
    %cst_46 = arith.constant 0.000000e+00 : f32
    %116 = vector.shape_cast %115 : vector<256x1xi1> to vector<256x1xi1>
    %117 = vector.broadcast %116 : vector<256x1xi1> to vector<256x128xi1>
    %118 = vector.broadcast %cst_46 : f32 to vector<256x128xf32>
    %119 = arith.select %117, %96, %118 : vector<256x128xi1>, vector<256x128xf32>
    %120 = arith.truncf %119 : vector<256x128xf32> to vector<256x128xbf16>
    %c0_47 = arith.constant 0 : index
    %c384 = arith.constant 384 : index
    %121 = vector.load %arg12[%c0_47, %c384] : memref<256x1152xbf16, #tpu.memory_space<vmem>>, vector<256x128xbf16>
    tpu.vector_store %arg12[%c0_47, %c384], %120 {strides = array<i32>} : memref<256x1152xbf16, #tpu.memory_space<vmem>>, vector<256x128xbf16>,
    %122 = arith.truncf %10 : vector<256x128xf32> to vector<256x128xbf16>
    %c0_48 = arith.constant 0 : index
    %c512 = arith.constant 512 : index
    %123 = vector.load %arg12[%c0_48, %c512] : memref<256x1152xbf16, #tpu.memory_space<vmem>>, vector<256x128xbf16>
    tpu.vector_store %arg12[%c0_48, %c512], %122 {strides = array<i32>} : memref<256x1152xbf16, #tpu.memory_space<vmem>>, vector<256x128xbf16>,
    %c255_i32_49 = arith.constant 255 : i32
    %124 = tpu.dynamic_rotate %10 by %c255_i32_49 dim 0 : vector<256x128xf32>, i32 -> vector<256x128xf32>
    %c0_i32_50 = arith.constant 0 : i32
    %125 = vector.broadcast %c0_i32_50 : i32 to vector<256x1xi32>
    %126 = arith.addi %15, %125 : vector<256x1xi32>
    %c0_i32_51 = arith.constant 0 : i32
    %127 = vector.broadcast %c0_i32_51 : i32 to vector<256x1xi32>
    %128 = arith.cmpi sge, %126, %127 : vector<256x1xi32>
    %c0_i32_52 = arith.constant 0 : i32
    %129 = vector.broadcast %c0_i32_52 : i32 to vector<256x1xi32>
    %130 = arith.addi %15, %129 : vector<256x1xi32>
    %c16_i32_53 = arith.constant 16 : i32
    %131 = vector.broadcast %c16_i32_53 : i32 to vector<256x1xi32>
    %132 = arith.cmpi slt, %130, %131 : vector<256x1xi32>
    %133 = arith.andi %128, %132 : vector<256x1xi1>
    %c1_i32_54 = arith.constant 1 : i32
    %134 = vector.broadcast %c1_i32_54 : i32 to vector<256x1xi32>
    %135 = arith.addi %17, %134 : vector<256x1xi32>
    %c0_i32_55 = arith.constant 0 : i32
    %136 = vector.broadcast %c0_i32_55 : i32 to vector<256x1xi32>
    %137 = arith.cmpi sge, %135, %136 : vector<256x1xi32>
    %138 = arith.andi %133, %137 : vector<256x1xi1>
    %c1_i32_56 = arith.constant 1 : i32
    %139 = vector.broadcast %c1_i32_56 : i32 to vector<256x1xi32>
    %140 = arith.addi %17, %139 : vector<256x1xi32>
    %c16_i32_57 = arith.constant 16 : i32
    %141 = vector.broadcast %c16_i32_57 : i32 to vector<256x1xi32>
    %142 = arith.cmpi slt, %140, %141 : vector<256x1xi32>
    %143 = arith.andi %138, %142 : vector<256x1xi1>
    %cst_58 = arith.constant 0.000000e+00 : f32
    %144 = vector.shape_cast %143 : vector<256x1xi1> to vector<256x1xi1>
    %145 = vector.broadcast %144 : vector<256x1xi1> to vector<256x128xi1>
    %146 = vector.broadcast %cst_58 : f32 to vector<256x128xf32>
    %147 = arith.select %145, %124, %146 : vector<256x128xi1>, vector<256x128xf32>
    %148 = arith.truncf %147 : vector<256x128xf32> to vector<256x128xbf16>
    %c0_59 = arith.constant 0 : index
    %c640 = arith.constant 640 : index
    %149 = vector.load %arg12[%c0_59, %c640] : memref<256x1152xbf16, #tpu.memory_space<vmem>>, vector<256x128xbf16>
    tpu.vector_store %arg12[%c0_59, %c640], %148 {strides = array<i32>} : memref<256x1152xbf16, #tpu.memory_space<vmem>>, vector<256x128xbf16>,
    %c241_i32 = arith.constant 241 : i32
    %150 = tpu.dynamic_rotate %10 by %c241_i32 dim 0 : vector<256x128xf32>, i32 -> vector<256x128xf32>
    %c1_i32_60 = arith.constant 1 : i32
    %151 = vector.broadcast %c1_i32_60 : i32 to vector<256x1xi32>
    %152 = arith.addi %15, %151 : vector<256x1xi32>
    %c0_i32_61 = arith.constant 0 : i32
    %153 = vector.broadcast %c0_i32_61 : i32 to vector<256x1xi32>
    %154 = arith.cmpi sge, %152, %153 : vector<256x1xi32>
    %c1_i32_62 = arith.constant 1 : i32
    %155 = vector.broadcast %c1_i32_62 : i32 to vector<256x1xi32>
    %156 = arith.addi %15, %155 : vector<256x1xi32>
    %c16_i32_63 = arith.constant 16 : i32
    %157 = vector.broadcast %c16_i32_63 : i32 to vector<256x1xi32>
    %158 = arith.cmpi slt, %156, %157 : vector<256x1xi32>
    %159 = arith.andi %154, %158 : vector<256x1xi1>
    %c-1_i32_64 = arith.constant -1 : i32
    %160 = vector.broadcast %c-1_i32_64 : i32 to vector<256x1xi32>
    %161 = arith.addi %17, %160 : vector<256x1xi32>
    %c0_i32_65 = arith.constant 0 : i32
    %162 = vector.broadcast %c0_i32_65 : i32 to vector<256x1xi32>
    %163 = arith.cmpi sge, %161, %162 : vector<256x1xi32>
    %164 = arith.andi %159, %163 : vector<256x1xi1>
    %c-1_i32_66 = arith.constant -1 : i32
    %165 = vector.broadcast %c-1_i32_66 : i32 to vector<256x1xi32>
    %166 = arith.addi %17, %165 : vector<256x1xi32>
    %c16_i32_67 = arith.constant 16 : i32
    %167 = vector.broadcast %c16_i32_67 : i32 to vector<256x1xi32>
    %168 = arith.cmpi slt, %166, %167 : vector<256x1xi32>
    %169 = arith.andi %164, %168 : vector<256x1xi1>
    %cst_68 = arith.constant 0.000000e+00 : f32
    %170 = vector.shape_cast %169 : vector<256x1xi1> to vector<256x1xi1>
    %171 = vector.broadcast %170 : vector<256x1xi1> to vector<256x128xi1>
    %172 = vector.broadcast %cst_68 : f32 to vector<256x128xf32>
    %173 = arith.select %171, %150, %172 : vector<256x128xi1>, vector<256x128xf32>
    %174 = arith.truncf %173 : vector<256x128xf32> to vector<256x128xbf16>
    %c0_69 = arith.constant 0 : index
    %c768 = arith.constant 768 : index
    %175 = vector.load %arg12[%c0_69, %c768] : memref<256x1152xbf16, #tpu.memory_space<vmem>>, vector<256x128xbf16>
    tpu.vector_store %arg12[%c0_69, %c768], %174 {strides = array<i32>} : memref<256x1152xbf16, #tpu.memory_space<vmem>>, vector<256x128xbf16>,
    %c240_i32 = arith.constant 240 : i32
    %176 = tpu.dynamic_rotate %10 by %c240_i32 dim 0 : vector<256x128xf32>, i32 -> vector<256x128xf32>
    %c1_i32_70 = arith.constant 1 : i32
    %177 = vector.broadcast %c1_i32_70 : i32 to vector<256x1xi32>
    %178 = arith.addi %15, %177 : vector<256x1xi32>
    %c0_i32_71 = arith.constant 0 : i32
    %179 = vector.broadcast %c0_i32_71 : i32 to vector<256x1xi32>
    %180 = arith.cmpi sge, %178, %179 : vector<256x1xi32>
    %c1_i32_72 = arith.constant 1 : i32
    %181 = vector.broadcast %c1_i32_72 : i32 to vector<256x1xi32>
    %182 = arith.addi %15, %181 : vector<256x1xi32>
    %c16_i32_73 = arith.constant 16 : i32
    %183 = vector.broadcast %c16_i32_73 : i32 to vector<256x1xi32>
    %184 = arith.cmpi slt, %182, %183 : vector<256x1xi32>
    %185 = arith.andi %180, %184 : vector<256x1xi1>
    %c0_i32_74 = arith.constant 0 : i32
    %186 = vector.broadcast %c0_i32_74 : i32 to vector<256x1xi32>
    %187 = arith.addi %17, %186 : vector<256x1xi32>
    %c0_i32_75 = arith.constant 0 : i32
    %188 = vector.broadcast %c0_i32_75 : i32 to vector<256x1xi32>
    %189 = arith.cmpi sge, %187, %188 : vector<256x1xi32>
    %190 = arith.andi %185, %189 : vector<256x1xi1>
    %c0_i32_76 = arith.constant 0 : i32
    %191 = vector.broadcast %c0_i32_76 : i32 to vector<256x1xi32>
    %192 = arith.addi %17, %191 : vector<256x1xi32>
    %c16_i32_77 = arith.constant 16 : i32
    %193 = vector.broadcast %c16_i32_77 : i32 to vector<256x1xi32>
    %194 = arith.cmpi slt, %192, %193 : vector<256x1xi32>
    %195 = arith.andi %190, %194 : vector<256x1xi1>
    %cst_78 = arith.constant 0.000000e+00 : f32
    %196 = vector.shape_cast %195 : vector<256x1xi1> to vector<256x1xi1>
    %197 = vector.broadcast %196 : vector<256x1xi1> to vector<256x128xi1>
    %198 = vector.broadcast %cst_78 : f32 to vector<256x128xf32>
    %199 = arith.select %197, %176, %198 : vector<256x128xi1>, vector<256x128xf32>
    %200 = arith.truncf %199 : vector<256x128xf32> to vector<256x128xbf16>
    %c0_79 = arith.constant 0 : index
    %c896 = arith.constant 896 : index
    %201 = vector.load %arg12[%c0_79, %c896] : memref<256x1152xbf16, #tpu.memory_space<vmem>>, vector<256x128xbf16>
    tpu.vector_store %arg12[%c0_79, %c896], %200 {strides = array<i32>} : memref<256x1152xbf16, #tpu.memory_space<vmem>>, vector<256x128xbf16>,
    %c239_i32 = arith.constant 239 : i32
    %202 = tpu.dynamic_rotate %10 by %c239_i32 dim 0 : vector<256x128xf32>, i32 -> vector<256x128xf32>
    %c1_i32_80 = arith.constant 1 : i32
    %203 = vector.broadcast %c1_i32_80 : i32 to vector<256x1xi32>
    %204 = arith.addi %15, %203 : vector<256x1xi32>
    %c0_i32_81 = arith.constant 0 : i32
    %205 = vector.broadcast %c0_i32_81 : i32 to vector<256x1xi32>
    %206 = arith.cmpi sge, %204, %205 : vector<256x1xi32>
    %c1_i32_82 = arith.constant 1 : i32
    %207 = vector.broadcast %c1_i32_82 : i32 to vector<256x1xi32>
    %208 = arith.addi %15, %207 : vector<256x1xi32>
    %c16_i32_83 = arith.constant 16 : i32
    %209 = vector.broadcast %c16_i32_83 : i32 to vector<256x1xi32>
    %210 = arith.cmpi slt, %208, %209 : vector<256x1xi32>
    %211 = arith.andi %206, %210 : vector<256x1xi1>
    %c1_i32_84 = arith.constant 1 : i32
    %212 = vector.broadcast %c1_i32_84 : i32 to vector<256x1xi32>
    %213 = arith.addi %17, %212 : vector<256x1xi32>
    %c0_i32_85 = arith.constant 0 : i32
    %214 = vector.broadcast %c0_i32_85 : i32 to vector<256x1xi32>
    %215 = arith.cmpi sge, %213, %214 : vector<256x1xi32>
    %216 = arith.andi %211, %215 : vector<256x1xi1>
    %c1_i32_86 = arith.constant 1 : i32
    %217 = vector.broadcast %c1_i32_86 : i32 to vector<256x1xi32>
    %218 = arith.addi %17, %217 : vector<256x1xi32>
    %c16_i32_87 = arith.constant 16 : i32
    %219 = vector.broadcast %c16_i32_87 : i32 to vector<256x1xi32>
    %220 = arith.cmpi slt, %218, %219 : vector<256x1xi32>
    %221 = arith.andi %216, %220 : vector<256x1xi1>
    %cst_88 = arith.constant 0.000000e+00 : f32
    %222 = vector.shape_cast %221 : vector<256x1xi1> to vector<256x1xi1>
    %223 = vector.broadcast %222 : vector<256x1xi1> to vector<256x128xi1>
    %224 = vector.broadcast %cst_88 : f32 to vector<256x128xf32>
    %225 = arith.select %223, %202, %224 : vector<256x128xi1>, vector<256x128xf32>
    %226 = arith.truncf %225 : vector<256x128xf32> to vector<256x128xbf16>
    %c0_89 = arith.constant 0 : index
    %c1024 = arith.constant 1024 : index
    %227 = vector.load %arg12[%c0_89, %c1024] : memref<256x1152xbf16, #tpu.memory_space<vmem>>, vector<256x128xbf16>
    tpu.vector_store %arg12[%c0_89, %c1024], %226 {strides = array<i32>} : memref<256x1152xbf16, #tpu.memory_space<vmem>>, vector<256x128xbf16>,
    %c0_90 = arith.constant 0 : index
    %c0_91 = arith.constant 0 : index
    %228 = vector.load %arg12[%c0_90, %c0_91] : memref<256x1152xbf16, #tpu.memory_space<vmem>>, vector<256x1152xbf16>
    %c0_92 = arith.constant 0 : index
    %c0_93 = arith.constant 0 : index
    %229 = vector.load %arg5[%c0_92, %c0_93] : memref<1152x128xbf16, #tpu.memory_space<vmem>>, vector<1152x128xbf16>
    %cst_94 = arith.constant dense<0.000000e+00> : vector<256x128xf32>
    %230 = tpu.matmul %228, %229, %cst_94 {dimension_numbers = #tpu.dot_dimension_numbers<[1], [0], [0], [1], [0, 0, 1, 1], [], []>} : vector<256x1152xbf16>, vector<1152x128xbf16>, vector<256x128xf32> -> vector<256x128xf32>
    %c0_95 = arith.constant 0 : index
    %c0_96 = arith.constant 0 : index
    %231 = vector.load %arg6[%c0_95, %c0_96] : memref<1x128xf32, #tpu.memory_space<vmem>>, vector<1x128xf32>
    %232 = vector.broadcast %231 : vector<1x128xf32> to vector<256x128xf32>
    %233 = arith.mulf %230, %232 : vector<256x128xf32>
    %c0_97 = arith.constant 0 : index
    %c0_98 = arith.constant 0 : index
    %234 = vector.load %arg7[%c0_97, %c0_98] : memref<1x128xf32, #tpu.memory_space<vmem>>, vector<1x128xf32>
    %235 = vector.broadcast %234 : vector<1x128xf32> to vector<256x128xf32>
    %236 = arith.addf %233, %235 : vector<256x128xf32>
    %cst_99 = arith.constant 0.000000e+00 : f32
    %237 = vector.broadcast %cst_99 : f32 to vector<256x128xf32>
    %238 = arith.maximumf %236, %237 : vector<256x128xf32>
    %c0_100 = arith.constant 0 : index
    %c0_101 = arith.constant 0 : index
    %239 = vector.load %arg8[%c0_100, %c0_101] : memref<8x256xf32, #tpu.memory_space<vmem>>, vector<8x256xf32>
    %cst_102 = arith.constant dense<0.000000e+00> : vector<8x128xf32>
    %240 = tpu.matmul %239, %238, %cst_102 {dimension_numbers = #tpu.dot_dimension_numbers<[1], [0], [0], [1], [0, 0, 1, 1], [], []>} : vector<8x256xf32>, vector<256x128xf32>, vector<8x128xf32> -> vector<8x128xf32>
    %c0_103 = arith.constant 0 : index
    %c0_104 = arith.constant 0 : index
    %241 = vector.load %arg9[%c0_103, %c0_104] : memref<128x128xf32, #tpu.memory_space<vmem>>, vector<128x128xf32>
    %cst_105 = arith.constant dense<0.000000e+00> : vector<8x128xf32>
    %242 = tpu.matmul %240, %241, %cst_105 {dimension_numbers = #tpu.dot_dimension_numbers<[1], [0], [0], [1], [0, 0, 1, 1], [], []>} : vector<8x128xf32>, vector<128x128xf32>, vector<8x128xf32> -> vector<8x128xf32>
    %c0_106 = arith.constant 0 : index
    %c0_107 = arith.constant 0 : index
    %243 = vector.load %arg10[%c0_106, %c0_107] : memref<1x128xf32, #tpu.memory_space<vmem>>, vector<1x128xf32>
    %244 = vector.broadcast %243 : vector<1x128xf32> to vector<8x128xf32>
    %245 = arith.addf %242, %244 : vector<8x128xf32>
    %c0_108 = arith.constant 0 : index
    %c0_109 = arith.constant 0 : index
    %246 = vector.load %arg11[%c0_108, %c0_109] : memref<8x128xf32, #tpu.memory_space<vmem>>, vector<8x128xf32>
    tpu.vector_store %arg11[%c0_108, %c0_109], %245 {strides = array<i32>} : memref<8x128xf32, #tpu.memory_space<vmem>>, vector<8x128xf32>,
    return
  }
  func.func @transform_0(%arg0: i32) -> (i32, i32) {
    %c0_i32 = arith.constant 0 : i32
    %c0_i32_0 = arith.constant 0 : i32
    return %arg0, %c0_i32 : i32, i32
  }
  func.func @transform_1(%arg0: i32) -> (i32, i32) {
    %c0_i32 = arith.constant 0 : i32
    %c0_i32_0 = arith.constant 0 : i32
    %c0_i32_1 = arith.constant 0 : i32
    return %c0_i32, %c0_i32_0 : i32, i32
  }
  func.func @transform_2(%arg0: i32) -> (i32, i32) {
    %c0_i32 = arith.constant 0 : i32
    %c0_i32_0 = arith.constant 0 : i32
    %c0_i32_1 = arith.constant 0 : i32
    return %c0_i32, %c0_i32_0 : i32, i32
  }
  func.func @transform_3(%arg0: i32) -> (i32, i32) {
    %c0_i32 = arith.constant 0 : i32
    %c0_i32_0 = arith.constant 0 : i32
    %c0_i32_1 = arith.constant 0 : i32
    return %c0_i32, %c0_i32_0 : i32, i32
  }
  func.func @transform_4(%arg0: i32) -> (i32, i32) {
    %c0_i32 = arith.constant 0 : i32
    %c0_i32_0 = arith.constant 0 : i32
    %c0_i32_1 = arith.constant 0 : i32
    return %c0_i32, %c0_i32_0 : i32, i32
  }
  func.func @transform_5(%arg0: i32) -> (i32, i32) {
    %c0_i32 = arith.constant 0 : i32
    %c0_i32_0 = arith.constant 0 : i32
    %c0_i32_1 = arith.constant 0 : i32
    return %c0_i32, %c0_i32_0 : i32, i32
  }
  func.func @transform_6(%arg0: i32) -> (i32, i32) {
    %c0_i32 = arith.constant 0 : i32
    %c0_i32_0 = arith.constant 0 : i32
    %c0_i32_1 = arith.constant 0 : i32
    return %c0_i32, %c0_i32_0 : i32, i32
  }
  func.func @transform_7(%arg0: i32) -> (i32, i32) {
    %c0_i32 = arith.constant 0 : i32
    %c0_i32_0 = arith.constant 0 : i32
    %c0_i32_1 = arith.constant 0 : i32
    return %c0_i32, %c0_i32_0 : i32, i32
  }
  func.func @transform_8(%arg0: i32) -> (i32, i32) {
    %c0_i32 = arith.constant 0 : i32
    %c0_i32_0 = arith.constant 0 : i32
    %c0_i32_1 = arith.constant 0 : i32
    return %c0_i32, %c0_i32_0 : i32, i32
  }
  func.func @transform_9(%arg0: i32) -> (i32, i32) {
    %c0_i32 = arith.constant 0 : i32
    %c0_i32_0 = arith.constant 0 : i32
    %c0_i32_1 = arith.constant 0 : i32
    return %c0_i32, %c0_i32_0 : i32, i32
  }
  func.func @transform_10(%arg0: i32) -> (i32, i32) {
    %c0_i32 = arith.constant 0 : i32
    %c0_i32_0 = arith.constant 0 : i32
    return %arg0, %c0_i32 : i32, i32
  }
}

</mosaic_0001>

<llo_original>
// kernel: timmnet_forward.1
$region0: #{timmnet_forward.1}
  #allocation0 [shape = 'u32[]', space=smem, size = 0x4, offset = 0x4, fixed_abs, tag = 'smem constant byte address 0x4 - core index']
  #allocation1 [shape = 'u32[72,128]{1,0:T(1,128)}', space=vmem, size = 0x9000, scoped, tag = 'internal scratch']
  #allocation2 [shape = 'bf16[256,1152]{1,0:T(8,128)(2,1)}', space=vmem, size = 0x90000, scoped, tag = 'scratch operand']
  %s0 = inlined_call_operand.vmem [shape: bf16[512,128], index: 0, kind: input, shape index: {}]
  %s1 = inlined_call_operand.vmem [shape: bf16[128,128], index: 1, kind: input, shape index: {}]
  %s2 = inlined_call_operand.vmem [shape: f32[1,128], index: 2, kind: input, shape index: {}]
  %s3 = inlined_call_operand.vmem [shape: f32[1,128], index: 3, kind: input, shape index: {}]
  %s4 = inlined_call_operand.vmem [shape: bf16[1152,128], index: 4, kind: input, shape index: {}]
  %s5 = inlined_call_operand.vmem [shape: f32[1,128], index: 5, kind: input, shape index: {}]
  %s6 = inlined_call_operand.vmem [shape: f32[1,128], index: 6, kind: input, shape index: {}]
  %s7 = inlined_call_operand.vmem [shape: f32[8,256], index: 7, kind: input, shape index: {}]
  %s8 = inlined_call_operand.vmem [shape: f32[128,128], index: 8, kind: input, shape index: {}]
  %s9 = inlined_call_operand.vmem [shape: f32[1,128], index: 9, kind: input, shape index: {}]
  %s10 = inlined_call_operand.vmem [shape: f32[16,128], index: 10, kind: output, shape index: {}]
  %s11 = sld [smem:[#allocation0]]
  $region73: #{timmnet_forward.1} parent=0
    _
  %s13 = ssub.s32 1, %s11
  %s14 = scalar_select 0, %s13, %s11
  loop: start=0, step=1, limit=4
  $region2: #{timmnet_forward.1} parent=0 // loop_pre_header
    _
  $region3: #{timmnet_forward.1} parent=0 // loop_header
    %s16 = sphi 0, %s20
    %p17 = scmp.ge.s32.totalorder %s16, 4
    %s26 = sphi 0, %s28
    %s29 = sphi 0, %s26
    %s30 = sphi 0, %s29
    %s46 = sphi 0, %s30
    %s50 = sphi 0, %s50
    %s52 = sphi 0, %s50
    %s53 = sphi 0, %s52
    %s67 = sphi 0, %s53
    %s71 = sphi 0, %s71
    %s73 = sphi 0, %s71
    %s74 = sphi 0, %s73
    %s88 = sphi 0, %s74
    %s92 = sphi 0, %s92
    %s94 = sphi 0, %s92
    %s95 = sphi 0, %s94
    %s109 = sphi 0, %s95
    %s113 = sphi 0, %s113
    %s115 = sphi 0, %s113
    %s116 = sphi 0, %s115
    %s130 = sphi 0, %s116
    %s134 = sphi 0, %s134
    %s136 = sphi 0, %s134
    %s137 = sphi 0, %s136
    %s151 = sphi 0, %s137
    %s155 = sphi 0, %s155
    %s157 = sphi 0, %s155
    %s158 = sphi 0, %s157
    %s172 = sphi 0, %s158
    %s176 = sphi 0, %s176
    %s178 = sphi 0, %s176
    %s179 = sphi 0, %s178
    %s193 = sphi 0, %s179
    %s197 = sphi 0, %s197
    %s199 = sphi 0, %s197
    %s200 = sphi 0, %s199
    %s214 = sphi 0, %s200
    %s218 = sphi 0, %s218
    %s220 = sphi 0, %s218
    %s221 = sphi 0, %s220
    %s235 = sphi 0, %s221
    %s241 = sphi 0, %s243
    %s244 = sphi 0, %s241
    %s245 = sphi 0, %s244
    %s261 = sphi 0, %s245
  $region4: #{timmnet_forward.1} parent=0 // loop_header_branch
    %19 = sbr.rel (%p17) target = $region8
  $region5: #{timmnet_forward.1} parent=0 // loop_body
    %s21 = ssub.s32 %s16, 1
    %s22 = ssub.s32 %s16, 2
    %s23 = sadd.s32 %s16, 1
    %s24 = ssub.s32 %s16, %s23
    %p25 = scmp.eq.s32.totalorder %s24, 0
    %s27 = sadd.s32 %s26, 1
    %s28 = scalar_select %p25, %s26, %s27
    %p31 = pneg %p25
    %p32 = scmp.eq.s32.totalorder %s16, 1
    %p33 = por %p31, %p32
    %p34 = scmp.ne.s32.totalorder %s26, %s29
    %p35 = scmp.eq.s32.totalorder %s16, 0
    %p36 = por %p34, %p35
    %p37 = scmp.ne.s32.totalorder %s26, %s29
    %p38 = scmp.eq.s32.totalorder %s21, 1
    %p39 = por %p37, %p38
    %p40 = scmp.ne.s32.totalorder %s29, %s30
    %p41 = scmp.eq.s32.totalorder %s21, 0
    %p42 = por %p40, %p41
    %p43 = scmp.ne.s32.totalorder %s29, %s30
    %p44 = scmp.eq.s32.totalorder %s22, 1
    %p45 = por %p43, %p44
    %p47 = scmp.ne.s32.totalorder %s30, %s46
    %p48 = scmp.eq.s32.totalorder %s22, 0
    %p49 = por %p47, %p48
    %s51 = sadd.s32 %s50, 1
    %p54 = scmp.eq.s32.totalorder %s16, 1
    %p55 = scmp.ne.s32.totalorder %s50, %s52
    %p56 = scmp.eq.s32.totalorder %s16, 0
    %p57 = por %p55, %p56
    %p58 = scmp.ne.s32.totalorder %s50, %s52
    %p59 = scmp.eq.s32.totalorder %s21, 1
    %p60 = por %p58, %p59
    %p61 = scmp.ne.s32.totalorder %s52, %s53
    %p62 = scmp.eq.s32.totalorder %s21, 0
    %p63 = por %p61, %p62
    %p64 = scmp.ne.s32.totalorder %s52, %s53
    %p65 = scmp.eq.s32.totalorder %s22, 1
    %p66 = por %p64, %p65
    %p68 = scmp.ne.s32.totalorder %s53, %s67
    %p69 = scmp.eq.s32.totalorder %s22, 0
    %p70 = por %p68, %p69
    %s72 = sadd.s32 %s71, 1
    %p75 = scmp.eq.s32.totalorder %s16, 1
    %p76 = scmp.ne.s32.totalorder %s71, %s73
    %p77 = scmp.eq.s32.totalorder %s16, 0
    %p78 = por %p76, %p77
    %p79 = scmp.ne.s32.totalorder %s71, %s73
    %p80 = scmp.eq.s32.totalorder %s21, 1
    %p81 = por %p79, %p80
    %p82 = scmp.ne.s32.totalorder %s73, %s74
    %p83 = scmp.eq.s32.totalorder %s21, 0
    %p84 = por %p82, %p83
    %p85 = scmp.ne.s32.totalorder %s73, %s74
    %p86 = scmp.eq.s32.totalorder %s22, 1
    %p87 = por %p85, %p86
    %p89 = scmp.ne.s32.totalorder %s74, %s88
    %p90 = scmp.eq.s32.totalorder %s22, 0
    %p91 = por %p89, %p90
    %s93 = sadd.s32 %s92, 1
    %p96 = scmp.eq.s32.totalorder %s16, 1
    %p97 = scmp.ne.s32.totalorder %s92, %s94
    %p98 = scmp.eq.s32.totalorder %s16, 0
    %p99 = por %p97, %p98
    %p100 = scmp.ne.s32.totalorder %s92, %s94
    %p101 = scmp.eq.s32.totalorder %s21, 1
    %p102 = por %p100, %p101
    %p103 = scmp.ne.s32.totalorder %s94, %s95
    %p104 = scmp.eq.s32.totalorder %s21, 0
    %p105 = por %p103, %p104
    %p106 = scmp.ne.s32.totalorder %s94, %s95
    %p107 = scmp.eq.s32.totalorder %s22, 1
    %p108 = por %p106, %p107
    %p110 = scmp.ne.s32.totalorder %s95, %s109
    %p111 = scmp.eq.s32.totalorder %s22, 0
    %p112 = por %p110, %p111
    %s114 = sadd.s32 %s113, 1
    %p117 = scmp.eq.s32.totalorder %s16, 1
    %p118 = scmp.ne.s32.totalorder %s113, %s115
    %p119 = scmp.eq.s32.totalorder %s16, 0
    %p120 = por %p118, %p119
    %p121 = scmp.ne.s32.totalorder %s113, %s115
    %p122 = scmp.eq.s32.totalorder %s21, 1
    %p123 = por %p121, %p122
    %p124 = scmp.ne.s32.totalorder %s115, %s116
    %p125 = scmp.eq.s32.totalorder %s21, 0
    %p126 = por %p124, %p125
    %p127 = scmp.ne.s32.totalorder %s115, %s116
    %p128 = scmp.eq.s32.totalorder %s22, 1
    %p129 = por %p127, %p128
    %p131 = scmp.ne.s32.totalorder %s116, %s130
    %p132 = scmp.eq.s32.totalorder %s22, 0
    %p133 = por %p131, %p132
    %s135 = sadd.s32 %s134, 1
    %p138 = scmp.eq.s32.totalorder %s16, 1
    %p139 = scmp.ne.s32.totalorder %s134, %s136
    %p140 = scmp.eq.s32.totalorder %s16, 0
    %p141 = por %p139, %p140
    %p142 = scmp.ne.s32.totalorder %s134, %s136
    %p143 = scmp.eq.s32.totalorder %s21, 1
    %p144 = por %p142, %p143
    %p145 = scmp.ne.s32.totalorder %s136, %s137
    %p146 = scmp.eq.s32.totalorder %s21, 0
    %p147 = por %p145, %p146
    %p148 = scmp.ne.s32.totalorder %s136, %s137
    %p149 = scmp.eq.s32.totalorder %s22, 1
    %p150 = por %p148, %p149
    %p152 = scmp.ne.s32.totalorder %s137, %s151
    %p153 = scmp.eq.s32.totalorder %s22, 0
    %p154 = por %p152, %p153
    %s156 = sadd.s32 %s155, 1
    %p159 = scmp.eq.s32.totalorder %s16, 1
    %p160 = scmp.ne.s32.totalorder %s155, %s157
    %p161 = scmp.eq.s32.totalorder %s16, 0
    %p162 = por %p160, %p161
    %p163 = scmp.ne.s32.totalorder %s155, %s157
    %p164 = scmp.eq.s32.totalorder %s21, 1
    %p165 = por %p163, %p164
    %p166 = scmp.ne.s32.totalorder %s157, %s158
    %p167 = scmp.eq.s32.totalorder %s21, 0
    %p168 = por %p166, %p167
    %p169 = scmp.ne.s32.totalorder %s157, %s158
    %p170 = scmp.eq.s32.totalorder %s22, 1
    %p171 = por %p169, %p170
    %p173 = scmp.ne.s32.totalorder %s158, %s172
    %p174 = scmp.eq.s32.totalorder %s22, 0
    %p175 = por %p173, %p174
    %s177 = sadd.s32 %s176, 1
    %p180 = scmp.eq.s32.totalorder %s16, 1
    %p181 = scmp.ne.s32.totalorder %s176, %s178
    %p182 = scmp.eq.s32.totalorder %s16, 0
    %p183 = por %p181, %p182
    %p184 = scmp.ne.s32.totalorder %s176, %s178
    %p185 = scmp.eq.s32.totalorder %s21, 1
    %p186 = por %p184, %p185
    %p187 = scmp.ne.s32.totalorder %s178, %s179
    %p188 = scmp.eq.s32.totalorder %s21, 0
    %p189 = por %p187, %p188
    %p190 = scmp.ne.s32.totalorder %s178, %s179
    %p191 = scmp.eq.s32.totalorder %s22, 1
    %p192 = por %p190, %p191
    %p194 = scmp.ne.s32.totalorder %s179, %s193
    %p195 = scmp.eq.s32.totalorder %s22, 0
    %p196 = por %p194, %p195
    %s198 = sadd.s32 %s197, 1
    %p201 = scmp.eq.s32.totalorder %s16, 1
    %p202 = scmp.ne.s32.totalorder %s197, %s199
    %p203 = scmp.eq.s32.totalorder %s16, 0
    %p204 = por %p202, %p203
    %p205 = scmp.ne.s32.totalorder %s197, %s199
    %p206 = scmp.eq.s32.totalorder %s21, 1
    %p207 = por %p205, %p206
    %p208 = scmp.ne.s32.totalorder %s199, %s200
    %p209 = scmp.eq.s32.totalorder %s21, 0
    %p210 = por %p208, %p209
    %p211 = scmp.ne.s32.totalorder %s199, %s200
    %p212 = scmp.eq.s32.totalorder %s22, 1
    %p213 = por %p211, %p212
    %p215 = scmp.ne.s32.totalorder %s200, %s214
    %p216 = scmp.eq.s32.totalorder %s22, 0
    %p217 = por %p215, %p216
    %s219 = sadd.s32 %s218, 1
    %p222 = scmp.eq.s32.totalorder %s16, 1
    %p223 = scmp.ne.s32.totalorder %s218, %s220
    %p224 = scmp.eq.s32.totalorder %s16, 0
    %p225 = por %p223, %p224
    %p226 = scmp.ne.s32.totalorder %s218, %s220
    %p227 = scmp.eq.s32.totalorder %s21, 1
    %p228 = por %p226, %p227
    %p229 = scmp.ne.s32.totalorder %s220, %s221
    %p230 = scmp.eq.s32.totalorder %s21, 0
    %p231 = por %p229, %p230
    %p232 = scmp.ne.s32.totalorder %s220, %s221
    %p233 = scmp.eq.s32.totalorder %s22, 1
    %p234 = por %p232, %p233
    %p236 = scmp.ne.s32.totalorder %s221, %s235
    %p237 = scmp.eq.s32.totalorder %s22, 0
    %p238 = por %p236, %p237
    %s239 = ssub.s32 %s16, %s23
    %p240 = scmp.eq.s32.totalorder %s239, 0
    %s242 = sadd.s32 %s241, 1
    %s243 = scalar_select %p240, %s241, %s242
    %p246 = pneg %p240
    %p247 = scmp.eq.s32.totalorder %s16, 1
    %p248 = por %p246, %p247
    %p249 = scmp.ne.s32.totalorder %s241, %s244
    %p250 = scmp.eq.s32.totalorder %s16, 0
    %p251 = por %p249, %p250
    %p252 = scmp.ne.s32.totalorder %s241, %s244
    %p253 = scmp.eq.s32.totalorder %s21, 1
    %p254 = por %p252, %p253
    %p255 = scmp.ne.s32.totalorder %s244, %s245
    %p256 = scmp.eq.s32.totalorder %s21, 0
    %p257 = por %p255, %p256
    %p258 = scmp.ne.s32.totalorder %s244, %s245
    %p259 = scmp.eq.s32.totalorder %s22, 1
    %p260 = por %p258, %p259
    %p262 = scmp.ne.s32.totalorder %s245, %s261
    %p263 = scmp.eq.s32.totalorder %s22, 0
    %p264 = por %p262, %p263
    %p265 = scmp.le.s32.totalorder 1, %s16
    %p266 = scmp.lt.s32.totalorder %s16, 3
    %p267 = pnand %p265, %p266
    %p268 = pneg %p267
    // Predicated region
    $region9: #{timmnet_forward.1} parent=5 // pred_check
      _
    $region10: #{timmnet_forward.1} parent=5 // pred_check_branch
      %270 = sbr.rel (%p267) target = $region12
    $region11: #{timmnet_forward.1} parent=5 // pred_region
      %s271 = ssub.s32 %s16, 1
      // Predicated region
      $region13: #{timmnet_forward.1} parent=11 // pred_check
        %p272 = pneg %p63
      $region14: #{timmnet_forward.1} parent=11 // pred_check_branch
        %274 = sbr.rel (%p272) target = $region16
      $region15: #{timmnet_forward.1} parent=11 // pred_region
        _
      $region16: #{timmnet_forward.1} parent=11 // pred_fallthru
        _
      // Predicated region
      $region17: #{timmnet_forward.1} parent=11 // pred_check
        %p275 = pneg %p84
      $region18: #{timmnet_forward.1} parent=11 // pred_check_branch
        %277 = sbr.rel (%p275) target = $region20
      $region19: #{timmnet_forward.1} parent=11 // pred_region
        _
      $region20: #{timmnet_forward.1} parent=11 // pred_fallthru
        _
      // Predicated region
      $region21: #{timmnet_forward.1} parent=11 // pred_check
        %p278 = pneg %p105
      $region22: #{timmnet_forward.1} parent=11 // pred_check_branch
        %280 = sbr.rel (%p278) target = $region24
      $region23: #{timmnet_forward.1} parent=11 // pred_region
        _
      $region24: #{timmnet_forward.1} parent=11 // pred_fallthru
        _
      // Predicated region
      $region25: #{timmnet_forward.1} parent=11 // pred_check
        %p281 = pneg %p126
      $region26: #{timmnet_forward.1} parent=11 // pred_check_branch
        %283 = sbr.rel (%p281) target = $region28
      $region27: #{timmnet_forward.1} parent=11 // pred_region
        _
      $region28: #{timmnet_forward.1} parent=11 // pred_fallthru
        _
      // Predicated region
      $region29: #{timmnet_forward.1} parent=11 // pred_check
        %p284 = pneg %p147
      $region30: #{timmnet_forward.1} parent=11 // pred_check_branch
        %286 = sbr.rel (%p284) target = $region32
      $region31: #{timmnet_forward.1} parent=11 // pred_region
        _
      $region32: #{timmnet_forward.1} parent=11 // pred_fallthru
        _
      // Predicated region
      $region33: #{timmnet_forward.1} parent=11 // pred_check
        %p287 = pneg %p168
      $region34: #{timmnet_forward.1} parent=11 // pred_check_branch
        %289 = sbr.rel (%p287) target = $region36
      $region35: #{timmnet_forward.1} parent=11 // pred_region
        _
      $region36: #{timmnet_forward.1} parent=11 // pred_fallthru
        _
      // Predicated region
      $region37: #{timmnet_forward.1} parent=11 // pred_check
        %p290 = pneg %p189
      $region38: #{timmnet_forward.1} parent=11 // pred_check_branch
        %292 = sbr.rel (%p290) target = $region40
      $region39: #{timmnet_forward.1} parent=11 // pred_region
        _
      $region40: #{timmnet_forward.1} parent=11 // pred_fallthru
        _
      // Predicated region
      $region41: #{timmnet_forward.1} parent=11 // pred_check
        %p293 = pneg %p210
      $region42: #{timmnet_forward.1} parent=11 // pred_check_branch
        %295 = sbr.rel (%p293) target = $region44
      $region43: #{timmnet_forward.1} parent=11 // pred_region
        _
      $region44: #{timmnet_forward.1} parent=11 // pred_fallthru
        _
      // Predicated region
      $region45: #{timmnet_forward.1} parent=11 // pred_check
        %p296 = pneg %p231
      $region46: #{timmnet_forward.1} parent=11 // pred_check_branch
        %298 = sbr.rel (%p296) target = $region48
      $region47: #{timmnet_forward.1} parent=11 // pred_region
        _
      $region48: #{timmnet_forward.1} parent=11 // pred_fallthru
        _
    $region12: #{timmnet_forward.1} parent=5 // pred_fallthru
      _
    %p299 = scmp.lt.s32.totalorder %s16, 2
    // Predicated region
    $region49: #{timmnet_forward.1} parent=5 // pred_check
      %p300 = pneg %p299
    $region50: #{timmnet_forward.1} parent=5 // pred_check_branch
      %302 = sbr.rel (%p300) target = $region52
    $region51: #{timmnet_forward.1} parent=5 // pred_region
      // Predicated region
      $region53: #{timmnet_forward.1} parent=51 // pred_check
        %p303 = pneg %p36
      $region54: #{timmnet_forward.1} parent=51 // pred_check_branch
        %305 = sbr.rel (%p303) target = $region56
      $region55: #{timmnet_forward.1} parent=51 // pred_region
        %s306 = smul.u32 32, %s16
        %p307 = scmp.lt.s32.totalorder %s306, 63
        %s308 = scalar_select %p307, %s306, 63
        %s309 = smul.addr %s308, 4
        %s310 = scalar_lea.vmem %s0, %s309
        %s311 = smul.u32 32, %s16
      $region56: #{timmnet_forward.1} parent=51 // pred_fallthru
        _
    $region52: #{timmnet_forward.1} parent=5 // pred_fallthru
      _
    %p312 = scmp.le.s32.totalorder 1, %s16
    %p313 = scmp.lt.s32.totalorder %s16, 3
    %p314 = pnand %p312, %p313
    %p315 = pneg %p314
    // Predicated region
    $region57: #{timmnet_forward.1} parent=5 // pred_check
      _
    $region58: #{timmnet_forward.1} parent=5 // pred_check_branch
      %317 = sbr.rel (%p314) target = $region60
    $region59: #{timmnet_forward.1} parent=5 // pred_region
      %s318 = ssub.s32 %s16, 1
      %s319 = smul.u32 32, %s21
      %p320 = scmp.lt.s32.totalorder %s319, 63
      %s321 = scalar_select %p320, %s319, 63
      %s322 = smul.addr %s321, 4
      %s323 = scalar_lea.vmem %s0, %s322
      %p324 = pneg %p42
      %p325 = pneg %p39
      %p326 = pneg %p63
      %p327 = pneg %p60
      %p328 = pneg %p84
      %p329 = pneg %p81
      %p330 = pneg %p105
      %p331 = pneg %p102
      %p332 = pneg %p126
      %p333 = pneg %p123
      %p334 = pneg %p147
      %p335 = pneg %p144
      %p336 = pneg %p168
      %p337 = pneg %p165
      %p338 = pneg %p189
      %p339 = pneg %p186
      %p340 = pneg %p210
      %p341 = pneg %p207
      %p342 = pneg %p231
      %p343 = pneg %p228
      %p344 = pneg %p257
      %p345 = pneg %p254
      %p346 = scmp.lt.s32.totalorder %s21, 1
      %s347 = scalar_select %p346, %s21, 1
      %s348 = smul.addr %s347, 8
      %s349 = scalar_lea.vmem %s10, %s348
      %s350 = smul.u32 32, %s21
      %p351 = scmp.lt.s32.totalorder %s350, 63
      %s352 = scalar_select %p351, %s350, 63
      %s353 = smul.addr %s352, 4
      %s354 = scalar_lea.vmem %s0, %s353
      %s355 = smul.u32 32, %s21
      %p356 = scmp.lt.s32.totalorder %s21, 1
      %s357 = scalar_select %p356, %s21, 1
      %s358 = smul.addr %s357, 8
      %s359 = scalar_lea.vmem %s10, %s358
      %v360 = vld [vmem:[%s354] sm:$0xf]
      %v361 = vld [vmem:[%s354 + $0x4] sm:$0xf]
      %v362 = vld [vmem:[%s354 + $0x8] sm:$0xf]
      %v363 = vld [vmem:[%s354 + $0xc] sm:$0xf]
      %v364 = vld [vmem:[%s354 + $0x10] sm:$0xf]
      %v365 = vld [vmem:[%s354 + $0x14] sm:$0xf]
      %v366 = vld [vmem:[%s354 + $0x18] sm:$0xf]
      %v367 = vld [vmem:[%s354 + $0x1c] sm:$0xf]
      %v368 = vld [vmem:[%s354 + $0x20] sm:$0xf]
      %v369 = vld [vmem:[%s354 + $0x24] sm:$0xf]
      %v370 = vld [vmem:[%s354 + $0x28] sm:$0xf]
      %v371 = vld [vmem:[%s354 + $0x2c] sm:$0xf]
      %v372 = vld [vmem:[%s354 + $0x30] sm:$0xf]
      %v373 = vld [vmem:[%s354 + $0x34] sm:$0xf]
      %v374 = vld [vmem:[%s354 + $0x38] sm:$0xf]
      %v375 = vld [vmem:[%s354 + $0x3c] sm:$0xf]
      %v376 = vld [vmem:[%s354 + $0x40] sm:$0xf]
      %v377 = vld [vmem:[%s354 + $0x44] sm:$0xf]
      %v378 = vld [vmem:[%s354 + $0x48] sm:$0xf]
      %v379 = vld [vmem:[%s354 + $0x4c] sm:$0xf]
      %v380 = vld [vmem:[%s354 + $0x50] sm:$0xf]
      %v381 = vld [vmem:[%s354 + $0x54] sm:$0xf]
      %v382 = vld [vmem:[%s354 + $0x58] sm:$0xf]
      %v383 = vld [vmem:[%s354 + $0x5c] sm:$0xf]
      %v384 = vld [vmem:[%s354 + $0x60] sm:$0xf]
      %v385 = vld [vmem:[%s354 + $0x64] sm:$0xf]
      %v386 = vld [vmem:[%s354 + $0x68] sm:$0xf]
      %v387 = vld [vmem:[%s354 + $0x6c] sm:$0xf]
      %v388 = vld [vmem:[%s354 + $0x70] sm:$0xf]
      %v389 = vld [vmem:[%s354 + $0x74] sm:$0xf]
      %v390 = vld [vmem:[%s354 + $0x78] sm:$0xf]
      %v391 = vld [vmem:[%s354 + $0x7c] sm:$0xf]
      %v392 = vld [vmem:[%s1] sm:$0xf]
      %v393 = vld [vmem:[%s1 + $0x4] sm:$0xf]
      %v394 = vld [vmem:[%s1 + $0x8] sm:$0xf]
      %v395 = vld [vmem:[%s1 + $0xc] sm:$0xf]
      %v396 = vld [vmem:[%s1 + $0x10] sm:$0xf]
      %v397 = vld [vmem:[%s1 + $0x14] sm:$0xf]
      %v398 = vld [vmem:[%s1 + $0x18] sm:$0xf]
      %v399 = vld [vmem:[%s1 + $0x1c] sm:$0xf]
      %v400 = vld [vmem:[%s1 + $0x20] sm:$0xf]
      %v401 = vld [vmem:[%s1 + $0x24] sm:$0xf]
      %v402 = vld [vmem:[%s1 + $0x28] sm:$0xf]
      %v403 = vld [vmem:[%s1 + $0x2c] sm:$0xf]
      %v404 = vld [vmem:[%s1 + $0x30] sm:$0xf]
      %v405 = vld [vmem:[%s1 + $0x34] sm:$0xf]
      %v406 = vld [vmem:[%s1 + $0x38] sm:$0xf]
      %v407 = vld [vmem:[%s1 + $0x3c] sm:$0xf]
      %v440 = vunpack.c.l.b16 %v360
      %v441 = vunpack.c.l.b16 %v361
      %v442 = vunpack.c.l.b16 %v362
      %v443 = vunpack.c.l.b16 %v363
      %v444 = vunpack.c.l.b16 %v364
      %v445 = vunpack.c.l.b16 %v365
      %v446 = vunpack.c.l.b16 %v366
      %v447 = vunpack.c.l.b16 %v367
      %v448 = vunpack.c.l.b16 %v368
      %v449 = vunpack.c.l.b16 %v369
      %v450 = vunpack.c.l.b16 %v370
      %v451 = vunpack.c.l.b16 %v371
      %v452 = vunpack.c.l.b16 %v372
      %v453 = vunpack.c.l.b16 %v373
      %v454 = vunpack.c.l.b16 %v374
      %v455 = vunpack.c.l.b16 %v375
      %v456 = vunpack.c.l.b16 %v376
      %v457 = vunpack.c.l.b16 %v377
      %v458 = vunpack.c.l.b16 %v378
      %v459 = vunpack.c.l.b16 %v379
      %v460 = vunpack.c.l.b16 %v380
      %v461 = vunpack.c.l.b16 %v381
      %v462 = vunpack.c.l.b16 %v382
      %v463 = vunpack.c.l.b16 %v383
      %v464 = vunpack.c.l.b16 %v384
      %v465 = vunpack.c.l.b16 %v385
      %v466 = vunpack.c.l.b16 %v386
      %v467 = vunpack.c.l.b16 %v387
      %v468 = vunpack.c.l.b16 %v388
      %v469 = vunpack.c.l.b16 %v389
      %v470 = vunpack.c.l.b16 %v390
      %v471 = vunpack.c.l.b16 %v391
      %v472 = vpack.c.b16 %v441, %v440
      %v473 = vpack.c.b16 %v443, %v442
      %v474 = vpack.c.b16 %v445, %v444
      %v475 = vpack.c.b16 %v447, %v446
      %v476 = vpack.c.b16 %v449, %v448
      %v477 = vpack.c.b16 %v451, %v450
      %v478 = vpack.c.b16 %v453, %v452
      %v479 = vpack.c.b16 %v455, %v454
      %v480 = vpack.c.b16 %v457, %v456
      %v481 = vpack.c.b16 %v459, %v458
      %v482 = vpack.c.b16 %v461, %v460
      %v483 = vpack.c.b16 %v463, %v462
      %v484 = vpack.c.b16 %v465, %v464
      %v485 = vpack.c.b16 %v467, %v466
      %v486 = vpack.c.b16 %v469, %v468
      %v487 = vpack.c.b16 %v471, %v470
      %v520 = vunpack.c.l.b16 %v392
      %v521 = vunpack.c.l.b16 %v393
      %v522 = vunpack.c.l.b16 %v394
      %v523 = vunpack.c.l.b16 %v395
      %v524 = vunpack.c.l.b16 %v396
      %v525 = vunpack.c.l.b16 %v397
      %v526 = vunpack.c.l.b16 %v398
      %v527 = vunpack.c.l.b16 %v399
      %v528 = vunpack.c.l.b16 %v400
      %v529 = vunpack.c.l.b16 %v401
      %v530 = vunpack.c.l.b16 %v402
      %v531 = vunpack.c.l.b16 %v403
      %v532 = vunpack.c.l.b16 %v404
      %v533 = vunpack.c.l.b16 %v405
      %v534 = vunpack.c.l.b16 %v406
      %v535 = vunpack.c.l.b16 %v407
      %v536 = vpack.c.b16 %v521, %v520
      %v537 = vpack.c.b16 %v523, %v522
      %v538 = vpack.c.b16 %v525, %v524
      %v539 = vpack.c.b16 %v527, %v526
      %v540 = vpack.c.b16 %v529, %v528
      %v541 = vpack.c.b16 %v531, %v530
      %v542 = vpack.c.b16 %v533, %v532
      %v543 = vpack.c.b16 %v535, %v534
      %552 = vmatpush.bf16.msra.mxu0 %v543
      %553 = vmatpush.bf16.msra.mxu0 %v542
      %554 = vmatpush.bf16.msra.mxu0 %v541
      %555 = vmatpush.bf16.msra.mxu0 %v540
      %556 = vmatpush.bf16.msra.mxu0 %v539
      %557 = vmatpush.bf16.msra.mxu0 %v538
      %558 = vmatpush.bf16.msra.mxu0 %v537
      %559 = vmatpush.bf16.msra.mxu0 %v536
      %560 = vmatmul.bf16.gmra.mxu0 %v472
      %v561 = vpop.f32.mrf.mxu0
      %v562 = vadd.f32 0.0, %v561
      %v563 = vpop.f32.mrf.mxu0
      %v564 = vadd.f32 0.0, %v563
      %565 = vmatmul.bf16.gmra.mxu0 %v473
      %v566 = vpop.f32.mrf.mxu0
      %v567 = vadd.f32 0.0, %v566
      %v568 = vpop.f32.mrf.mxu0
      %v569 = vadd.f32 0.0, %v568
      %570 = vmatmul.bf16.gmra.mxu0 %v474
      %v571 = vpop.f32.mrf.mxu0
      %v572 = vadd.f32 0.0, %v571
      %v573 = vpop.f32.mrf.mxu0
      %v574 = vadd.f32 0.0, %v573
      %575 = vmatmul.bf16.gmra.mxu0 %v475
      %v576 = vpop.f32.mrf.mxu0
      %v577 = vadd.f32 0.0, %v576
      %v578 = vpop.f32.mrf.mxu0
      %v579 = vadd.f32 0.0, %v578
      %580 = vmatmul.bf16.gmra.mxu0 %v476
      %v581 = vpop.f32.mrf.mxu0
      %v582 = vadd.f32 0.0, %v581
      %v583 = vpop.f32.mrf.mxu0
      %v584 = vadd.f32 0.0, %v583
      %585 = vmatmul.bf16.gmra.mxu0 %v477
      %v586 = vpop.f32.mrf.mxu0
      %v587 = vadd.f32 0.0, %v586
      %v588 = vpop.f32.mrf.mxu0
      %v589 = vadd.f32 0.0, %v588
      %590 = vmatmul.bf16.gmra.mxu0 %v478
      %v591 = vpop.f32.mrf.mxu0
      %v592 = vadd.f32 0.0, %v591
      %v593 = vpop.f32.mrf.mxu0
      %v594 = vadd.f32 0.0, %v593
      %595 = vmatmul.bf16.gmra.mxu0 %v479
      %v596 = vpop.f32.mrf.mxu0
      %v597 = vadd.f32 0.0, %v596
      %v598 = vpop.f32.mrf.mxu0
      %v599 = vadd.f32 0.0, %v598
      %600 = vmatmul.bf16.gmra.mxu0 %v480
      %v601 = vpop.f32.mrf.mxu0
      %v602 = vadd.f32 0.0, %v601
      %v603 = vpop.f32.mrf.mxu0
      %v604 = vadd.f32 0.0, %v603
      %605 = vmatmul.bf16.gmra.mxu0 %v481
      %v606 = vpop.f32.mrf.mxu0
      %v607 = vadd.f32 0.0, %v606
      %v608 = vpop.f32.mrf.mxu0
      %v609 = vadd.f32 0.0, %v608
      %610 = vmatmul.bf16.gmra.mxu0 %v482
      %v611 = vpop.f32.mrf.mxu0
      %v612 = vadd.f32 0.0, %v611
      %v613 = vpop.f32.mrf.mxu0
      %v614 = vadd.f32 0.0, %v613
      %615 = vmatmul.bf16.gmra.mxu0 %v483
      %v616 = vpop.f32.mrf.mxu0
      %v617 = vadd.f32 0.0, %v616
      %v618 = vpop.f32.mrf.mxu0
      %v619 = vadd.f32 0.0, %v618
      %620 = vmatmul.bf16.gmra.mxu0 %v484
      %v621 = vpop.f32.mrf.mxu0
      %v622 = vadd.f32 0.0, %v621
      %v623 = vpop.f32.mrf.mxu0
      %v624 = vadd.f32 0.0, %v623
      %625 = vmatmul.bf16.gmra.mxu0 %v485
      %v626 = vpop.f32.mrf.mxu0
      %v627 = vadd.f32 0.0, %v626
      %v628 = vpop.f32.mrf.mxu0
      %v629 = vadd.f32 0.0, %v628
      %630 = vmatmul.bf16.gmra.mxu0 %v486
      %v631 = vpop.f32.mrf.mxu0
      %v632 = vadd.f32 0.0, %v631
      %v633 = vpop.f32.mrf.mxu0
      %v634 = vadd.f32 0.0, %v633
      %635 = vmatmul.bf16.gmra.mxu0 %v487
      %v636 = vpop.f32.mrf.mxu0
      %v637 = vadd.f32 0.0, %v636
      %v638 = vpop.f32.mrf.mxu0
      %v639 = vadd.f32 0.0, %v638
      %640 = vdwg.mxu0
      %v641 = vld [vmem:[%s2] sm:$0x1]
      %v643 = vperm.slane %v641, 0
      %v645 = vmul.f32 %v562, %v643
      %v646 = vmul.f32 %v564, %v643
      %v647 = vmul.f32 %v567, %v643
      %v648 = vmul.f32 %v569, %v643
      %v649 = vmul.f32 %v572, %v643
      %v650 = vmul.f32 %v574, %v643
      %v651 = vmul.f32 %v577, %v643
      %v652 = vmul.f32 %v579, %v643
      %v653 = vmul.f32 %v582, %v643
      %v654 = vmul.f32 %v584, %v643
      %v655 = vmul.f32 %v587, %v643
      %v656 = vmul.f32 %v589, %v643
      %v657 = vmul.f32 %v592, %v643
      %v658 = vmul.f32 %v594, %v643
      %v659 = vmul.f32 %v597, %v643
      %v660 = vmul.f32 %v599, %v643
      %v661 = vmul.f32 %v602, %v643
      %v662 = vmul.f32 %v604, %v643
      %v663 = vmul.f32 %v607, %v643
      %v664 = vmul.f32 %v609, %v643
      %v665 = vmul.f32 %v612, %v643
      %v666 = vmul.f32 %v614, %v643
      %v667 = vmul.f32 %v617, %v643
      %v668 = vmul.f32 %v619, %v643
      %v669 = vmul.f32 %v622, %v643
      %v670 = vmul.f32 %v624, %v643
      %v671 = vmul.f32 %v627, %v643
      %v672 = vmul.f32 %v629, %v643
      %v673 = vmul.f32 %v632, %v643
      %v674 = vmul.f32 %v634, %v643
      %v675 = vmul.f32 %v637, %v643
      %v676 = vmul.f32 %v639, %v643
      %v677 = vld [vmem:[%s3] sm:$0x1]
      %v679 = vperm.slane %v677, 0
      %v681 = vadd.f32 %v645, %v679
      %v682 = vadd.f32 %v646, %v679
      %v683 = vadd.f32 %v647, %v679
      %v684 = vadd.f32 %v648, %v679
      %v685 = vadd.f32 %v649, %v679
      %v686 = vadd.f32 %v650, %v679
      %v687 = vadd.f32 %v651, %v679
      %v688 = vadd.f32 %v652, %v679
      %v689 = vadd.f32 %v653, %v679
      %v690 = vadd.f32 %v654, %v679
      %v691 = vadd.f32 %v655, %v679
      %v692 = vadd.f32 %v656, %v679
      %v693 = vadd.f32 %v657, %v679
      %v694 = vadd.f32 %v658, %v679
      %v695 = vadd.f32 %v659, %v679
      %v696 = vadd.f32 %v660, %v679
      %v697 = vadd.f32 %v661, %v679
      %v698 = vadd.f32 %v662, %v679
      %v699 = vadd.f32 %v663, %v679
      %v700 = vadd.f32 %v664, %v679
      %v701 = vadd.f32 %v665, %v679
      %v702 = vadd.f32 %v666, %v679
      %v703 = vadd.f32 %v667, %v679
      %v704 = vadd.f32 %v668, %v679
      %v705 = vadd.f32 %v669, %v679
      %v706 = vadd.f32 %v670, %v679
      %v707 = vadd.f32 %v671, %v679
      %v708 = vadd.f32 %v672, %v679
      %v709 = vadd.f32 %v673, %v679
      %v710 = vadd.f32 %v674, %v679
      %v711 = vadd.f32 %v675, %v679
      %v712 = vadd.f32 %v676, %v679
      %v713 = vmax.f32 %v681, 0.0
      %v714 = vmax.f32 %v682, 0.0
      %v715 = vmax.f32 %v683, 0.0
      %v716 = vmax.f32 %v684, 0.0
      %v717 = vmax.f32 %v685, 0.0
      %v718 = vmax.f32 %v686, 0.0
      %v719 = vmax.f32 %v687, 0.0
      %v720 = vmax.f32 %v688, 0.0
      %v721 = vmax.f32 %v689, 0.0
      %v722 = vmax.f32 %v690, 0.0
      %v723 = vmax.f32 %v691, 0.0
      %v724 = vmax.f32 %v692, 0.0
      %v725 = vmax.f32 %v693, 0.0
      %v726 = vmax.f32 %v694, 0.0
      %v727 = vmax.f32 %v695, 0.0
      %v728 = vmax.f32 %v696, 0.0
      %v729 = vmax.f32 %v697, 0.0
      %v730 = vmax.f32 %v698, 0.0
      %v731 = vmax.f32 %v699, 0.0
      %v732 = vmax.f32 %v700, 0.0
      %v733 = vmax.f32 %v701, 0.0
      %v734 = vmax.f32 %v702, 0.0
      %v735 = vmax.f32 %v703, 0.0
      %v736 = vmax.f32 %v704, 0.0
      %v737 = vmax.f32 %v705, 0.0
      %v738 = vmax.f32 %v706, 0.0
      %v739 = vmax.f32 %v707, 0.0
      %v740 = vmax.f32 %v708, 0.0
      %v741 = vmax.f32 %v709, 0.0
      %v742 = vmax.f32 %v710, 0.0
      %v743 = vmax.f32 %v711, 0.0
      %v744 = vmax.f32 %v712, 0.0
      %v745 = vlaneseq
      %v746 = vshrl.u32 %v745, 7
      %v747 = vadd.s32 %v746, 8
      %v748 = vadd.s32 %v746, 16
      %v749 = vadd.s32 %v746, 24
      %v750 = vadd.s32 %v746, 32
      %v751 = vadd.s32 %v746, 40
      %v752 = vadd.s32 %v746, 48
      %v753 = vadd.s32 %v746, 56
      %v754 = vadd.s32 %v746, 64
      %v755 = vadd.s32 %v746, 72
      %v756 = vadd.s32 %v746, 80
      %v757 = vadd.s32 %v746, 88
      %v758 = vadd.s32 %v746, 96
      %v759 = vadd.s32 %v746, 104
      %v760 = vadd.s32 %v746, 112
      %v761 = vadd.s32 %v746, 120
      %v762 = vadd.s32 %v746, 128
      %v763 = vadd.s32 %v746, 136
      %v764 = vadd.s32 %v746, 144
      %v765 = vadd.s32 %v746, 152
      %v766 = vadd.s32 %v746, 160
      %v767 = vadd.s32 %v746, 168
      %v768 = vadd.s32 %v746, 176
      %v769 = vadd.s32 %v746, 184
      %v770 = vadd.s32 %v746, 192
      %v771 = vadd.s32 %v746, 200
      %v772 = vadd.s32 %v746, 208
      %v773 = vadd.s32 %v746, 216
      %v774 = vadd.s32 %v746, 224
      %v775 = vadd.s32 %v746, 232
      %v776 = vadd.s32 %v746, 240
      %v777 = vadd.s32 %v746, 248
      %v778 = vand.u32 %v746, 255
      %v779 = vand.u32 %v747, 255
      %v780 = vand.u32 %v748, 255
      %v781 = vand.u32 %v749, 255
      %v782 = vand.u32 %v750, 255
      %v783 = vand.u32 %v751, 255
      %v784 = vand.u32 %v752, 255
      %v785 = vand.u32 %v753, 255
      %v786 = vand.u32 %v754, 255
      %v787 = vand.u32 %v755, 255
      %v788 = vand.u32 %v756, 255
      %v789 = vand.u32 %v757, 255
      %v790 = vand.u32 %v758, 255
      %v791 = vand.u32 %v759, 255
      %v792 = vand.u32 %v760, 255
      %v793 = vand.u32 %v761, 255
      %v794 = vand.u32 %v762, 255
      %v795 = vand.u32 %v763, 255
      %v796 = vand.u32 %v764, 255
      %v797 = vand.u32 %v765, 255
      %v798 = vand.u32 %v766, 255
      %v799 = vand.u32 %v767, 255
      %v800 = vand.u32 %v768, 255
      %v801 = vand.u32 %v769, 255
      %v802 = vand.u32 %v770, 255
      %v803 = vand.u32 %v771, 255
      %v804 = vand.u32 %v772, 255
      %v805 = vand.u32 %v773, 255
      %v806 = vand.u32 %v774, 255
      %v807 = vand.u32 %v775, 255
      %v808 = vand.u32 %v776, 255
      %v809 = vand.u32 %v777, 255
      %v810 = vshra.s32 %v778, 4
      %v811 = vshra.s32 %v779, 4
      %v812 = vshra.s32 %v780, 4
      %v813 = vshra.s32 %v781, 4
      %v814 = vshra.s32 %v782, 4
      %v815 = vshra.s32 %v783, 4
      %v816 = vshra.s32 %v784, 4
      %v817 = vshra.s32 %v785, 4
      %v818 = vshra.s32 %v786, 4
      %v819 = vshra.s32 %v787, 4
      %v820 = vshra.s32 %v788, 4
      %v821 = vshra.s32 %v789, 4
      %v822 = vshra.s32 %v790, 4
      %v823 = vshra.s32 %v791, 4
      %v824 = vshra.s32 %v792, 4
      %v825 = vshra.s32 %v793, 4
      %v826 = vshra.s32 %v794, 4
      %v827 = vshra.s32 %v795, 4
      %v828 = vshra.s32 %v796, 4
      %v829 = vshra.s32 %v797, 4
      %v830 = vshra.s32 %v798, 4
      %v831 = vshra.s32 %v799, 4
      %v832 = vshra.s32 %v800, 4
      %v833 = vshra.s32 %v801, 4
      %v834 = vshra.s32 %v802, 4
      %v835 = vshra.s32 %v803, 4
      %v836 = vshra.s32 %v804, 4
      %v837 = vshra.s32 %v805, 4
      %v838 = vshra.s32 %v806, 4
      %v839 = vshra.s32 %v807, 4
      %v840 = vshra.s32 %v808, 4
      %v841 = vshra.s32 %v809, 4
      %v842 = vand.u32 %v746, 15
      %v843 = vand.u32 %v747, 15
      %v844 = vand.u32 %v748, 15
      %v845 = vand.u32 %v749, 15
      %v846 = vand.u32 %v750, 15
      %v847 = vand.u32 %v751, 15
      %v848 = vand.u32 %v752, 15
      %v849 = vand.u32 %v753, 15
      %v850 = vand.u32 %v754, 15
      %v851 = vand.u32 %v755, 15
      %v852 = vand.u32 %v756, 15
      %v853 = vand.u32 %v757, 15
      %v854 = vand.u32 %v758, 15
      %v855 = vand.u32 %v759, 15
      %v856 = vand.u32 %v760, 15
      %v857 = vand.u32 %v761, 15
      %v858 = vand.u32 %v762, 15
      %v859 = vand.u32 %v763, 15
      %v860 = vand.u32 %v764, 15
      %v861 = vand.u32 %v765, 15
      %v862 = vand.u32 %v766, 15
      %v863 = vand.u32 %v767, 15
      %v864 = vand.u32 %v768, 15
      %v865 = vand.u32 %v769, 15
      %v866 = vand.u32 %v770, 15
      %v867 = vand.u32 %v771, 15
      %v868 = vand.u32 %v772, 15
      %v869 = vand.u32 %v773, 15
      %v870 = vand.u32 %v774, 15
      %v871 = vand.u32 %v775, 15
      %v872 = vand.u32 %v776, 15
      %v873 = vand.u32 %v777, 15
      %v874 = vrot.slane %v713, 7
      %v875 = vrot.slane %v714, 7
      %v876 = vrot.slane %v715, 7
      %v877 = vrot.slane %v716, 7
      %v878 = vrot.slane %v717, 7
      %v879 = vrot.slane %v718, 7
      %v880 = vrot.slane %v719, 7
      %v881 = vrot.slane %v720, 7
      %v882 = vrot.slane %v721, 7
      %v883 = vrot.slane %v722, 7
      %v884 = vrot.slane %v723, 7
      %v885 = vrot.slane %v724, 7
      %v886 = vrot.slane %v725, 7
      %v887 = vrot.slane %v726, 7
      %v888 = vrot.slane %v727, 7
      %v889 = vrot.slane %v728, 7
      %v890 = vrot.slane %v729, 7
      %v891 = vrot.slane %v730, 7
      %v892 = vrot.slane %v731, 7
      %v893 = vrot.slane %v732, 7
      %v894 = vrot.slane %v733, 7
      %v895 = vrot.slane %v734, 7
      %v896 = vrot.slane %v735, 7
      %v897 = vrot.slane %v736, 7
      %v898 = vrot.slane %v737, 7
      %v899 = vrot.slane %v738, 7
      %v900 = vrot.slane %v739, 7
      %v901 = vrot.slane %v740, 7
      %v902 = vrot.slane %v741, 7
      %v903 = vrot.slane %v742, 7
      %v904 = vrot.slane %v743, 7
      %v905 = vrot.slane %v744, 7
      %vm906 = vcmp.lt.s32.totalorder %v746, 1
      %v907 = vsel %vm906, %v904, %v905
      %v908 = vsel %vm906, %v903, %v904
      %v909 = vsel %vm906, %v902, %v903
      %v910 = vsel %vm906, %v901, %v902
      %v911 = vsel %vm906, %v900, %v901
      %v912 = vsel %vm906, %v899, %v900
      %v913 = vsel %vm906, %v898, %v899
      %v914 = vsel %vm906, %v897, %v898
      %v915 = vsel %vm906, %v896, %v897
      %v916 = vsel %vm906, %v895, %v896
      %v917 = vsel %vm906, %v894, %v895
      %v918 = vsel %vm906, %v893, %v894
      %v919 = vsel %vm906, %v892, %v893
      %v920 = vsel %vm906, %v891, %v892
      %v921 = vsel %vm906, %v890, %v891
      %v922 = vsel %vm906, %v889, %v890
      %v923 = vsel %vm906, %v888, %v889
      %v924 = vsel %vm906, %v887, %v888
      %v925 = vsel %vm906, %v886, %v887
      %v926 = vsel %vm906, %v885, %v886
      %v927 = vsel %vm906, %v884, %v885
      %v928 = vsel %vm906, %v883, %v884
      %v929 = vsel %vm906, %v882, %v883
      %v930 = vsel %vm906, %v881, %v882
      %v931 = vsel %vm906, %v880, %v881
      %v932 = vsel %vm906, %v879, %v880
      %v933 = vsel %vm906, %v878, %v879
      %v934 = vsel %vm906, %v877, %v878
      %v935 = vsel %vm906, %v876, %v877
      %v936 = vsel %vm906, %v875, %v876
      %v937 = vsel %vm906, %v874, %v875
      %v938 = vsel %vm906, %v905, %v874
      %v939 = vadd.s32 %v810, 4294967295
      %v940 = vadd.s32 %v811, 4294967295
      %v941 = vadd.s32 %v812, 4294967295
      %v942 = vadd.s32 %v813, 4294967295
      %v943 = vadd.s32 %v814, 4294967295
      %v944 = vadd.s32 %v815, 4294967295
      %v945 = vadd.s32 %v816, 4294967295
      %v946 = vadd.s32 %v817, 4294967295
      %v947 = vadd.s32 %v818, 4294967295
      %v948 = vadd.s32 %v819, 4294967295
      %v949 = vadd.s32 %v820, 4294967295
      %v950 = vadd.s32 %v821, 4294967295
      %v951 = vadd.s32 %v822, 4294967295
      %v952 = vadd.s32 %v823, 4294967295
      %v953 = vadd.s32 %v824, 4294967295
      %v954 = vadd.s32 %v825, 4294967295
      %v955 = vadd.s32 %v826, 4294967295
      %v956 = vadd.s32 %v827, 4294967295
      %v957 = vadd.s32 %v828, 4294967295
      %v958 = vadd.s32 %v829, 4294967295
      %v959 = vadd.s32 %v830, 4294967295
      %v960 = vadd.s32 %v831, 4294967295
      %v961 = vadd.s32 %v832, 4294967295
      %v962 = vadd.s32 %v833, 4294967295
      %v963 = vadd.s32 %v834, 4294967295
      %v964 = vadd.s32 %v835, 4294967295
      %v965 = vadd.s32 %v836, 4294967295
      %v966 = vadd.s32 %v837, 4294967295
      %v967 = vadd.s32 %v838, 4294967295
      %v968 = vadd.s32 %v839, 4294967295
      %v969 = vadd.s32 %v840, 4294967295
      %v970 = vadd.s32 %v841, 4294967295
      %vm971 = vcmp.ge.s32.totalorder %v939, 0
      %vm972 = vcmp.ge.s32.totalorder %v940, 0
      %vm973 = vcmp.ge.s32.totalorder %v941, 0
      %vm974 = vcmp.ge.s32.totalorder %v942, 0
      %vm975 = vcmp.ge.s32.totalorder %v943, 0
      %vm976 = vcmp.ge.s32.totalorder %v944, 0
      %vm977 = vcmp.ge.s32.totalorder %v945, 0
      %vm978 = vcmp.ge.s32.totalorder %v946, 0
      %vm979 = vcmp.ge.s32.totalorder %v947, 0
      %vm980 = vcmp.ge.s32.totalorder %v948, 0
      %vm981 = vcmp.ge.s32.totalorder %v949, 0
      %vm982 = vcmp.ge.s32.totalorder %v950, 0
      %vm983 = vcmp.ge.s32.totalorder %v951, 0
      %vm984 = vcmp.ge.s32.totalorder %v952, 0
      %vm985 = vcmp.ge.s32.totalorder %v953, 0
      %vm986 = vcmp.ge.s32.totalorder %v954, 0
      %vm987 = vcmp.ge.s32.totalorder %v955, 0
      %vm988 = vcmp.ge.s32.totalorder %v956, 0
      %vm989 = vcmp.ge.s32.totalorder %v957, 0
      %vm990 = vcmp.ge.s32.totalorder %v958, 0
      %vm991 = vcmp.ge.s32.totalorder %v959, 0
      %vm992 = vcmp.ge.s32.totalorder %v960, 0
      %vm993 = vcmp.ge.s32.totalorder %v961, 0
      %vm994 = vcmp.ge.s32.totalorder %v962, 0
      %vm995 = vcmp.ge.s32.totalorder %v963, 0
      %vm996 = vcmp.ge.s32.totalorder %v964, 0
      %vm997 = vcmp.ge.s32.totalorder %v965, 0
      %vm998 = vcmp.ge.s32.totalorder %v966, 0
      %vm999 = vcmp.ge.s32.totalorder %v967, 0
      %vm1000 = vcmp.ge.s32.totalorder %v968, 0
      %vm1001 = vcmp.ge.s32.totalorder %v969, 0
      %vm1002 = vcmp.ge.s32.totalorder %v970, 0
      %vm1003 = vcmp.lt.s32.totalorder %v939, 16
      %vm1004 = vcmp.lt.s32.totalorder %v940, 16
      %vm1005 = vcmp.lt.s32.totalorder %v941, 16
      %vm1006 = vcmp.lt.s32.totalorder %v942, 16
      %vm1007 = vcmp.lt.s32.totalorder %v943, 16
      %vm1008 = vcmp.lt.s32.totalorder %v944, 16
      %vm1009 = vcmp.lt.s32.totalorder %v945, 16
      %vm1010 = vcmp.lt.s32.totalorder %v946, 16
      %vm1011 = vcmp.lt.s32.totalorder %v947, 16
      %vm1012 = vcmp.lt.s32.totalorder %v948, 16
      %vm1013 = vcmp.lt.s32.totalorder %v949, 16
      %vm1014 = vcmp.lt.s32.totalorder %v950, 16
      %vm1015 = vcmp.lt.s32.totalorder %v951, 16
      %vm1016 = vcmp.lt.s32.totalorder %v952, 16
      %vm1017 = vcmp.lt.s32.totalorder %v953, 16
      %vm1018 = vcmp.lt.s32.totalorder %v954, 16
      %vm1019 = vcmp.lt.s32.totalorder %v955, 16
      %vm1020 = vcmp.lt.s32.totalorder %v956, 16
      %vm1021 = vcmp.lt.s32.totalorder %v957, 16
      %vm1022 = vcmp.lt.s32.totalorder %v958, 16
      %vm1023 = vcmp.lt.s32.totalorder %v959, 16
      %vm1024 = vcmp.lt.s32.totalorder %v960, 16
      %vm1025 = vcmp.lt.s32.totalorder %v961, 16
      %vm1026 = vcmp.lt.s32.totalorder %v962, 16
      %vm1027 = vcmp.lt.s32.totalorder %v963, 16
      %vm1028 = vcmp.lt.s32.totalorder %v964, 16
      %vm1029 = vcmp.lt.s32.totalorder %v965, 16
      %vm1030 = vcmp.lt.s32.totalorder %v966, 16
      %vm1031 = vcmp.lt.s32.totalorder %v967, 16
      %vm1032 = vcmp.lt.s32.totalorder %v968, 16
      %vm1033 = vcmp.lt.s32.totalorder %v969, 16
      %vm1034 = vcmp.lt.s32.totalorder %v970, 16
      %vm1035 = vmand %vm971, %vm1003
      %vm1036 = vmand %vm972, %vm1004
      %vm1037 = vmand %vm973, %vm1005
      %vm1038 = vmand %vm974, %vm1006
      %vm1039 = vmand %vm975, %vm1007
      %vm1040 = vmand %vm976, %vm1008
      %vm1041 = vmand %vm977, %vm1009
      %vm1042 = vmand %vm978, %vm1010
      %vm1043 = vmand %vm979, %vm1011
      %vm1044 = vmand %vm980, %vm1012
      %vm1045 = vmand %vm981, %vm1013
      %vm1046 = vmand %vm982, %vm1014
      %vm1047 = vmand %vm983, %vm1015
      %vm1048 = vmand %vm984, %vm1016
      %vm1049 = vmand %vm985, %vm1017
      %vm1050 = vmand %vm986, %vm1018
      %vm1051 = vmand %vm987, %vm1019
      %vm1052 = vmand %vm988, %vm1020
      %vm1053 = vmand %vm989, %vm1021
      %vm1054 = vmand %vm990, %vm1022
      %vm1055 = vmand %vm991, %vm1023
      %vm1056 = vmand %vm992, %vm1024
      %vm1057 = vmand %vm993, %vm1025
      %vm1058 = vmand %vm994, %vm1026
      %vm1059 = vmand %vm995, %vm1027
      %vm1060 = vmand %vm996, %vm1028
      %vm1061 = vmand %vm997, %vm1029
      %vm1062 = vmand %vm998, %vm1030
      %vm1063 = vmand %vm999, %vm1031
      %vm1064 = vmand %vm1000, %vm1032
      %vm1065 = vmand %vm1001, %vm1033
      %vm1066 = vmand %vm1002, %vm1034
      %v1067 = vadd.s32 %v842, 4294967295
      %v1068 = vadd.s32 %v843, 4294967295
      %v1069 = vadd.s32 %v844, 4294967295
      %v1070 = vadd.s32 %v845, 4294967295
      %v1071 = vadd.s32 %v846, 4294967295
      %v1072 = vadd.s32 %v847, 4294967295
      %v1073 = vadd.s32 %v848, 4294967295
      %v1074 = vadd.s32 %v849, 4294967295
      %v1075 = vadd.s32 %v850, 4294967295
      %v1076 = vadd.s32 %v851, 4294967295
      %v1077 = vadd.s32 %v852, 4294967295
      %v1078 = vadd.s32 %v853, 4294967295
      %v1079 = vadd.s32 %v854, 4294967295
      %v1080 = vadd.s32 %v855, 4294967295
      %v1081 = vadd.s32 %v856, 4294967295
      %v1082 = vadd.s32 %v857, 4294967295
      %v1083 = vadd.s32 %v858, 4294967295
      %v1084 = vadd.s32 %v859, 4294967295
      %v1085 = vadd.s32 %v860, 4294967295
      %v1086 = vadd.s32 %v861, 4294967295
      %v1087 = vadd.s32 %v862, 4294967295
      %v1088 = vadd.s32 %v863, 4294967295
      %v1089 = vadd.s32 %v864, 4294967295
      %v1090 = vadd.s32 %v865, 4294967295
      %v1091 = vadd.s32 %v866, 4294967295
      %v1092 = vadd.s32 %v867, 4294967295
      %v1093 = vadd.s32 %v868, 4294967295
      %v1094 = vadd.s32 %v869, 4294967295
      %v1095 = vadd.s32 %v870, 4294967295
      %v1096 = vadd.s32 %v871, 4294967295
      %v1097 = vadd.s32 %v872, 4294967295
      %v1098 = vadd.s32 %v873, 4294967295
      %vm1099 = vcmp.ge.s32.totalorder %v1067, 0
      %vm1100 = vcmp.ge.s32.totalorder %v1068, 0
      %vm1101 = vcmp.ge.s32.totalorder %v1069, 0
      %vm1102 = vcmp.ge.s32.totalorder %v1070, 0
      %vm1103 = vcmp.ge.s32.totalorder %v1071, 0
      %vm1104 = vcmp.ge.s32.totalorder %v1072, 0
      %vm1105 = vcmp.ge.s32.totalorder %v1073, 0
      %vm1106 = vcmp.ge.s32.totalorder %v1074, 0
      %vm1107 = vcmp.ge.s32.totalorder %v1075, 0
      %vm1108 = vcmp.ge.s32.totalorder %v1076, 0
      %vm1109 = vcmp.ge.s32.totalorder %v1077, 0
      %vm1110 = vcmp.ge.s32.totalorder %v1078, 0
      %vm1111 = vcmp.ge.s32.totalorder %v1079, 0
      %vm1112 = vcmp.ge.s32.totalorder %v1080, 0
      %vm1113 = vcmp.ge.s32.totalorder %v1081, 0
      %vm1114 = vcmp.ge.s32.totalorder %v1082, 0
      %vm1115 = vcmp.ge.s32.totalorder %v1083, 0
      %vm1116 = vcmp.ge.s32.totalorder %v1084, 0
      %vm1117 = vcmp.ge.s32.totalorder %v1085, 0
      %vm1118 = vcmp.ge.s32.totalorder %v1086, 0
      %vm1119 = vcmp.ge.s32.totalorder %v1087, 0
      %vm1120 = vcmp.ge.s32.totalorder %v1088, 0
      %vm1121 = vcmp.ge.s32.totalorder %v1089, 0
      %vm1122 = vcmp.ge.s32.totalorder %v1090, 0
      %vm1123 = vcmp.ge.s32.totalorder %v1091, 0
      %vm1124 = vcmp.ge.s32.totalorder %v1092, 0
      %vm1125 = vcmp.ge.s32.totalorder %v1093, 0
      %vm1126 = vcmp.ge.s32.totalorder %v1094, 0
      %vm1127 = vcmp.ge.s32.totalorder %v1095, 0
      %vm1128 = vcmp.ge.s32.totalorder %v1096, 0
      %vm1129 = vcmp.ge.s32.totalorder %v1097, 0
      %vm1130 = vcmp.ge.s32.totalorder %v1098, 0
      %vm1131 = vmand %vm1035, %vm1099
      %vm1132 = vmand %vm1036, %vm1100
      %vm1133 = vmand %vm1037, %vm1101
      %vm1134 = vmand %vm1038, %vm1102
      %vm1135 = vmand %vm1039, %vm1103
      %vm1136 = vmand %vm1040, %vm1104
      %vm1137 = vmand %vm1041, %vm1105
      %vm1138 = vmand %vm1042, %vm1106
      %vm1139 = vmand %vm1043, %vm1107
      %vm1140 = vmand %vm1044, %vm1108
      %vm1141 = vmand %vm1045, %vm1109
      %vm1142 = vmand %vm1046, %vm1110
      %vm1143 = vmand %vm1047, %vm1111
      %vm1144 = vmand %vm1048, %vm1112
      %vm1145 = vmand %vm1049, %vm1113
      %vm1146 = vmand %vm1050, %vm1114
      %vm1147 = vmand %vm1051, %vm1115
      %vm1148 = vmand %vm1052, %vm1116
      %vm1149 = vmand %vm1053, %vm1117
      %vm1150 = vmand %vm1054, %vm1118
      %vm1151 = vmand %vm1055, %vm1119
      %vm1152 = vmand %vm1056, %vm1120
      %vm1153 = vmand %vm1057, %vm1121
      %vm1154 = vmand %vm1058, %vm1122
      %vm1155 = vmand %vm1059, %vm1123
      %vm1156 = vmand %vm1060, %vm1124
      %vm1157 = vmand %vm1061, %vm1125
      %vm1158 = vmand %vm1062, %vm1126
      %vm1159 = vmand %vm1063, %vm1127
      %vm1160 = vmand %vm1064, %vm1128
      %vm1161 = vmand %vm1065, %vm1129
      %vm1162 = vmand %vm1066, %vm1130
      %vm1163 = vcmp.lt.s32.totalorder %v1067, 16
      %vm1164 = vcmp.lt.s32.totalorder %v1068, 16
      %vm1165 = vcmp.lt.s32.totalorder %v1069, 16
      %vm1166 = vcmp.lt.s32.totalorder %v1070, 16
      %vm1167 = vcmp.lt.s32.totalorder %v1071, 16
      %vm1168 = vcmp.lt.s32.totalorder %v1072, 16
      %vm1169 = vcmp.lt.s32.totalorder %v1073, 16
      %vm1170 = vcmp.lt.s32.totalorder %v1074, 16
      %vm1171 = vcmp.lt.s32.totalorder %v1075, 16
      %vm1172 = vcmp.lt.s32.totalorder %v1076, 16
      %vm1173 = vcmp.lt.s32.totalorder %v1077, 16
      %vm1174 = vcmp.lt.s32.totalorder %v1078, 16
      %vm1175 = vcmp.lt.s32.totalorder %v1079, 16
      %vm1176 = vcmp.lt.s32.totalorder %v1080, 16
      %vm1177 = vcmp.lt.s32.totalorder %v1081, 16
      %vm1178 = vcmp.lt.s32.totalorder %v1082, 16
      %vm1179 = vcmp.lt.s32.totalorder %v1083, 16
      %vm1180 = vcmp.lt.s32.totalorder %v1084, 16
      %vm1181 = vcmp.lt.s32.totalorder %v1085, 16
      %vm1182 = vcmp.lt.s32.totalorder %v1086, 16
      %vm1183 = vcmp.lt.s32.totalorder %v1087, 16
      %vm1184 = vcmp.lt.s32.totalorder %v1088, 16
      %vm1185 = vcmp.lt.s32.totalorder %v1089, 16
      %vm1186 = vcmp.lt.s32.totalorder %v1090, 16
      %vm1187 = vcmp.lt.s32.totalorder %v1091, 16
      %vm1188 = vcmp.lt.s32.totalorder %v1092, 16
      %vm1189 = vcmp.lt.s32.totalorder %v1093, 16
      %vm1190 = vcmp.lt.s32.totalorder %v1094, 16
      %vm1191 = vcmp.lt.s32.totalorder %v1095, 16
      %vm1192 = vcmp.lt.s32.totalorder %v1096, 16
      %vm1193 = vcmp.lt.s32.totalorder %v1097, 16
      %vm1194 = vcmp.lt.s32.totalorder %v1098, 16
      %vm1195 = vmand %vm1131, %vm1163
      %vm1196 = vmand %vm1132, %vm1164
      %vm1197 = vmand %vm1133, %vm1165
      %vm1198 = vmand %vm1134, %vm1166
      %vm1199 = vmand %vm1135, %vm1167
      %vm1200 = vmand %vm1136, %vm1168
      %vm1201 = vmand %vm1137, %vm1169
      %vm1202 = vmand %vm1138, %vm1170
      %vm1203 = vmand %vm1139, %vm1171
      %vm1204 = vmand %vm1140, %vm1172
      %vm1205 = vmand %vm1141, %vm1173
      %vm1206 = vmand %vm1142, %vm1174
      %vm1207 = vmand %vm1143, %vm1175
      %vm1208 = vmand %vm1144, %vm1176
      %vm1209 = vmand %vm1145, %vm1177
      %vm1210 = vmand %vm1146, %vm1178
      %vm1211 = vmand %vm1147, %vm1179
      %vm1212 = vmand %vm1148, %vm1180
      %vm1213 = vmand %vm1149, %vm1181
      %vm1214 = vmand %vm1150, %vm1182
      %vm1215 = vmand %vm1151, %vm1183
      %vm1216 = vmand %vm1152, %vm1184
      %vm1217 = vmand %vm1153, %vm1185
      %vm1218 = vmand %vm1154, %vm1186
      %vm1219 = vmand %vm1155, %vm1187
      %vm1220 = vmand %vm1156, %vm1188
      %vm1221 = vmand %vm1157, %vm1189
      %vm1222 = vmand %vm1158, %vm1190
      %vm1223 = vmand %vm1159, %vm1191
      %vm1224 = vmand %vm1160, %vm1192
      %vm1225 = vmand %vm1161, %vm1193
      %vm1226 = vmand %vm1162, %vm1194
      %v1227 = vsel %vm1195, 1, 0
      %v1228 = vsel %vm1196, 1, 0
      %v1229 = vsel %vm1197, 1, 0
      %v1230 = vsel %vm1198, 1, 0
      %v1231 = vsel %vm1199, 1, 0
      %v1232 = vsel %vm1200, 1, 0
      %v1233 = vsel %vm1201, 1, 0
      %v1234 = vsel %vm1202, 1, 0
      %v1235 = vsel %vm1203, 1, 0
      %v1236 = vsel %vm1204, 1, 0
      %v1237 = vsel %vm1205, 1, 0
      %v1238 = vsel %vm1206, 1, 0
      %v1239 = vsel %vm1207, 1, 0
      %v1240 = vsel %vm1208, 1, 0
      %v1241 = vsel %vm1209, 1, 0
      %v1242 = vsel %vm1210, 1, 0
      %v1243 = vsel %vm1211, 1, 0
      %v1244 = vsel %vm1212, 1, 0
      %v1245 = vsel %vm1213, 1, 0
      %v1246 = vsel %vm1214, 1, 0
      %v1247 = vsel %vm1215, 1, 0
      %v1248 = vsel %vm1216, 1, 0
      %v1249 = vsel %vm1217, 1, 0
      %v1250 = vsel %vm1218, 1, 0
      %v1251 = vsel %vm1219, 1, 0
      %v1252 = vsel %vm1220, 1, 0
      %v1253 = vsel %vm1221, 1, 0
      %v1254 = vsel %vm1222, 1, 0
      %v1255 = vsel %vm1223, 1, 0
      %v1256 = vsel %vm1224, 1, 0
      %v1257 = vsel %vm1225, 1, 0
      %v1258 = vsel %vm1226, 1, 0
      %vm1259 = vcmp.eq.s32.totalorder %v1227, 1
      %vm1260 = vcmp.eq.s32.totalorder %v1228, 1
      %vm1261 = vcmp.eq.s32.totalorder %v1229, 1
      %vm1262 = vcmp.eq.s32.totalorder %v1230, 1
      %vm1263 = vcmp.eq.s32.totalorder %v1231, 1
      %vm1264 = vcmp.eq.s32.totalorder %v1232, 1
      %vm1265 = vcmp.eq.s32.totalorder %v1233, 1
      %vm1266 = vcmp.eq.s32.totalorder %v1234, 1
      %vm1267 = vcmp.eq.s32.totalorder %v1235, 1
      %vm1268 = vcmp.eq.s32.totalorder %v1236, 1
      %vm1269 = vcmp.eq.s32.totalorder %v1237, 1
      %vm1270 = vcmp.eq.s32.totalorder %v1238, 1
      %vm1271 = vcmp.eq.s32.totalorder %v1239, 1
      %vm1272 = vcmp.eq.s32.totalorder %v1240, 1
      %vm1273 = vcmp.eq.s32.totalorder %v1241, 1
      %vm1274 = vcmp.eq.s32.totalorder %v1242, 1
      %vm1275 = vcmp.eq.s32.totalorder %v1243, 1
      %vm1276 = vcmp.eq.s32.totalorder %v1244, 1
      %vm1277 = vcmp.eq.s32.totalorder %v1245, 1
      %vm1278 = vcmp.eq.s32.totalorder %v1246, 1
      %vm1279 = vcmp.eq.s32.totalorder %v1247, 1
      %vm1280 = vcmp.eq.s32.totalorder %v1248, 1
      %vm1281 = vcmp.eq.s32.totalorder %v1249, 1
      %vm1282 = vcmp.eq.s32.totalorder %v1250, 1
      %vm1283 = vcmp.eq.s32.totalorder %v1251, 1
      %vm1284 = vcmp.eq.s32.totalorder %v1252, 1
      %vm1285 = vcmp.eq.s32.totalorder %v1253, 1
      %vm1286 = vcmp.eq.s32.totalorder %v1254, 1
      %vm1287 = vcmp.eq.s32.totalorder %v1255, 1
      %vm1288 = vcmp.eq.s32.totalorder %v1256, 1
      %vm1289 = vcmp.eq.s32.totalorder %v1257, 1
      %vm1290 = vcmp.eq.s32.totalorder %v1258, 1
      %v1291 = vsel %vm1259, %v908, 0.0
      %v1292 = vsel %vm1260, %v907, 0.0
      %v1293 = vsel %vm1261, %v938, 0.0
      %v1294 = vsel %vm1262, %v937, 0.0
      %v1295 = vsel %vm1263, %v936, 0.0
      %v1296 = vsel %vm1264, %v935, 0.0
      %v1297 = vsel %vm1265, %v934, 0.0
      %v1298 = vsel %vm1266, %v933, 0.0
      %v1299 = vsel %vm1267, %v932, 0.0
      %v1300 = vsel %vm1268, %v931, 0.0
      %v1301 = vsel %vm1269, %v930, 0.0
      %v1302 = vsel %vm1270, %v929, 0.0
      %v1303 = vsel %vm1271, %v928, 0.0
      %v1304 = vsel %vm1272, %v927, 0.0
      %v1305 = vsel %vm1273, %v926, 0.0
      %v1306 = vsel %vm1274, %v925, 0.0
      %v1307 = vsel %vm1275, %v924, 0.0
      %v1308 = vsel %vm1276, %v923, 0.0
      %v1309 = vsel %vm1277, %v922, 0.0
      %v1310 = vsel %vm1278, %v921, 0.0
      %v1311 = vsel %vm1279, %v920, 0.0
      %v1312 = vsel %vm1280, %v919, 0.0
      %v1313 = vsel %vm1281, %v918, 0.0
      %v1314 = vsel %vm1282, %v917, 0.0
      %v1315 = vsel %vm1283, %v916, 0.0
      %v1316 = vsel %vm1284, %v915, 0.0
      %v1317 = vsel %vm1285, %v914, 0.0
      %v1318 = vsel %vm1286, %v913, 0.0
      %v1319 = vsel %vm1287, %v912, 0.0
      %v1320 = vsel %vm1288, %v911, 0.0
      %v1321 = vsel %vm1289, %v910, 0.0
      %v1322 = vsel %vm1290, %v909, 0.0
      %v1323 = vpack.c.bf16 %v1291, %v1291
      %v1324 = vpack.c.bf16 %v1292, %v1292
      %v1325 = vpack.c.bf16 %v1293, %v1293
      %v1326 = vpack.c.bf16 %v1294, %v1294
      %v1327 = vpack.c.bf16 %v1295, %v1295
      %v1328 = vpack.c.bf16 %v1296, %v1296
      %v1329 = vpack.c.bf16 %v1297, %v1297
      %v1330 = vpack.c.bf16 %v1298, %v1298
      %v1331 = vpack.c.bf16 %v1299, %v1299
      %v1332 = vpack.c.bf16 %v1300, %v1300
      %v1333 = vpack.c.bf16 %v1301, %v1301
      %v1334 = vpack.c.bf16 %v1302, %v1302
      %v1335 = vpack.c.bf16 %v1303, %v1303
      %v1336 = vpack.c.bf16 %v1304, %v1304
      %v1337 = vpack.c.bf16 %v1305, %v1305
      %v1338 = vpack.c.bf16 %v1306, %v1306
      %v1339 = vpack.c.bf16 %v1307, %v1307
      %v1340 = vpack.c.bf16 %v1308, %v1308
      %v1341 = vpack.c.bf16 %v1309, %v1309
      %v1342 = vpack.c.bf16 %v1310, %v1310
      %v1343 = vpack.c.bf16 %v1311, %v1311
      %v1344 = vpack.c.bf16 %v1312, %v1312
      %v1345 = vpack.c.bf16 %v1313, %v1313
      %v1346 = vpack.c.bf16 %v1314, %v1314
      %v1347 = vpack.c.bf16 %v1315, %v1315
      %v1348 = vpack.c.bf16 %v1316, %v1316
      %v1349 = vpack.c.bf16 %v1317, %v1317
      %v1350 = vpack.c.bf16 %v1318, %v1318
      %v1351 = vpack.c.bf16 %v1319, %v1319
      %v1352 = vpack.c.bf16 %v1320, %v1320
      %v1353 = vpack.c.bf16 %v1321, %v1321
      %v1354 = vpack.c.bf16 %v1322, %v1322
      %1355 = vst [vmem:[#allocation2] sm:$0xf] %v1323
      %1356 = vst [vmem:[#allocation2 + $0x24] sm:$0xf] %v1324
      %1357 = vst [vmem:[#allocation2 + $0x48] sm:$0xf] %v1325
      %1358 = vst [vmem:[#allocation2 + $0x6c] sm:$0xf] %v1326
      %1359 = vst [vmem:[#allocation2 + $0x90] sm:$0xf] %v1327
      %1360 = vst [vmem:[#allocation2 + $0xb4] sm:$0xf] %v1328
      %1361 = vst [vmem:[#allocation2 + $0xd8] sm:$0xf] %v1329
      %1362 = vst [vmem:[#allocation2 + $0xfc] sm:$0xf] %v1330
      %1363 = vst [vmem:[#allocation2 + $0x120] sm:$0xf] %v1331
      %1364 = vst [vmem:[#allocation2 + $0x144] sm:$0xf] %v1332
      %1365 = vst [vmem:[#allocation2 + $0x168] sm:$0xf] %v1333
      %1366 = vst [vmem:[#allocation2 + $0x18c] sm:$0xf] %v1334
      %1367 = vst [vmem:[#allocation2 + $0x1b0] sm:$0xf] %v1335
      %1368 = vst [vmem:[#allocation2 + $0x1d4] sm:$0xf] %v1336
      %1369 = vst [vmem:[#allocation2 + $0x1f8] sm:$0xf] %v1337
      %1370 = vst [vmem:[#allocation2 + $0x21c] sm:$0xf] %v1338
      %1371 = vst [vmem:[#allocation2 + $0x240] sm:$0xf] %v1339
      %1372 = vst [vmem:[#allocation2 + $0x264] sm:$0xf] %v1340
      %1373 = vst [vmem:[#allocation2 + $0x288] sm:$0xf] %v1341
      %1374 = vst [vmem:[#allocation2 + $0x2ac] sm:$0xf] %v1342
      %1375 = vst [vmem:[#allocation2 + $0x2d0] sm:$0xf] %v1343
      %1376 = vst [vmem:[#allocation2 + $0x2f4] sm:$0xf] %v1344
      %1377 = vst [vmem:[#allocation2 + $0x318] sm:$0xf] %v1345
      %1378 = vst [vmem:[#allocation2 + $0x33c] sm:$0xf] %v1346
      %1379 = vst [vmem:[#allocation2 + $0x360] sm:$0xf] %v1347
      %1380 = vst [vmem:[#allocation2 + $0x384] sm:$0xf] %v1348
      %1381 = vst [vmem:[#allocation2 + $0x3a8] sm:$0xf] %v1349
      %1382 = vst [vmem:[#allocation2 + $0x3cc] sm:$0xf] %v1350
      %1383 = vst [vmem:[#allocation2 + $0x3f0] sm:$0xf] %v1351
      %1384 = vst [vmem:[#allocation2 + $0x414] sm:$0xf] %v1352
      %1385 = vst [vmem:[#allocation2 + $0x438] sm:$0xf] %v1353
      %1386 = vst [vmem:[#allocation2 + $0x45c] sm:$0xf] %v1354
      %vm1387 = vcmp.ge.s32.totalorder %v842, 0
      %vm1388 = vcmp.ge.s32.totalorder %v843, 0
      %vm1389 = vcmp.ge.s32.totalorder %v844, 0
      %vm1390 = vcmp.ge.s32.totalorder %v845, 0
      %vm1391 = vcmp.ge.s32.totalorder %v846, 0
      %vm1392 = vcmp.ge.s32.totalorder %v847, 0
      %vm1393 = vcmp.ge.s32.totalorder %v848, 0
      %vm1394 = vcmp.ge.s32.totalorder %v849, 0
      %vm1395 = vcmp.ge.s32.totalorder %v850, 0
      %vm1396 = vcmp.ge.s32.totalorder %v851, 0
      %vm1397 = vcmp.ge.s32.totalorder %v852, 0
      %vm1398 = vcmp.ge.s32.totalorder %v853, 0
      %vm1399 = vcmp.ge.s32.totalorder %v854, 0
      %vm1400 = vcmp.ge.s32.totalorder %v855, 0
      %vm1401 = vcmp.ge.s32.totalorder %v856, 0
      %vm1402 = vcmp.ge.s32.totalorder %v857, 0
      %vm1403 = vcmp.ge.s32.totalorder %v858, 0
      %vm1404 = vcmp.ge.s32.totalorder %v859, 0
      %vm1405 = vcmp.ge.s32.totalorder %v860, 0
      %vm1406 = vcmp.ge.s32.totalorder %v861, 0
      %vm1407 = vcmp.ge.s32.totalorder %v862, 0
      %vm1408 = vcmp.ge.s32.totalorder %v863, 0
      %vm1409 = vcmp.ge.s32.totalorder %v864, 0
      %vm1410 = vcmp.ge.s32.totalorder %v865, 0
      %vm1411 = vcmp.ge.s32.totalorder %v866, 0
      %vm1412 = vcmp.ge.s32.totalorder %v867, 0
      %vm1413 = vcmp.ge.s32.totalorder %v868, 0
      %vm1414 = vcmp.ge.s32.totalorder %v869, 0
      %vm1415 = vcmp.ge.s32.totalorder %v870, 0
      %vm1416 = vcmp.ge.s32.totalorder %v871, 0
      %vm1417 = vcmp.ge.s32.totalorder %v872, 0
      %vm1418 = vcmp.ge.s32.totalorder %v873, 0
      %vm1419 = vmand %vm1035, %vm1387
      %vm1420 = vmand %vm1036, %vm1388
      %vm1421 = vmand %vm1037, %vm1389
      %vm1422 = vmand %vm1038, %vm1390
      %vm1423 = vmand %vm1039, %vm1391
      %vm1424 = vmand %vm1040, %vm1392
      %vm1425 = vmand %vm1041, %vm1393
      %vm1426 = vmand %vm1042, %vm1394
      %vm1427 = vmand %vm1043, %vm1395
      %vm1428 = vmand %vm1044, %vm1396
      %vm1429 = vmand %vm1045, %vm1397
      %vm1430 = vmand %vm1046, %vm1398
      %vm1431 = vmand %vm1047, %vm1399
      %vm1432 = vmand %vm1048, %vm1400
      %vm1433 = vmand %vm1049, %vm1401
      %vm1434 = vmand %vm1050, %vm1402
      %vm1435 = vmand %vm1051, %vm1403
      %vm1436 = vmand %vm1052, %vm1404
      %vm1437 = vmand %vm1053, %vm1405
      %vm1438 = vmand %vm1054, %vm1406
      %vm1439 = vmand %vm1055, %vm1407
      %vm1440 = vmand %vm1056, %vm1408
      %vm1441 = vmand %vm1057, %vm1409
      %vm1442 = vmand %vm1058, %vm1410
      %vm1443 = vmand %vm1059, %vm1411
      %vm1444 = vmand %vm1060, %vm1412
      %vm1445 = vmand %vm1061, %vm1413
      %vm1446 = vmand %vm1062, %vm1414
      %vm1447 = vmand %vm1063, %vm1415
      %vm1448 = vmand %vm1064, %vm1416
      %vm1449 = vmand %vm1065, %vm1417
      %vm1450 = vmand %vm1066, %vm1418
      %vm1451 = vcmp.lt.s32.totalorder %v842, 16
      %vm1452 = vcmp.lt.s32.totalorder %v843, 16
      %vm1453 = vcmp.lt.s32.totalorder %v844, 16
      %vm1454 = vcmp.lt.s32.totalorder %v845, 16
      %vm1455 = vcmp.lt.s32.totalorder %v846, 16
      %vm1456 = vcmp.lt.s32.totalorder %v847, 16
      %vm1457 = vcmp.lt.s32.totalorder %v848, 16
      %vm1458 = vcmp.lt.s32.totalorder %v849, 16
      %vm1459 = vcmp.lt.s32.totalorder %v850, 16
      %vm1460 = vcmp.lt.s32.totalorder %v851, 16
      %vm1461 = vcmp.lt.s32.totalorder %v852, 16
      %vm1462 = vcmp.lt.s32.totalorder %v853, 16
      %vm1463 = vcmp.lt.s32.totalorder %v854, 16
      %vm1464 = vcmp.lt.s32.totalorder %v855, 16
      %vm1465 = vcmp.lt.s32.totalorder %v856, 16
      %vm1466 = vcmp.lt.s32.totalorder %v857, 16
      %vm1467 = vcmp.lt.s32.totalorder %v858, 16
      %vm1468 = vcmp.lt.s32.totalorder %v859, 16
      %vm1469 = vcmp.lt.s32.totalorder %v860, 16
      %vm1470 = vcmp.lt.s32.totalorder %v861, 16
      %vm1471 = vcmp.lt.s32.totalorder %v862, 16
      %vm1472 = vcmp.lt.s32.totalorder %v863, 16
      %vm1473 = vcmp.lt.s32.totalorder %v864, 16
      %vm1474 = vcmp.lt.s32.totalorder %v865, 16
      %vm1475 = vcmp.lt.s32.totalorder %v866, 16
      %vm1476 = vcmp.lt.s32.totalorder %v867, 16
      %vm1477 = vcmp.lt.s32.totalorder %v868, 16
      %vm1478 = vcmp.lt.s32.totalorder %v869, 16
      %vm1479 = vcmp.lt.s32.totalorder %v870, 16
      %vm1480 = vcmp.lt.s32.totalorder %v871, 16
      %vm1481 = vcmp.lt.s32.totalorder %v872, 16
      %vm1482 = vcmp.lt.s32.totalorder %v873, 16
      %vm1483 = vmand %vm1419, %vm1451
      %vm1484 = vmand %vm1420, %vm1452
      %vm1485 = vmand %vm1421, %vm1453
      %vm1486 = vmand %vm1422, %vm1454
      %vm1487 = vmand %vm1423, %vm1455
      %vm1488 = vmand %vm1424, %vm1456
      %vm1489 = vmand %vm1425, %vm1457
      %vm1490 = vmand %vm1426, %vm1458
      %vm1491 = vmand %vm1427, %vm1459
      %vm1492 = vmand %vm1428, %vm1460
      %vm1493 = vmand %vm1429, %vm1461
      %vm1494 = vmand %vm1430, %vm1462
      %vm1495 = vmand %vm1431, %vm1463
      %vm1496 = vmand %vm1432, %vm1464
      %vm1497 = vmand %vm1433, %vm1465
      %vm1498 = vmand %vm1434, %vm1466
      %vm1499 = vmand %vm1435, %vm1467
      %vm1500 = vmand %vm1436, %vm1468
      %vm1501 = vmand %vm1437, %vm1469
      %vm1502 = vmand %vm1438, %vm1470
      %vm1503 = vmand %vm1439, %vm1471
      %vm1504 = vmand %vm1440, %vm1472
      %vm1505 = vmand %vm1441, %vm1473
      %vm1506 = vmand %vm1442, %vm1474
      %vm1507 = vmand %vm1443, %vm1475
      %vm1508 = vmand %vm1444, %vm1476
      %vm1509 = vmand %vm1445, %vm1477
      %vm1510 = vmand %vm1446, %vm1478
      %vm1511 = vmand %vm1447, %vm1479
      %vm1512 = vmand %vm1448, %vm1480
      %vm1513 = vmand %vm1449, %vm1481
      %vm1514 = vmand %vm1450, %vm1482
      %v1515 = vsel %vm1483, 1, 0
      %v1516 = vsel %vm1484, 1, 0
      %v1517 = vsel %vm1485, 1, 0
      %v1518 = vsel %vm1486, 1, 0
      %v1519 = vsel %vm1487, 1, 0
      %v1520 = vsel %vm1488, 1, 0
      %v1521 = vsel %vm1489, 1, 0
      %v1522 = vsel %vm1490, 1, 0
      %v1523 = vsel %vm1491, 1, 0
      %v1524 = vsel %vm1492, 1, 0
      %v1525 = vsel %vm1493, 1, 0
      %v1526 = vsel %vm1494, 1, 0
      %v1527 = vsel %vm1495, 1, 0
      %v1528 = vsel %vm1496, 1, 0
      %v1529 = vsel %vm1497, 1, 0
      %v1530 = vsel %vm1498, 1, 0
      %v1531 = vsel %vm1499, 1, 0
      %v1532 = vsel %vm1500, 1, 0
      %v1533 = vsel %vm1501, 1, 0
      %v1534 = vsel %vm1502, 1, 0
      %v1535 = vsel %vm1503, 1, 0
      %v1536 = vsel %vm1504, 1, 0
      %v1537 = vsel %vm1505, 1, 0
      %v1538 = vsel %vm1506, 1, 0
      %v1539 = vsel %vm1507, 1, 0
      %v1540 = vsel %vm1508, 1, 0
      %v1541 = vsel %vm1509, 1, 0
      %v1542 = vsel %vm1510, 1, 0
      %v1543 = vsel %vm1511, 1, 0
      %v1544 = vsel %vm1512, 1, 0
      %v1545 = vsel %vm1513, 1, 0
      %v1546 = vsel %vm1514, 1, 0
      %vm1547 = vcmp.eq.s32.totalorder %v1515, 1
      %vm1548 = vcmp.eq.s32.totalorder %v1516, 1
      %vm1549 = vcmp.eq.s32.totalorder %v1517, 1
      %vm1550 = vcmp.eq.s32.totalorder %v1518, 1
      %vm1551 = vcmp.eq.s32.totalorder %v1519, 1
      %vm1552 = vcmp.eq.s32.totalorder %v1520, 1
      %vm1553 = vcmp.eq.s32.totalorder %v1521, 1
      %vm1554 = vcmp.eq.s32.totalorder %v1522, 1
      %vm1555 = vcmp.eq.s32.totalorder %v1523, 1
      %vm1556 = vcmp.eq.s32.totalorder %v1524, 1
      %vm1557 = vcmp.eq.s32.totalorder %v1525, 1
      %vm1558 = vcmp.eq.s32.totalorder %v1526, 1
      %vm1559 = vcmp.eq.s32.totalorder %v1527, 1
      %vm1560 = vcmp.eq.s32.totalorder %v1528, 1
      %vm1561 = vcmp.eq.s32.totalorder %v1529, 1
      %vm1562 = vcmp.eq.s32.totalorder %v1530, 1
      %vm1563 = vcmp.eq.s32.totalorder %v1531, 1
      %vm1564 = vcmp.eq.s32.totalorder %v1532, 1
      %vm1565 = vcmp.eq.s32.totalorder %v1533, 1
      %vm1566 = vcmp.eq.s32.totalorder %v1534, 1
      %vm1567 = vcmp.eq.s32.totalorder %v1535, 1
      %vm1568 = vcmp.eq.s32.totalorder %v1536, 1
      %vm1569 = vcmp.eq.s32.totalorder %v1537, 1
      %vm1570 = vcmp.eq.s32.totalorder %v1538, 1
      %vm1571 = vcmp.eq.s32.totalorder %v1539, 1
      %vm1572 = vcmp.eq.s32.totalorder %v1540, 1
      %vm1573 = vcmp.eq.s32.totalorder %v1541, 1
      %vm1574 = vcmp.eq.s32.totalorder %v1542, 1
      %vm1575 = vcmp.eq.s32.totalorder %v1543, 1
      %vm1576 = vcmp.eq.s32.totalorder %v1544, 1
      %vm1577 = vcmp.eq.s32.totalorder %v1545, 1
      %vm1578 = vcmp.eq.s32.totalorder %v1546, 1
      %v1579 = vsel %vm1547, %v743, 0.0
      %v1580 = vsel %vm1548, %v744, 0.0
      %v1581 = vsel %vm1549, %v713, 0.0
      %v1582 = vsel %vm1550, %v714, 0.0
      %v1583 = vsel %vm1551, %v715, 0.0
      %v1584 = vsel %vm1552, %v716, 0.0
      %v1585 = vsel %vm1553, %v717, 0.0
      %v1586 = vsel %vm1554, %v718, 0.0
      %v1587 = vsel %vm1555, %v719, 0.0
      %v1588 = vsel %vm1556, %v720, 0.0
      %v1589 = vsel %vm1557, %v721, 0.0
      %v1590 = vsel %vm1558, %v722, 0.0
      %v1591 = vsel %vm1559, %v723, 0.0
      %v1592 = vsel %vm1560, %v724, 0.0
      %v1593 = vsel %vm1561, %v725, 0.0
      %v1594 = vsel %vm1562, %v726, 0.0
      %v1595 = vsel %vm1563, %v727, 0.0
      %v1596 = vsel %vm1564, %v728, 0.0
      %v1597 = vsel %vm1565, %v729, 0.0
      %v1598 = vsel %vm1566, %v730, 0.0
      %v1599 = vsel %vm1567, %v731, 0.0
      %v1600 = vsel %vm1568, %v732, 0.0
      %v1601 = vsel %vm1569, %v733, 0.0
      %v1602 = vsel %vm1570, %v734, 0.0
      %v1603 = vsel %vm1571, %v735, 0.0
      %v1604 = vsel %vm1572, %v736, 0.0
      %v1605 = vsel %vm1573, %v737, 0.0
      %v1606 = vsel %vm1574, %v738, 0.0
      %v1607 = vsel %vm1575, %v739, 0.0
      %v1608 = vsel %vm1576, %v740, 0.0
      %v1609 = vsel %vm1577, %v741, 0.0
      %v1610 = vsel %vm1578, %v742, 0.0
      %v1611 = vpack.c.bf16 %v1579, %v1579
      %v1612 = vpack.c.bf16 %v1580, %v1580
      %v1613 = vpack.c.bf16 %v1581, %v1581
      %v1614 = vpack.c.bf16 %v1582, %v1582
      %v1615 = vpack.c.bf16 %v1583, %v1583
      %v1616 = vpack.c.bf16 %v1584, %v1584
      %v1617 = vpack.c.bf16 %v1585, %v1585
      %v1618 = vpack.c.bf16 %v1586, %v1586
      %v1619 = vpack.c.bf16 %v1587, %v1587
      %v1620 = vpack.c.bf16 %v1588, %v1588
      %v1621 = vpack.c.bf16 %v1589, %v1589
      %v1622 = vpack.c.bf16 %v1590, %v1590
      %v1623 = vpack.c.bf16 %v1591, %v1591
      %v1624 = vpack.c.bf16 %v1592, %v1592
      %v1625 = vpack.c.bf16 %v1593, %v1593
      %v1626 = vpack.c.bf16 %v1594, %v1594
      %v1627 = vpack.c.bf16 %v1595, %v1595
      %v1628 = vpack.c.bf16 %v1596, %v1596
      %v1629 = vpack.c.bf16 %v1597, %v1597
      %v1630 = vpack.c.bf16 %v1598, %v1598
      %v1631 = vpack.c.bf16 %v1599, %v1599
      %v1632 = vpack.c.bf16 %v1600, %v1600
      %v1633 = vpack.c.bf16 %v1601, %v1601
      %v1634 = vpack.c.bf16 %v1602, %v1602
      %v1635 = vpack.c.bf16 %v1603, %v1603
      %v1636 = vpack.c.bf16 %v1604, %v1604
      %v1637 = vpack.c.bf16 %v1605, %v1605
      %v1638 = vpack.c.bf16 %v1606, %v1606
      %v1639 = vpack.c.bf16 %v1607, %v1607
      %v1640 = vpack.c.bf16 %v1608, %v1608
      %v1641 = vpack.c.bf16 %v1609, %v1609
      %v1642 = vpack.c.bf16 %v1610, %v1610
      %1643 = vst [vmem:[#allocation2 + $0x4] sm:$0xf] %v1611
      %1644 = vst [vmem:[#allocation2 + $0x28] sm:$0xf] %v1612
      %1645 = vst [vmem:[#allocation2 + $0x4c] sm:$0xf] %v1613
      %1646 = vst [vmem:[#allocation2 + $0x70] sm:$0xf] %v1614
      %1647 = vst [vmem:[#allocation2 + $0x94] sm:$0xf] %v1615
      %1648 = vst [vmem:[#allocation2 + $0xb8] sm:$0xf] %v1616
      %1649 = vst [vmem:[#allocation2 + $0xdc] sm:$0xf] %v1617
      %1650 = vst [vmem:[#allocation2 + $0x100] sm:$0xf] %v1618
      %1651 = vst [vmem:[#allocation2 + $0x124] sm:$0xf] %v1619
      %1652 = vst [vmem:[#allocation2 + $0x148] sm:$0xf] %v1620
      %1653 = vst [vmem:[#allocation2 + $0x16c] sm:$0xf] %v1621
      %1654 = vst [vmem:[#allocation2 + $0x190] sm:$0xf] %v1622
      %1655 = vst [vmem:[#allocation2 + $0x1b4] sm:$0xf] %v1623
      %1656 = vst [vmem:[#allocation2 + $0x1d8] sm:$0xf] %v1624
      %1657 = vst [vmem:[#allocation2 + $0x1fc] sm:$0xf] %v1625
      %1658 = vst [vmem:[#allocation2 + $0x220] sm:$0xf] %v1626
      %1659 = vst [vmem:[#allocation2 + $0x244] sm:$0xf] %v1627
      %1660 = vst [vmem:[#allocation2 + $0x268] sm:$0xf] %v1628
      %1661 = vst [vmem:[#allocation2 + $0x28c] sm:$0xf] %v1629
      %1662 = vst [vmem:[#allocation2 + $0x2b0] sm:$0xf] %v1630
      %1663 = vst [vmem:[#allocation2 + $0x2d4] sm:$0xf] %v1631
      %1664 = vst [vmem:[#allocation2 + $0x2f8] sm:$0xf] %v1632
      %1665 = vst [vmem:[#allocation2 + $0x31c] sm:$0xf] %v1633
      %1666 = vst [vmem:[#allocation2 + $0x340] sm:$0xf] %v1634
      %1667 = vst [vmem:[#allocation2 + $0x364] sm:$0xf] %v1635
      %1668 = vst [vmem:[#allocation2 + $0x388] sm:$0xf] %v1636
      %1669 = vst [vmem:[#allocation2 + $0x3ac] sm:$0xf] %v1637
      %1670 = vst [vmem:[#allocation2 + $0x3d0] sm:$0xf] %v1638
      %1671 = vst [vmem:[#allocation2 + $0x3f4] sm:$0xf] %v1639
      %1672 = vst [vmem:[#allocation2 + $0x418] sm:$0xf] %v1640
      %1673 = vst [vmem:[#allocation2 + $0x43c] sm:$0xf] %v1641
      %1674 = vst [vmem:[#allocation2 + $0x460] sm:$0xf] %v1642
      %v1675 = vrot.slane %v713, 1
      %v1676 = vrot.slane %v714, 1
      %v1677 = vrot.slane %v715, 1
      %v1678 = vrot.slane %v716, 1
      %v1679 = vrot.slane %v717, 1
      %v1680 = vrot.slane %v718, 1
      %v1681 = vrot.slane %v719, 1
      %v1682 = vrot.slane %v720, 1
      %v1683 = vrot.slane %v721, 1
      %v1684 = vrot.slane %v722, 1
      %v1685 = vrot.slane %v723, 1
      %v1686 = vrot.slane %v724, 1
      %v1687 = vrot.slane %v725, 1
      %v1688 = vrot.slane %v726, 1
      %v1689 = vrot.slane %v727, 1
      %v1690 = vrot.slane %v728, 1
      %v1691 = vrot.slane %v729, 1
      %v1692 = vrot.slane %v730, 1
      %v1693 = vrot.slane %v731, 1
      %v1694 = vrot.slane %v732, 1
      %v1695 = vrot.slane %v733, 1
      %v1696 = vrot.slane %v734, 1
      %v1697 = vrot.slane %v735, 1
      %v1698 = vrot.slane %v736, 1
      %v1699 = vrot.slane %v737, 1
      %v1700 = vrot.slane %v738, 1
      %v1701 = vrot.slane %v739, 1
      %v1702 = vrot.slane %v740, 1
      %v1703 = vrot.slane %v741, 1
      %v1704 = vrot.slane %v742, 1
      %v1705 = vrot.slane %v743, 1
      %v1706 = vrot.slane %v744, 1
      %vm1707 = vcmp.lt.s32.totalorder %v746, 7
      %v1708 = vsel %vm1707, %v1705, %v1706
      %v1709 = vsel %vm1707, %v1704, %v1705
      %v1710 = vsel %vm1707, %v1703, %v1704
      %v1711 = vsel %vm1707, %v1702, %v1703
      %v1712 = vsel %vm1707, %v1701, %v1702
      %v1713 = vsel %vm1707, %v1700, %v1701
      %v1714 = vsel %vm1707, %v1699, %v1700
      %v1715 = vsel %vm1707, %v1698, %v1699
      %v1716 = vsel %vm1707, %v1697, %v1698
      %v1717 = vsel %vm1707, %v1696, %v1697
      %v1718 = vsel %vm1707, %v1695, %v1696
      %v1719 = vsel %vm1707, %v1694, %v1695
      %v1720 = vsel %vm1707, %v1693, %v1694
      %v1721 = vsel %vm1707, %v1692, %v1693
      %v1722 = vsel %vm1707, %v1691, %v1692
      %v1723 = vsel %vm1707, %v1690, %v1691
      %v1724 = vsel %vm1707, %v1689, %v1690
      %v1725 = vsel %vm1707, %v1688, %v1689
      %v1726 = vsel %vm1707, %v1687, %v1688
      %v1727 = vsel %vm1707, %v1686, %v1687
      %v1728 = vsel %vm1707, %v1685, %v1686
      %v1729 = vsel %vm1707, %v1684, %v1685
      %v1730 = vsel %vm1707, %v1683, %v1684
      %v1731 = vsel %vm1707, %v1682, %v1683
      %v1732 = vsel %vm1707, %v1681, %v1682
      %v1733 = vsel %vm1707, %v1680, %v1681
      %v1734 = vsel %vm1707, %v1679, %v1680
      %v1735 = vsel %vm1707, %v1678, %v1679
      %v1736 = vsel %vm1707, %v1677, %v1678
      %v1737 = vsel %vm1707, %v1676, %v1677
      %v1738 = vsel %vm1707, %v1675, %v1676
      %v1739 = vsel %vm1707, %v1706, %v1675
      %v1740 = vadd.s32 %v842, 1
      %v1741 = vadd.s32 %v843, 1
      %v1742 = vadd.s32 %v844, 1
      %v1743 = vadd.s32 %v845, 1
      %v1744 = vadd.s32 %v846, 1
      %v1745 = vadd.s32 %v847, 1
      %v1746 = vadd.s32 %v848, 1
      %v1747 = vadd.s32 %v849, 1
      %v1748 = vadd.s32 %v850, 1
      %v1749 = vadd.s32 %v851, 1
      %v1750 = vadd.s32 %v852, 1
      %v1751 = vadd.s32 %v853, 1
      %v1752 = vadd.s32 %v854, 1
      %v1753 = vadd.s32 %v855, 1
      %v1754 = vadd.s32 %v856, 1
      %v1755 = vadd.s32 %v857, 1
      %v1756 = vadd.s32 %v858, 1
      %v1757 = vadd.s32 %v859, 1
      %v1758 = vadd.s32 %v860, 1
      %v1759 = vadd.s32 %v861, 1
      %v1760 = vadd.s32 %v862, 1
      %v1761 = vadd.s32 %v863, 1
      %v1762 = vadd.s32 %v864, 1
      %v1763 = vadd.s32 %v865, 1
      %v1764 = vadd.s32 %v866, 1
      %v1765 = vadd.s32 %v867, 1
      %v1766 = vadd.s32 %v868, 1
      %v1767 = vadd.s32 %v869, 1
      %v1768 = vadd.s32 %v870, 1
      %v1769 = vadd.s32 %v871, 1
      %v1770 = vadd.s32 %v872, 1
      %v1771 = vadd.s32 %v873, 1
      %vm1772 = vcmp.ge.s32.totalorder %v1740, 0
      %vm1773 = vcmp.ge.s32.totalorder %v1741, 0
      %vm1774 = vcmp.ge.s32.totalorder %v1742, 0
      %vm1775 = vcmp.ge.s32.totalorder %v1743, 0
      %vm1776 = vcmp.ge.s32.totalorder %v1744, 0
      %vm1777 = vcmp.ge.s32.totalorder %v1745, 0
      %vm1778 = vcmp.ge.s32.totalorder %v1746, 0
      %vm1779 = vcmp.ge.s32.totalorder %v1747, 0
      %vm1780 = vcmp.ge.s32.totalorder %v1748, 0
      %vm1781 = vcmp.ge.s32.totalorder %v1749, 0
      %vm1782 = vcmp.ge.s32.totalorder %v1750, 0
      %vm1783 = vcmp.ge.s32.totalorder %v1751, 0
      %vm1784 = vcmp.ge.s32.totalorder %v1752, 0
      %vm1785 = vcmp.ge.s32.totalorder %v1753, 0
      %vm1786 = vcmp.ge.s32.totalorder %v1754, 0
      %vm1787 = vcmp.ge.s32.totalorder %v1755, 0
      %vm1788 = vcmp.ge.s32.totalorder %v1756, 0
      %vm1789 = vcmp.ge.s32.totalorder %v1757, 0
      %vm1790 = vcmp.ge.s32.totalorder %v1758, 0
      %vm1791 = vcmp.ge.s32.totalorder %v1759, 0
      %vm1792 = vcmp.ge.s32.totalorder %v1760, 0
      %vm1793 = vcmp.ge.s32.totalorder %v1761, 0
      %vm1794 = vcmp.ge.s32.totalorder %v1762, 0
      %vm1795 = vcmp.ge.s32.totalorder %v1763, 0
      %vm1796 = vcmp.ge.s32.totalorder %v1764, 0
      %vm1797 = vcmp.ge.s32.totalorder %v1765, 0
      %vm1798 = vcmp.ge.s32.totalorder %v1766, 0
      %vm1799 = vcmp.ge.s32.totalorder %v1767, 0
      %vm1800 = vcmp.ge.s32.totalorder %v1768, 0
      %vm1801 = vcmp.ge.s32.totalorder %v1769, 0
      %vm1802 = vcmp.ge.s32.totalorder %v1770, 0
      %vm1803 = vcmp.ge.s32.totalorder %v1771, 0
      %vm1804 = vmand %vm1035, %vm1772
      %vm1805 = vmand %vm1036, %vm1773
      %vm1806 = vmand %vm1037, %vm1774
      %vm1807 = vmand %vm1038, %vm1775
      %vm1808 = vmand %vm1039, %vm1776
      %vm1809 = vmand %vm1040, %vm1777
      %vm1810 = vmand %vm1041, %vm1778
      %vm1811 = vmand %vm1042, %vm1779
      %vm1812 = vmand %vm1043, %vm1780
      %vm1813 = vmand %vm1044, %vm1781
      %vm1814 = vmand %vm1045, %vm1782
      %vm1815 = vmand %vm1046, %vm1783
      %vm1816 = vmand %vm1047, %vm1784
      %vm1817 = vmand %vm1048, %vm1785
      %vm1818 = vmand %vm1049, %vm1786
      %vm1819 = vmand %vm1050, %vm1787
      %vm1820 = vmand %vm1051, %vm1788
      %vm1821 = vmand %vm1052, %vm1789
      %vm1822 = vmand %vm1053, %vm1790
      %vm1823 = vmand %vm1054, %vm1791
      %vm1824 = vmand %vm1055, %vm1792
      %vm1825 = vmand %vm1056, %vm1793
      %vm1826 = vmand %vm1057, %vm1794
      %vm1827 = vmand %vm1058, %vm1795
      %vm1828 = vmand %vm1059, %vm1796
      %vm1829 = vmand %vm1060, %vm1797
      %vm1830 = vmand %vm1061, %vm1798
      %vm1831 = vmand %vm1062, %vm1799
      %vm1832 = vmand %vm1063, %vm1800
      %vm1833 = vmand %vm1064, %vm1801
      %vm1834 = vmand %vm1065, %vm1802
      %vm1835 = vmand %vm1066, %vm1803
      %vm1836 = vcmp.lt.s32.totalorder %v1740, 16
      %vm1837 = vcmp.lt.s32.totalorder %v1741, 16
      %vm1838 = vcmp.lt.s32.totalorder %v1742, 16
      %vm1839 = vcmp.lt.s32.totalorder %v1743, 16
      %vm1840 = vcmp.lt.s32.totalorder %v1744, 16
      %vm1841 = vcmp.lt.s32.totalorder %v1745, 16
      %vm1842 = vcmp.lt.s32.totalorder %v1746, 16
      %vm1843 = vcmp.lt.s32.totalorder %v1747, 16
      %vm1844 = vcmp.lt.s32.totalorder %v1748, 16
      %vm1845 = vcmp.lt.s32.totalorder %v1749, 16
      %vm1846 = vcmp.lt.s32.totalorder %v1750, 16
      %vm1847 = vcmp.lt.s32.totalorder %v1751, 16
      %vm1848 = vcmp.lt.s32.totalorder %v1752, 16
      %vm1849 = vcmp.lt.s32.totalorder %v1753, 16
      %vm1850 = vcmp.lt.s32.totalorder %v1754, 16
      %vm1851 = vcmp.lt.s32.totalorder %v1755, 16
      %vm1852 = vcmp.lt.s32.totalorder %v1756, 16
      %vm1853 = vcmp.lt.s32.totalorder %v1757, 16
      %vm1854 = vcmp.lt.s32.totalorder %v1758, 16
      %vm1855 = vcmp.lt.s32.totalorder %v1759, 16
      %vm1856 = vcmp.lt.s32.totalorder %v1760, 16
      %vm1857 = vcmp.lt.s32.totalorder %v1761, 16
      %vm1858 = vcmp.lt.s32.totalorder %v1762, 16
      %vm1859 = vcmp.lt.s32.totalorder %v1763, 16
      %vm1860 = vcmp.lt.s32.totalorder %v1764, 16
      %vm1861 = vcmp.lt.s32.totalorder %v1765, 16
      %vm1862 = vcmp.lt.s32.totalorder %v1766, 16
      %vm1863 = vcmp.lt.s32.totalorder %v1767, 16
      %vm1864 = vcmp.lt.s32.totalorder %v1768, 16
      %vm1865 = vcmp.lt.s32.totalorder %v1769, 16
      %vm1866 = vcmp.lt.s32.totalorder %v1770, 16
      %vm1867 = vcmp.lt.s32.totalorder %v1771, 16
      %vm1868 = vmand %vm1804, %vm1836
      %vm1869 = vmand %vm1805, %vm1837
      %vm1870 = vmand %vm1806, %vm1838
      %vm1871 = vmand %vm1807, %vm1839
      %vm1872 = vmand %vm1808, %vm1840
      %vm1873 = vmand %vm1809, %vm1841
      %vm1874 = vmand %vm1810, %vm1842
      %vm1875 = vmand %vm1811, %vm1843
      %vm1876 = vmand %vm1812, %vm1844
      %vm1877 = vmand %vm1813, %vm1845
      %vm1878 = vmand %vm1814, %vm1846
      %vm1879 = vmand %vm1815, %vm1847
      %vm1880 = vmand %vm1816, %vm1848
      %vm1881 = vmand %vm1817, %vm1849
      %vm1882 = vmand %vm1818, %vm1850
      %vm1883 = vmand %vm1819, %vm1851
      %vm1884 = vmand %vm1820, %vm1852
      %vm1885 = vmand %vm1821, %vm1853
      %vm1886 = vmand %vm1822, %vm1854
      %vm1887 = vmand %vm1823, %vm1855
      %vm1888 = vmand %vm1824, %vm1856
      %vm1889 = vmand %vm1825, %vm1857
      %vm1890 = vmand %vm1826, %vm1858
      %vm1891 = vmand %vm1827, %vm1859
      %vm1892 = vmand %vm1828, %vm1860
      %vm1893 = vmand %vm1829, %vm1861
      %vm1894 = vmand %vm1830, %vm1862
      %vm1895 = vmand %vm1831, %vm1863
      %vm1896 = vmand %vm1832, %vm1864
      %vm1897 = vmand %vm1833, %vm1865
      %vm1898 = vmand %vm1834, %vm1866
      %vm1899 = vmand %vm1835, %vm1867
      %v1900 = vsel %vm1868, 1, 0
      %v1901 = vsel %vm1869, 1, 0
      %v1902 = vsel %vm1870, 1, 0
      %v1903 = vsel %vm1871, 1, 0
      %v1904 = vsel %vm1872, 1, 0
      %v1905 = vsel %vm1873, 1, 0
      %v1906 = vsel %vm1874, 1, 0
      %v1907 = vsel %vm1875, 1, 0
      %v1908 = vsel %vm1876, 1, 0
      %v1909 = vsel %vm1877, 1, 0
      %v1910 = vsel %vm1878, 1, 0
      %v1911 = vsel %vm1879, 1, 0
      %v1912 = vsel %vm1880, 1, 0
      %v1913 = vsel %vm1881, 1, 0
      %v1914 = vsel %vm1882, 1, 0
      %v1915 = vsel %vm1883, 1, 0
      %v1916 = vsel %vm1884, 1, 0
      %v1917 = vsel %vm1885, 1, 0
      %v1918 = vsel %vm1886, 1, 0
      %v1919 = vsel %vm1887, 1, 0
      %v1920 = vsel %vm1888, 1, 0
      %v1921 = vsel %vm1889, 1, 0
      %v1922 = vsel %vm1890, 1, 0
      %v1923 = vsel %vm1891, 1, 0
      %v1924 = vsel %vm1892, 1, 0
      %v1925 = vsel %vm1893, 1, 0
      %v1926 = vsel %vm1894, 1, 0
      %v1927 = vsel %vm1895, 1, 0
      %v1928 = vsel %vm1896, 1, 0
      %v1929 = vsel %vm1897, 1, 0
      %v1930 = vsel %vm1898, 1, 0
      %v1931 = vsel %vm1899, 1, 0
      %vm1932 = vcmp.eq.s32.totalorder %v1900, 1
      %vm1933 = vcmp.eq.s32.totalorder %v1901, 1
      %vm1934 = vcmp.eq.s32.totalorder %v1902, 1
      %vm1935 = vcmp.eq.s32.totalorder %v1903, 1
      %vm1936 = vcmp.eq.s32.totalorder %v1904, 1
      %vm1937 = vcmp.eq.s32.totalorder %v1905, 1
      %vm1938 = vcmp.eq.s32.totalorder %v1906, 1
      %vm1939 = vcmp.eq.s32.totalorder %v1907, 1
      %vm1940 = vcmp.eq.s32.totalorder %v1908, 1
      %vm1941 = vcmp.eq.s32.totalorder %v1909, 1
      %vm1942 = vcmp.eq.s32.totalorder %v1910, 1
      %vm1943 = vcmp.eq.s32.totalorder %v1911, 1
      %vm1944 = vcmp.eq.s32.totalorder %v1912, 1
      %vm1945 = vcmp.eq.s32.totalorder %v1913, 1
      %vm1946 = vcmp.eq.s32.totalorder %v1914, 1
      %vm1947 = vcmp.eq.s32.totalorder %v1915, 1
      %vm1948 = vcmp.eq.s32.totalorder %v1916, 1
      %vm1949 = vcmp.eq.s32.totalorder %v1917, 1
      %vm1950 = vcmp.eq.s32.totalorder %v1918, 1
      %vm1951 = vcmp.eq.s32.totalorder %v1919, 1
      %vm1952 = vcmp.eq.s32.totalorder %v1920, 1
      %vm1953 = vcmp.eq.s32.totalorder %v1921, 1
      %vm1954 = vcmp.eq.s32.totalorder %v1922, 1
      %vm1955 = vcmp.eq.s32.totalorder %v1923, 1
      %vm1956 = vcmp.eq.s32.totalorder %v1924, 1
      %vm1957 = vcmp.eq.s32.totalorder %v1925, 1
      %vm1958 = vcmp.eq.s32.totalorder %v1926, 1
      %vm1959 = vcmp.eq.s32.totalorder %v1927, 1
      %vm1960 = vcmp.eq.s32.totalorder %v1928, 1
      %vm1961 = vcmp.eq.s32.totalorder %v1929, 1
      %vm1962 = vcmp.eq.s32.totalorder %v1930, 1
      %vm1963 = vcmp.eq.s32.totalorder %v1931, 1
      %v1964 = vsel %vm1932, %v1708, 0.0
      %v1965 = vsel %vm1933, %v1739, 0.0
      %v1966 = vsel %vm1934, %v1738, 0.0
      %v1967 = vsel %vm1935, %v1737, 0.0
      %v1968 = vsel %vm1936, %v1736, 0.0
      %v1969 = vsel %vm1937, %v1735, 0.0
      %v1970 = vsel %vm1938, %v1734, 0.0
      %v1971 = vsel %vm1939, %v1733, 0.0
      %v1972 = vsel %vm1940, %v1732, 0.0
      %v1973 = vsel %vm1941, %v1731, 0.0
      %v1974 = vsel %vm1942, %v1730, 0.0
      %v1975 = vsel %vm1943, %v1729, 0.0
      %v1976 = vsel %vm1944, %v1728, 0.0
      %v1977 = vsel %vm1945, %v1727, 0.0
      %v1978 = vsel %vm1946, %v1726, 0.0
      %v1979 = vsel %vm1947, %v1725, 0.0
      %v1980 = vsel %vm1948, %v1724, 0.0
      %v1981 = vsel %vm1949, %v1723, 0.0
      %v1982 = vsel %vm1950, %v1722, 0.0
      %v1983 = vsel %vm1951, %v1721, 0.0
      %v1984 = vsel %vm1952, %v1720, 0.0
      %v1985 = vsel %vm1953, %v1719, 0.0
      %v1986 = vsel %vm1954, %v1718, 0.0
      %v1987 = vsel %vm1955, %v1717, 0.0
      %v1988 = vsel %vm1956, %v1716, 0.0
      %v1989 = vsel %vm1957, %v1715, 0.0
      %v1990 = vsel %vm1958, %v1714, 0.0
      %v1991 = vsel %vm1959, %v1713, 0.0
      %v1992 = vsel %vm1960, %v1712, 0.0
      %v1993 = vsel %vm1961, %v1711, 0.0
      %v1994 = vsel %vm1962, %v1710, 0.0
      %v1995 = vsel %vm1963, %v1709, 0.0
      %v1996 = vpack.c.bf16 %v1964, %v1964
      %v1997 = vpack.c.bf16 %v1965, %v1965
      %v1998 = vpack.c.bf16 %v1966, %v1966
      %v1999 = vpack.c.bf16 %v1967, %v1967
      %v2000 = vpack.c.bf16 %v1968, %v1968
      %v2001 = vpack.c.bf16 %v1969, %v1969
      %v2002 = vpack.c.bf16 %v1970, %v1970
      %v2003 = vpack.c.bf16 %v1971, %v1971
      %v2004 = vpack.c.bf16 %v1972, %v1972
      %v2005 = vpack.c.bf16 %v1973, %v1973
      %v2006 = vpack.c.bf16 %v1974, %v1974
      %v2007 = vpack.c.bf16 %v1975, %v1975
      %v2008 = vpack.c.bf16 %v1976, %v1976
      %v2009 = vpack.c.bf16 %v1977, %v1977
      %v2010 = vpack.c.bf16 %v1978, %v1978
      %v2011 = vpack.c.bf16 %v1979, %v1979
      %v2012 = vpack.c.bf16 %v1980, %v1980
      %v2013 = vpack.c.bf16 %v1981, %v1981
      %v2014 = vpack.c.bf16 %v1982, %v1982
      %v2015 = vpack.c.bf16 %v1983, %v1983
      %v2016 = vpack.c.bf16 %v1984, %v1984
      %v2017 = vpack.c.bf16 %v1985, %v1985
      %v2018 = vpack.c.bf16 %v1986, %v1986
      %v2019 = vpack.c.bf16 %v1987, %v1987
      %v2020 = vpack.c.bf16 %v1988, %v1988
      %v2021 = vpack.c.bf16 %v1989, %v1989
      %v2022 = vpack.c.bf16 %v1990, %v1990
      %v2023 = vpack.c.bf16 %v1991, %v1991
      %v2024 = vpack.c.bf16 %v1992, %v1992
      %v2025 = vpack.c.bf16 %v1993, %v1993
      %v2026 = vpack.c.bf16 %v1994, %v1994
      %v2027 = vpack.c.bf16 %v1995, %v1995
      %2028 = vst [vmem:[#allocation2 + $0x8] sm:$0xf] %v1996
      %2029 = vst [vmem:[#allocation2 + $0x2c] sm:$0xf] %v1997
      %2030 = vst [vmem:[#allocation2 + $0x50] sm:$0xf] %v1998
      %2031 = vst [vmem:[#allocation2 + $0x74] sm:$0xf] %v1999
      %2032 = vst [vmem:[#allocation2 + $0x98] sm:$0xf] %v2000
      %2033 = vst [vmem:[#allocation2 + $0xbc] sm:$0xf] %v2001
      %2034 = vst [vmem:[#allocation2 + $0xe0] sm:$0xf] %v2002
      %2035 = vst [vmem:[#allocation2 + $0x104] sm:$0xf] %v2003
      %2036 = vst [vmem:[#allocation2 + $0x128] sm:$0xf] %v2004
      %2037 = vst [vmem:[#allocation2 + $0x14c] sm:$0xf] %v2005
      %2038 = vst [vmem:[#allocation2 + $0x170] sm:$0xf] %v2006
      %2039 = vst [vmem:[#allocation2 + $0x194] sm:$0xf] %v2007
      %2040 = vst [vmem:[#allocation2 + $0x1b8] sm:$0xf] %v2008
      %2041 = vst [vmem:[#allocation2 + $0x1dc] sm:$0xf] %v2009
      %2042 = vst [vmem:[#allocation2 + $0x200] sm:$0xf] %v2010
      %2043 = vst [vmem:[#allocation2 + $0x224] sm:$0xf] %v2011
      %2044 = vst [vmem:[#allocation2 + $0x248] sm:$0xf] %v2012
      %2045 = vst [vmem:[#allocation2 + $0x26c] sm:$0xf] %v2013
      %2046 = vst [vmem:[#allocation2 + $0x290] sm:$0xf] %v2014
      %2047 = vst [vmem:[#allocation2 + $0x2b4] sm:$0xf] %v2015
      %2048 = vst [vmem:[#allocation2 + $0x2d8] sm:$0xf] %v2016
      %2049 = vst [vmem:[#allocation2 + $0x2fc] sm:$0xf] %v2017
      %2050 = vst [vmem:[#allocation2 + $0x320] sm:$0xf] %v2018
      %2051 = vst [vmem:[#allocation2 + $0x344] sm:$0xf] %v2019
      %2052 = vst [vmem:[#allocation2 + $0x368] sm:$0xf] %v2020
      %2053 = vst [vmem:[#allocation2 + $0x38c] sm:$0xf] %v2021
      %2054 = vst [vmem:[#allocation2 + $0x3b0] sm:$0xf] %v2022
      %2055 = vst [vmem:[#allocation2 + $0x3d4] sm:$0xf] %v2023
      %2056 = vst [vmem:[#allocation2 + $0x3f8] sm:$0xf] %v2024
      %2057 = vst [vmem:[#allocation2 + $0x41c] sm:$0xf] %v2025
      %2058 = vst [vmem:[#allocation2 + $0x440] sm:$0xf] %v2026
      %2059 = vst [vmem:[#allocation2 + $0x464] sm:$0xf] %v2027
      %vm2060 = vcmp.ge.s32.totalorder %v810, 0
      %vm2061 = vcmp.ge.s32.totalorder %v811, 0
      %vm2062 = vcmp.ge.s32.totalorder %v812, 0
      %vm2063 = vcmp.ge.s32.totalorder %v813, 0
      %vm2064 = vcmp.ge.s32.totalorder %v814, 0
      %vm2065 = vcmp.ge.s32.totalorder %v815, 0
      %vm2066 = vcmp.ge.s32.totalorder %v816, 0
      %vm2067 = vcmp.ge.s32.totalorder %v817, 0
      %vm2068 = vcmp.ge.s32.totalorder %v818, 0
      %vm2069 = vcmp.ge.s32.totalorder %v819, 0
      %vm2070 = vcmp.ge.s32.totalorder %v820, 0
      %vm2071 = vcmp.ge.s32.totalorder %v821, 0
      %vm2072 = vcmp.ge.s32.totalorder %v822, 0
      %vm2073 = vcmp.ge.s32.totalorder %v823, 0
      %vm2074 = vcmp.ge.s32.totalorder %v824, 0
      %vm2075 = vcmp.ge.s32.totalorder %v825, 0
      %vm2076 = vcmp.ge.s32.totalorder %v826, 0
      %vm2077 = vcmp.ge.s32.totalorder %v827, 0
      %vm2078 = vcmp.ge.s32.totalorder %v828, 0
      %vm2079 = vcmp.ge.s32.totalorder %v829, 0
      %vm2080 = vcmp.ge.s32.totalorder %v830, 0
      %vm2081 = vcmp.ge.s32.totalorder %v831, 0
      %vm2082 = vcmp.ge.s32.totalorder %v832, 0
      %vm2083 = vcmp.ge.s32.totalorder %v833, 0
      %vm2084 = vcmp.ge.s32.totalorder %v834, 0
      %vm2085 = vcmp.ge.s32.totalorder %v835, 0
      %vm2086 = vcmp.ge.s32.totalorder %v836, 0
      %vm2087 = vcmp.ge.s32.totalorder %v837, 0
      %vm2088 = vcmp.ge.s32.totalorder %v838, 0
      %vm2089 = vcmp.ge.s32.totalorder %v839, 0
      %vm2090 = vcmp.ge.s32.totalorder %v840, 0
      %vm2091 = vcmp.ge.s32.totalorder %v841, 0
      %vm2092 = vcmp.lt.s32.totalorder %v810, 16
      %vm2093 = vcmp.lt.s32.totalorder %v811, 16
      %vm2094 = vcmp.lt.s32.totalorder %v812, 16
      %vm2095 = vcmp.lt.s32.totalorder %v813, 16
      %vm2096 = vcmp.lt.s32.totalorder %v814, 16
      %vm2097 = vcmp.lt.s32.totalorder %v815, 16
      %vm2098 = vcmp.lt.s32.totalorder %v816, 16
      %vm2099 = vcmp.lt.s32.totalorder %v817, 16
      %vm2100 = vcmp.lt.s32.totalorder %v818, 16
      %vm2101 = vcmp.lt.s32.totalorder %v819, 16
      %vm2102 = vcmp.lt.s32.totalorder %v820, 16
      %vm2103 = vcmp.lt.s32.totalorder %v821, 16
      %vm2104 = vcmp.lt.s32.totalorder %v822, 16
      %vm2105 = vcmp.lt.s32.totalorder %v823, 16
      %vm2106 = vcmp.lt.s32.totalorder %v824, 16
      %vm2107 = vcmp.lt.s32.totalorder %v825, 16
      %vm2108 = vcmp.lt.s32.totalorder %v826, 16
      %vm2109 = vcmp.lt.s32.totalorder %v827, 16
      %vm2110 = vcmp.lt.s32.totalorder %v828, 16
      %vm2111 = vcmp.lt.s32.totalorder %v829, 16
      %vm2112 = vcmp.lt.s32.totalorder %v830, 16
      %vm2113 = vcmp.lt.s32.totalorder %v831, 16
      %vm2114 = vcmp.lt.s32.totalorder %v832, 16
      %vm2115 = vcmp.lt.s32.totalorder %v833, 16
      %vm2116 = vcmp.lt.s32.totalorder %v834, 16
      %vm2117 = vcmp.lt.s32.totalorder %v835, 16
      %vm2118 = vcmp.lt.s32.totalorder %v836, 16
      %vm2119 = vcmp.lt.s32.totalorder %v837, 16
      %vm2120 = vcmp.lt.s32.totalorder %v838, 16
      %vm2121 = vcmp.lt.s32.totalorder %v839, 16
      %vm2122 = vcmp.lt.s32.totalorder %v840, 16
      %vm2123 = vcmp.lt.s32.totalorder %v841, 16
      %vm2124 = vmand %vm2060, %vm2092
      %vm2125 = vmand %vm2061, %vm2093
      %vm2126 = vmand %vm2062, %vm2094
      %vm2127 = vmand %vm2063, %vm2095
      %vm2128 = vmand %vm2064, %vm2096
      %vm2129 = vmand %vm2065, %vm2097
      %vm2130 = vmand %vm2066, %vm2098
      %vm2131 = vmand %vm2067, %vm2099
      %vm2132 = vmand %vm2068, %vm2100
      %vm2133 = vmand %vm2069, %vm2101
      %vm2134 = vmand %vm2070, %vm2102
      %vm2135 = vmand %vm2071, %vm2103
      %vm2136 = vmand %vm2072, %vm2104
      %vm2137 = vmand %vm2073, %vm2105
      %vm2138 = vmand %vm2074, %vm2106
      %vm2139 = vmand %vm2075, %vm2107
      %vm2140 = vmand %vm2076, %vm2108
      %vm2141 = vmand %vm2077, %vm2109
      %vm2142 = vmand %vm2078, %vm2110
      %vm2143 = vmand %vm2079, %vm2111
      %vm2144 = vmand %vm2080, %vm2112
      %vm2145 = vmand %vm2081, %vm2113
      %vm2146 = vmand %vm2082, %vm2114
      %vm2147 = vmand %vm2083, %vm2115
      %vm2148 = vmand %vm2084, %vm2116
      %vm2149 = vmand %vm2085, %vm2117
      %vm2150 = vmand %vm2086, %vm2118
      %vm2151 = vmand %vm2087, %vm2119
      %vm2152 = vmand %vm2088, %vm2120
      %vm2153 = vmand %vm2089, %vm2121
      %vm2154 = vmand %vm2090, %vm2122
      %vm2155 = vmand %vm2091, %vm2123
      %vm2156 = vmand %vm2124, %vm1099
      %vm2157 = vmand %vm2125, %vm1100
      %vm2158 = vmand %vm2126, %vm1101
      %vm2159 = vmand %vm2127, %vm1102
      %vm2160 = vmand %vm2128, %vm1103
      %vm2161 = vmand %vm2129, %vm1104
      %vm2162 = vmand %vm2130, %vm1105
      %vm2163 = vmand %vm2131, %vm1106
      %vm2164 = vmand %vm2132, %vm1107
      %vm2165 = vmand %vm2133, %vm1108
      %vm2166 = vmand %vm2134, %vm1109
      %vm2167 = vmand %vm2135, %vm1110
      %vm2168 = vmand %vm2136, %vm1111
      %vm2169 = vmand %vm2137, %vm1112
      %vm2170 = vmand %vm2138, %vm1113
      %vm2171 = vmand %vm2139, %vm1114
      %vm2172 = vmand %vm2140, %vm1115
      %vm2173 = vmand %vm2141, %vm1116
      %vm2174 = vmand %vm2142, %vm1117
      %vm2175 = vmand %vm2143, %vm1118
      %vm2176 = vmand %vm2144, %vm1119
      %vm2177 = vmand %vm2145, %vm1120
      %vm2178 = vmand %vm2146, %vm1121
      %vm2179 = vmand %vm2147, %vm1122
      %vm2180 = vmand %vm2148, %vm1123
      %vm2181 = vmand %vm2149, %vm1124
      %vm2182 = vmand %vm2150, %vm1125
      %vm2183 = vmand %vm2151, %vm1126
      %vm2184 = vmand %vm2152, %vm1127
      %vm2185 = vmand %vm2153, %vm1128
      %vm2186 = vmand %vm2154, %vm1129
      %vm2187 = vmand %vm2155, %vm1130
      %vm2188 = vmand %vm2156, %vm1163
      %vm2189 = vmand %vm2157, %vm1164
      %vm2190 = vmand %vm2158, %vm1165
      %vm2191 = vmand %vm2159, %vm1166
      %vm2192 = vmand %vm2160, %vm1167
      %vm2193 = vmand %vm2161, %vm1168
      %vm2194 = vmand %vm2162, %vm1169
      %vm2195 = vmand %vm2163, %vm1170
      %vm2196 = vmand %vm2164, %vm1171
      %vm2197 = vmand %vm2165, %vm1172
      %vm2198 = vmand %vm2166, %vm1173
      %vm2199 = vmand %vm2167, %vm1174
      %vm2200 = vmand %vm2168, %vm1175
      %vm2201 = vmand %vm2169, %vm1176
      %vm2202 = vmand %vm2170, %vm1177
      %vm2203 = vmand %vm2171, %vm1178
      %vm2204 = vmand %vm2172, %vm1179
      %vm2205 = vmand %vm2173, %vm1180
      %vm2206 = vmand %vm2174, %vm1181
      %vm2207 = vmand %vm2175, %vm1182
      %vm2208 = vmand %vm2176, %vm1183
      %vm2209 = vmand %vm2177, %vm1184
      %vm2210 = vmand %vm2178, %vm1185
      %vm2211 = vmand %vm2179, %vm1186
      %vm2212 = vmand %vm2180, %vm1187
      %vm2213 = vmand %vm2181, %vm1188
      %vm2214 = vmand %vm2182, %vm1189
      %vm2215 = vmand %vm2183, %vm1190
      %vm2216 = vmand %vm2184, %vm1191
      %vm2217 = vmand %vm2185, %vm1192
      %vm2218 = vmand %vm2186, %vm1193
      %vm2219 = vmand %vm2187, %vm1194
      %v2220 = vsel %vm2188, 1, 0
      %v2221 = vsel %vm2189, 1, 0
      %v2222 = vsel %vm2190, 1, 0
      %v2223 = vsel %vm2191, 1, 0
      %v2224 = vsel %vm2192, 1, 0
      %v2225 = vsel %vm2193, 1, 0
      %v2226 = vsel %vm2194, 1, 0
      %v2227 = vsel %vm2195, 1, 0
      %v2228 = vsel %vm2196, 1, 0
      %v2229 = vsel %vm2197, 1, 0
      %v2230 = vsel %vm2198, 1, 0
      %v2231 = vsel %vm2199, 1, 0
      %v2232 = vsel %vm2200, 1, 0
      %v2233 = vsel %vm2201, 1, 0
      %v2234 = vsel %vm2202, 1, 0
      %v2235 = vsel %vm2203, 1, 0
      %v2236 = vsel %vm2204, 1, 0
      %v2237 = vsel %vm2205, 1, 0
      %v2238 = vsel %vm2206, 1, 0
      %v2239 = vsel %vm2207, 1, 0
      %v2240 = vsel %vm2208, 1, 0
      %v2241 = vsel %vm2209, 1, 0
      %v2242 = vsel %vm2210, 1, 0
      %v2243 = vsel %vm2211, 1, 0
      %v2244 = vsel %vm2212, 1, 0
      %v2245 = vsel %vm2213, 1, 0
      %v2246 = vsel %vm2214, 1, 0
      %v2247 = vsel %vm2215, 1, 0
      %v2248 = vsel %vm2216, 1, 0
      %v2249 = vsel %vm2217, 1, 0
      %v2250 = vsel %vm2218, 1, 0
      %v2251 = vsel %vm2219, 1, 0
      %vm2252 = vcmp.eq.s32.totalorder %v2220, 1
      %vm2253 = vcmp.eq.s32.totalorder %v2221, 1
      %vm2254 = vcmp.eq.s32.totalorder %v2222, 1
      %vm2255 = vcmp.eq.s32.totalorder %v2223, 1
      %vm2256 = vcmp.eq.s32.totalorder %v2224, 1
      %vm2257 = vcmp.eq.s32.totalorder %v2225, 1
      %vm2258 = vcmp.eq.s32.totalorder %v2226, 1
      %vm2259 = vcmp.eq.s32.totalorder %v2227, 1
      %vm2260 = vcmp.eq.s32.totalorder %v2228, 1
      %vm2261 = vcmp.eq.s32.totalorder %v2229, 1
      %vm2262 = vcmp.eq.s32.totalorder %v2230, 1
      %vm2263 = vcmp.eq.s32.totalorder %v2231, 1
      %vm2264 = vcmp.eq.s32.totalorder %v2232, 1
      %vm2265 = vcmp.eq.s32.totalorder %v2233, 1
      %vm2266 = vcmp.eq.s32.totalorder %v2234, 1
      %vm2267 = vcmp.eq.s32.totalorder %v2235, 1
      %vm2268 = vcmp.eq.s32.totalorder %v2236, 1
      %vm2269 = vcmp.eq.s32.totalorder %v2237, 1
      %vm2270 = vcmp.eq.s32.totalorder %v2238, 1
      %vm2271 = vcmp.eq.s32.totalorder %v2239, 1
      %vm2272 = vcmp.eq.s32.totalorder %v2240, 1
      %vm2273 = vcmp.eq.s32.totalorder %v2241, 1
      %vm2274 = vcmp.eq.s32.totalorder %v2242, 1
      %vm2275 = vcmp.eq.s32.totalorder %v2243, 1
      %vm2276 = vcmp.eq.s32.totalorder %v2244, 1
      %vm2277 = vcmp.eq.s32.totalorder %v2245, 1
      %vm2278 = vcmp.eq.s32.totalorder %v2246, 1
      %vm2279 = vcmp.eq.s32.totalorder %v2247, 1
      %vm2280 = vcmp.eq.s32.totalorder %v2248, 1
      %vm2281 = vcmp.eq.s32.totalorder %v2249, 1
      %vm2282 = vcmp.eq.s32.totalorder %v2250, 1
      %vm2283 = vcmp.eq.s32.totalorder %v2251, 1
      %v2284 = vsel %vm2252, %v938, 0.0
      %v2285 = vsel %vm2253, %v937, 0.0
      %v2286 = vsel %vm2254, %v936, 0.0
      %v2287 = vsel %vm2255, %v935, 0.0
      %v2288 = vsel %vm2256, %v934, 0.0
      %v2289 = vsel %vm2257, %v933, 0.0
      %v2290 = vsel %vm2258, %v932, 0.0
      %v2291 = vsel %vm2259, %v931, 0.0
      %v2292 = vsel %vm2260, %v930, 0.0
      %v2293 = vsel %vm2261, %v929, 0.0
      %v2294 = vsel %vm2262, %v928, 0.0
      %v2295 = vsel %vm2263, %v927, 0.0
      %v2296 = vsel %vm2264, %v926, 0.0
      %v2297 = vsel %vm2265, %v925, 0.0
      %v2298 = vsel %vm2266, %v924, 0.0
      %v2299 = vsel %vm2267, %v923, 0.0
      %v2300 = vsel %vm2268, %v922, 0.0
      %v2301 = vsel %vm2269, %v921, 0.0
      %v2302 = vsel %vm2270, %v920, 0.0
      %v2303 = vsel %vm2271, %v919, 0.0
      %v2304 = vsel %vm2272, %v918, 0.0
      %v2305 = vsel %vm2273, %v917, 0.0
      %v2306 = vsel %vm2274, %v916, 0.0
      %v2307 = vsel %vm2275, %v915, 0.0
      %v2308 = vsel %vm2276, %v914, 0.0
      %v2309 = vsel %vm2277, %v913, 0.0
      %v2310 = vsel %vm2278, %v912, 0.0
      %v2311 = vsel %vm2279, %v911, 0.0
      %v2312 = vsel %vm2280, %v910, 0.0
      %v2313 = vsel %vm2281, %v909, 0.0
      %v2314 = vsel %vm2282, %v908, 0.0
      %v2315 = vsel %vm2283, %v907, 0.0
      %v2316 = vpack.c.bf16 %v2284, %v2284
      %v2317 = vpack.c.bf16 %v2285, %v2285
      %v2318 = vpack.c.bf16 %v2286, %v2286
      %v2319 = vpack.c.bf16 %v2287, %v2287
      %v2320 = vpack.c.bf16 %v2288, %v2288
      %v2321 = vpack.c.bf16 %v2289, %v2289
      %v2322 = vpack.c.bf16 %v2290, %v2290
      %v2323 = vpack.c.bf16 %v2291, %v2291
      %v2324 = vpack.c.bf16 %v2292, %v2292
      %v2325 = vpack.c.bf16 %v2293, %v2293
      %v2326 = vpack.c.bf16 %v2294, %v2294
      %v2327 = vpack.c.bf16 %v2295, %v2295
      %v2328 = vpack.c.bf16 %v2296, %v2296
      %v2329 = vpack.c.bf16 %v2297, %v2297
      %v2330 = vpack.c.bf16 %v2298, %v2298
      %v2331 = vpack.c.bf16 %v2299, %v2299
      %v2332 = vpack.c.bf16 %v2300, %v2300
      %v2333 = vpack.c.bf16 %v2301, %v2301
      %v2334 = vpack.c.bf16 %v2302, %v2302
      %v2335 = vpack.c.bf16 %v2303, %v2303
      %v2336 = vpack.c.bf16 %v2304, %v2304
      %v2337 = vpack.c.bf16 %v2305, %v2305
      %v2338 = vpack.c.bf16 %v2306, %v2306
      %v2339 = vpack.c.bf16 %v2307, %v2307
      %v2340 = vpack.c.bf16 %v2308, %v2308
      %v2341 = vpack.c.bf16 %v2309, %v2309
      %v2342 = vpack.c.bf16 %v2310, %v2310
      %v2343 = vpack.c.bf16 %v2311, %v2311
      %v2344 = vpack.c.bf16 %v2312, %v2312
      %v2345 = vpack.c.bf16 %v2313, %v2313
      %v2346 = vpack.c.bf16 %v2314, %v2314
      %v2347 = vpack.c.bf16 %v2315, %v2315
      %2348 = vst [vmem:[#allocation2 + $0xc] sm:$0xf] %v2316
      %2349 = vst [vmem:[#allocation2 + $0x30] sm:$0xf] %v2317
      %2350 = vst [vmem:[#allocation2 + $0x54] sm:$0xf] %v2318
      %2351 = vst [vmem:[#allocation2 + $0x78] sm:$0xf] %v2319
      %2352 = vst [vmem:[#allocation2 + $0x9c] sm:$0xf] %v2320
      %2353 = vst [vmem:[#allocation2 + $0xc0] sm:$0xf] %v2321
      %2354 = vst [vmem:[#allocation2 + $0xe4] sm:$0xf] %v2322
      %2355 = vst [vmem:[#allocation2 + $0x108] sm:$0xf] %v2323
      %2356 = vst [vmem:[#allocation2 + $0x12c] sm:$0xf] %v2324
      %2357 = vst [vmem:[#allocation2 + $0x150] sm:$0xf] %v2325
      %2358 = vst [vmem:[#allocation2 + $0x174] sm:$0xf] %v2326
      %2359 = vst [vmem:[#allocation2 + $0x198] sm:$0xf] %v2327
      %2360 = vst [vmem:[#allocation2 + $0x1bc] sm:$0xf] %v2328
      %2361 = vst [vmem:[#allocation2 + $0x1e0] sm:$0xf] %v2329
      %2362 = vst [vmem:[#allocation2 + $0x204] sm:$0xf] %v2330
      %2363 = vst [vmem:[#allocation2 + $0x228] sm:$0xf] %v2331
      %2364 = vst [vmem:[#allocation2 + $0x24c] sm:$0xf] %v2332
      %2365 = vst [vmem:[#allocation2 + $0x270] sm:$0xf] %v2333
      %2366 = vst [vmem:[#allocation2 + $0x294] sm:$0xf] %v2334
      %2367 = vst [vmem:[#allocation2 + $0x2b8] sm:$0xf] %v2335
      %2368 = vst [vmem:[#allocation2 + $0x2dc] sm:$0xf] %v2336
      %2369 = vst [vmem:[#allocation2 + $0x300] sm:$0xf] %v2337
      %2370 = vst [vmem:[#allocation2 + $0x324] sm:$0xf] %v2338
      %2371 = vst [vmem:[#allocation2 + $0x348] sm:$0xf] %v2339
      %2372 = vst [vmem:[#allocation2 + $0x36c] sm:$0xf] %v2340
      %2373 = vst [vmem:[#allocation2 + $0x390] sm:$0xf] %v2341
      %2374 = vst [vmem:[#allocation2 + $0x3b4] sm:$0xf] %v2342
      %2375 = vst [vmem:[#allocation2 + $0x3d8] sm:$0xf] %v2343
      %2376 = vst [vmem:[#allocation2 + $0x3fc] sm:$0xf] %v2344
      %2377 = vst [vmem:[#allocation2 + $0x420] sm:$0xf] %v2345
      %2378 = vst [vmem:[#allocation2 + $0x444] sm:$0xf] %v2346
      %2379 = vst [vmem:[#allocation2 + $0x468] sm:$0xf] %v2347
      %v2380 = vpack.c.bf16 %v713, %v713
      %v2381 = vpack.c.bf16 %v714, %v714
      %v2382 = vpack.c.bf16 %v715, %v715
      %v2383 = vpack.c.bf16 %v716, %v716
      %v2384 = vpack.c.bf16 %v717, %v717
      %v2385 = vpack.c.bf16 %v718, %v718
      %v2386 = vpack.c.bf16 %v719, %v719
      %v2387 = vpack.c.bf16 %v720, %v720
      %v2388 = vpack.c.bf16 %v721, %v721
      %v2389 = vpack.c.bf16 %v722, %v722
      %v2390 = vpack.c.bf16 %v723, %v723
      %v2391 = vpack.c.bf16 %v724, %v724
      %v2392 = vpack.c.bf16 %v725, %v725
      %v2393 = vpack.c.bf16 %v726, %v726
      %v2394 = vpack.c.bf16 %v727, %v727
      %v2395 = vpack.c.bf16 %v728, %v728
      %v2396 = vpack.c.bf16 %v729, %v729
      %v2397 = vpack.c.bf16 %v730, %v730
      %v2398 = vpack.c.bf16 %v731, %v731
      %v2399 = vpack.c.bf16 %v732, %v732
      %v2400 = vpack.c.bf16 %v733, %v733
      %v2401 = vpack.c.bf16 %v734, %v734
      %v2402 = vpack.c.bf16 %v735, %v735
      %v2403 = vpack.c.bf16 %v736, %v736
      %v2404 = vpack.c.bf16 %v737, %v737
      %v2405 = vpack.c.bf16 %v738, %v738
      %v2406 = vpack.c.bf16 %v739, %v739
      %v2407 = vpack.c.bf16 %v740, %v740
      %v2408 = vpack.c.bf16 %v741, %v741
      %v2409 = vpack.c.bf16 %v742, %v742
      %v2410 = vpack.c.bf16 %v743, %v743
      %v2411 = vpack.c.bf16 %v744, %v744
      %2412 = vst [vmem:[#allocation2 + $0x10] sm:$0xf] %v2380
      %2413 = vst [vmem:[#allocation2 + $0x34] sm:$0xf] %v2381
      %2414 = vst [vmem:[#allocation2 + $0x58] sm:$0xf] %v2382
      %2415 = vst [vmem:[#allocation2 + $0x7c] sm:$0xf] %v2383
      %2416 = vst [vmem:[#allocation2 + $0xa0] sm:$0xf] %v2384
      %2417 = vst [vmem:[#allocation2 + $0xc4] sm:$0xf] %v2385
      %2418 = vst [vmem:[#allocation2 + $0xe8] sm:$0xf] %v2386
      %2419 = vst [vmem:[#allocation2 + $0x10c] sm:$0xf] %v2387
      %2420 = vst [vmem:[#allocation2 + $0x130] sm:$0xf] %v2388
      %2421 = vst [vmem:[#allocation2 + $0x154] sm:$0xf] %v2389
      %2422 = vst [vmem:[#allocation2 + $0x178] sm:$0xf] %v2390
      %2423 = vst [vmem:[#allocation2 + $0x19c] sm:$0xf] %v2391
      %2424 = vst [vmem:[#allocation2 + $0x1c0] sm:$0xf] %v2392
      %2425 = vst [vmem:[#allocation2 + $0x1e4] sm:$0xf] %v2393
      %2426 = vst [vmem:[#allocation2 + $0x208] sm:$0xf] %v2394
      %2427 = vst [vmem:[#allocation2 + $0x22c] sm:$0xf] %v2395
      %2428 = vst [vmem:[#allocation2 + $0x250] sm:$0xf] %v2396
      %2429 = vst [vmem:[#allocation2 + $0x274] sm:$0xf] %v2397
      %2430 = vst [vmem:[#allocation2 + $0x298] sm:$0xf] %v2398
      %2431 = vst [vmem:[#allocation2 + $0x2bc] sm:$0xf] %v2399
      %2432 = vst [vmem:[#allocation2 + $0x2e0] sm:$0xf] %v2400
      %2433 = vst [vmem:[#allocation2 + $0x304] sm:$0xf] %v2401
      %2434 = vst [vmem:[#allocation2 + $0x328] sm:$0xf] %v2402
      %2435 = vst [vmem:[#allocation2 + $0x34c] sm:$0xf] %v2403
      %2436 = vst [vmem:[#allocation2 + $0x370] sm:$0xf] %v2404
      %2437 = vst [vmem:[#allocation2 + $0x394] sm:$0xf] %v2405
      %2438 = vst [vmem:[#allocation2 + $0x3b8] sm:$0xf] %v2406
      %2439 = vst [vmem:[#allocation2 + $0x3dc] sm:$0xf] %v2407
      %2440 = vst [vmem:[#allocation2 + $0x400] sm:$0xf] %v2408
      %2441 = vst [vmem:[#allocation2 + $0x424] sm:$0xf] %v2409
      %2442 = vst [vmem:[#allocation2 + $0x448] sm:$0xf] %v2410
      %2443 = vst [vmem:[#allocation2 + $0x46c] sm:$0xf] %v2411
      %vm2444 = vmand %vm2124, %vm1772
      %vm2445 = vmand %vm2125, %vm1773
      %vm2446 = vmand %vm2126, %vm1774
      %vm2447 = vmand %vm2127, %vm1775
      %vm2448 = vmand %vm2128, %vm1776
      %vm2449 = vmand %vm2129, %vm1777
      %vm2450 = vmand %vm2130, %vm1778
      %vm2451 = vmand %vm2131, %vm1779
      %vm2452 = vmand %vm2132, %vm1780
      %vm2453 = vmand %vm2133, %vm1781
      %vm2454 = vmand %vm2134, %vm1782
      %vm2455 = vmand %vm2135, %vm1783
      %vm2456 = vmand %vm2136, %vm1784
      %vm2457 = vmand %vm2137, %vm1785
      %vm2458 = vmand %vm2138, %vm1786
      %vm2459 = vmand %vm2139, %vm1787
      %vm2460 = vmand %vm2140, %vm1788
      %vm2461 = vmand %vm2141, %vm1789
      %vm2462 = vmand %vm2142, %vm1790
      %vm2463 = vmand %vm2143, %vm1791
      %vm2464 = vmand %vm2144, %vm1792
      %vm2465 = vmand %vm2145, %vm1793
      %vm2466 = vmand %vm2146, %vm1794
      %vm2467 = vmand %vm2147, %vm1795
      %vm2468 = vmand %vm2148, %vm1796
      %vm2469 = vmand %vm2149, %vm1797
      %vm2470 = vmand %vm2150, %vm1798
      %vm2471 = vmand %vm2151, %vm1799
      %vm2472 = vmand %vm2152, %vm1800
      %vm2473 = vmand %vm2153, %vm1801
      %vm2474 = vmand %vm2154, %vm1802
      %vm2475 = vmand %vm2155, %vm1803
      %vm2476 = vmand %vm2444, %vm1836
      %vm2477 = vmand %vm2445, %vm1837
      %vm2478 = vmand %vm2446, %vm1838
      %vm2479 = vmand %vm2447, %vm1839
      %vm2480 = vmand %vm2448, %vm1840
      %vm2481 = vmand %vm2449, %vm1841
      %vm2482 = vmand %vm2450, %vm1842
      %vm2483 = vmand %vm2451, %vm1843
      %vm2484 = vmand %vm2452, %vm1844
      %vm2485 = vmand %vm2453, %vm1845
      %vm2486 = vmand %vm2454, %vm1846
      %vm2487 = vmand %vm2455, %vm1847
      %vm2488 = vmand %vm2456, %vm1848
      %vm2489 = vmand %vm2457, %vm1849
      %vm2490 = vmand %vm2458, %vm1850
      %vm2491 = vmand %vm2459, %vm1851
      %vm2492 = vmand %vm2460, %vm1852
      %vm2493 = vmand %vm2461, %vm1853
      %vm2494 = vmand %vm2462, %vm1854
      %vm2495 = vmand %vm2463, %vm1855
      %vm2496 = vmand %vm2464, %vm1856
      %vm2497 = vmand %vm2465, %vm1857
      %vm2498 = vmand %vm2466, %vm1858
      %vm2499 = vmand %vm2467, %vm1859
      %vm2500 = vmand %vm2468, %vm1860
      %vm2501 = vmand %vm2469, %vm1861
      %vm2502 = vmand %vm2470, %vm1862
      %vm2503 = vmand %vm2471, %vm1863
      %vm2504 = vmand %vm2472, %vm1864
      %vm2505 = vmand %vm2473, %vm1865
      %vm2506 = vmand %vm2474, %vm1866
      %vm2507 = vmand %vm2475, %vm1867
      %v2508 = vsel %vm2476, 1, 0
      %v2509 = vsel %vm2477, 1, 0
      %v2510 = vsel %vm2478, 1, 0
      %v2511 = vsel %vm2479, 1, 0
      %v2512 = vsel %vm2480, 1, 0
      %v2513 = vsel %vm2481, 1, 0
      %v2514 = vsel %vm2482, 1, 0
      %v2515 = vsel %vm2483, 1, 0
      %v2516 = vsel %vm2484, 1, 0
      %v2517 = vsel %vm2485, 1, 0
      %v2518 = vsel %vm2486, 1, 0
      %v2519 = vsel %vm2487, 1, 0
      %v2520 = vsel %vm2488, 1, 0
      %v2521 = vsel %vm2489, 1, 0
      %v2522 = vsel %vm2490, 1, 0
      %v2523 = vsel %vm2491, 1, 0
      %v2524 = vsel %vm2492, 1, 0
      %v2525 = vsel %vm2493, 1, 0
      %v2526 = vsel %vm2494, 1, 0
      %v2527 = vsel %vm2495, 1, 0
      %v2528 = vsel %vm2496, 1, 0
      %v2529 = vsel %vm2497, 1, 0
      %v2530 = vsel %vm2498, 1, 0
      %v2531 = vsel %vm2499, 1, 0
      %v2532 = vsel %vm2500, 1, 0
      %v2533 = vsel %vm2501, 1, 0
      %v2534 = vsel %vm2502, 1, 0
      %v2535 = vsel %vm2503, 1, 0
      %v2536 = vsel %vm2504, 1, 0
      %v2537 = vsel %vm2505, 1, 0
      %v2538 = vsel %vm2506, 1, 0
      %v2539 = vsel %vm2507, 1, 0
      %vm2540 = vcmp.eq.s32.totalorder %v2508, 1
      %vm2541 = vcmp.eq.s32.totalorder %v2509, 1
      %vm2542 = vcmp.eq.s32.totalorder %v2510, 1
      %vm2543 = vcmp.eq.s32.totalorder %v2511, 1
      %vm2544 = vcmp.eq.s32.totalorder %v2512, 1
      %vm2545 = vcmp.eq.s32.totalorder %v2513, 1
      %vm2546 = vcmp.eq.s32.totalorder %v2514, 1
      %vm2547 = vcmp.eq.s32.totalorder %v2515, 1
      %vm2548 = vcmp.eq.s32.totalorder %v2516, 1
      %vm2549 = vcmp.eq.s32.totalorder %v2517, 1
      %vm2550 = vcmp.eq.s32.totalorder %v2518, 1
      %vm2551 = vcmp.eq.s32.totalorder %v2519, 1
      %vm2552 = vcmp.eq.s32.totalorder %v2520, 1
      %vm2553 = vcmp.eq.s32.totalorder %v2521, 1
      %vm2554 = vcmp.eq.s32.totalorder %v2522, 1
      %vm2555 = vcmp.eq.s32.totalorder %v2523, 1
      %vm2556 = vcmp.eq.s32.totalorder %v2524, 1
      %vm2557 = vcmp.eq.s32.totalorder %v2525, 1
      %vm2558 = vcmp.eq.s32.totalorder %v2526, 1
      %vm2559 = vcmp.eq.s32.totalorder %v2527, 1
      %vm2560 = vcmp.eq.s32.totalorder %v2528, 1
      %vm2561 = vcmp.eq.s32.totalorder %v2529, 1
      %vm2562 = vcmp.eq.s32.totalorder %v2530, 1
      %vm2563 = vcmp.eq.s32.totalorder %v2531, 1
      %vm2564 = vcmp.eq.s32.totalorder %v2532, 1
      %vm2565 = vcmp.eq.s32.totalorder %v2533, 1
      %vm2566 = vcmp.eq.s32.totalorder %v2534, 1
      %vm2567 = vcmp.eq.s32.totalorder %v2535, 1
      %vm2568 = vcmp.eq.s32.totalorder %v2536, 1
      %vm2569 = vcmp.eq.s32.totalorder %v2537, 1
      %vm2570 = vcmp.eq.s32.totalorder %v2538, 1
      %vm2571 = vcmp.eq.s32.totalorder %v2539, 1
      %v2572 = vsel %vm2540, %v1738, 0.0
      %v2573 = vsel %vm2541, %v1737, 0.0
      %v2574 = vsel %vm2542, %v1736, 0.0
      %v2575 = vsel %vm2543, %v1735, 0.0
      %v2576 = vsel %vm2544, %v1734, 0.0
      %v2577 = vsel %vm2545, %v1733, 0.0
      %v2578 = vsel %vm2546, %v1732, 0.0
      %v2579 = vsel %vm2547, %v1731, 0.0
      %v2580 = vsel %vm2548, %v1730, 0.0
      %v2581 = vsel %vm2549, %v1729, 0.0
      %v2582 = vsel %vm2550, %v1728, 0.0
      %v2583 = vsel %vm2551, %v1727, 0.0
      %v2584 = vsel %vm2552, %v1726, 0.0
      %v2585 = vsel %vm2553, %v1725, 0.0
      %v2586 = vsel %vm2554, %v1724, 0.0
      %v2587 = vsel %vm2555, %v1723, 0.0
      %v2588 = vsel %vm2556, %v1722, 0.0
      %v2589 = vsel %vm2557, %v1721, 0.0
      %v2590 = vsel %vm2558, %v1720, 0.0
      %v2591 = vsel %vm2559, %v1719, 0.0
      %v2592 = vsel %vm2560, %v1718, 0.0
      %v2593 = vsel %vm2561, %v1717, 0.0
      %v2594 = vsel %vm2562, %v1716, 0.0
      %v2595 = vsel %vm2563, %v1715, 0.0
      %v2596 = vsel %vm2564, %v1714, 0.0
      %v2597 = vsel %vm2565, %v1713, 0.0
      %v2598 = vsel %vm2566, %v1712, 0.0
      %v2599 = vsel %vm2567, %v1711, 0.0
      %v2600 = vsel %vm2568, %v1710, 0.0
      %v2601 = vsel %vm2569, %v1709, 0.0
      %v2602 = vsel %vm2570, %v1708, 0.0
      %v2603 = vsel %vm2571, %v1739, 0.0
      %v2604 = vpack.c.bf16 %v2572, %v2572
      %v2605 = vpack.c.bf16 %v2573, %v2573
      %v2606 = vpack.c.bf16 %v2574, %v2574
      %v2607 = vpack.c.bf16 %v2575, %v2575
      %v2608 = vpack.c.bf16 %v2576, %v2576
      %v2609 = vpack.c.bf16 %v2577, %v2577
      %v2610 = vpack.c.bf16 %v2578, %v2578
      %v2611 = vpack.c.bf16 %v2579, %v2579
      %v2612 = vpack.c.bf16 %v2580, %v2580
      %v2613 = vpack.c.bf16 %v2581, %v2581
      %v2614 = vpack.c.bf16 %v2582, %v2582
      %v2615 = vpack.c.bf16 %v2583, %v2583
      %v2616 = vpack.c.bf16 %v2584, %v2584
      %v2617 = vpack.c.bf16 %v2585, %v2585
      %v2618 = vpack.c.bf16 %v2586, %v2586
      %v2619 = vpack.c.bf16 %v2587, %v2587
      %v2620 = vpack.c.bf16 %v2588, %v2588
      %v2621 = vpack.c.bf16 %v2589, %v2589
      %v2622 = vpack.c.bf16 %v2590, %v2590
      %v2623 = vpack.c.bf16 %v2591, %v2591
      %v2624 = vpack.c.bf16 %v2592, %v2592
      %v2625 = vpack.c.bf16 %v2593, %v2593
      %v2626 = vpack.c.bf16 %v2594, %v2594
      %v2627 = vpack.c.bf16 %v2595, %v2595
      %v2628 = vpack.c.bf16 %v2596, %v2596
      %v2629 = vpack.c.bf16 %v2597, %v2597
      %v2630 = vpack.c.bf16 %v2598, %v2598
      %v2631 = vpack.c.bf16 %v2599, %v2599
      %v2632 = vpack.c.bf16 %v2600, %v2600
      %v2633 = vpack.c.bf16 %v2601, %v2601
      %v2634 = vpack.c.bf16 %v2602, %v2602
      %v2635 = vpack.c.bf16 %v2603, %v2603
      %2636 = vst [vmem:[#allocation2 + $0x14] sm:$0xf] %v2604
      %2637 = vst [vmem:[#allocation2 + $0x38] sm:$0xf] %v2605
      %2638 = vst [vmem:[#allocation2 + $0x5c] sm:$0xf] %v2606
      %2639 = vst [vmem:[#allocation2 + $0x80] sm:$0xf] %v2607
      %2640 = vst [vmem:[#allocation2 + $0xa4] sm:$0xf] %v2608
      %2641 = vst [vmem:[#allocation2 + $0xc8] sm:$0xf] %v2609
      %2642 = vst [vmem:[#allocation2 + $0xec] sm:$0xf] %v2610
      %2643 = vst [vmem:[#allocation2 + $0x110] sm:$0xf] %v2611
      %2644 = vst [vmem:[#allocation2 + $0x134] sm:$0xf] %v2612
      %2645 = vst [vmem:[#allocation2 + $0x158] sm:$0xf] %v2613
      %2646 = vst [vmem:[#allocation2 + $0x17c] sm:$0xf] %v2614
      %2647 = vst [vmem:[#allocation2 + $0x1a0] sm:$0xf] %v2615
      %2648 = vst [vmem:[#allocation2 + $0x1c4] sm:$0xf] %v2616
      %2649 = vst [vmem:[#allocation2 + $0x1e8] sm:$0xf] %v2617
      %2650 = vst [vmem:[#allocation2 + $0x20c] sm:$0xf] %v2618
      %2651 = vst [vmem:[#allocation2 + $0x230] sm:$0xf] %v2619
      %2652 = vst [vmem:[#allocation2 + $0x254] sm:$0xf] %v2620
      %2653 = vst [vmem:[#allocation2 + $0x278] sm:$0xf] %v2621
      %2654 = vst [vmem:[#allocation2 + $0x29c] sm:$0xf] %v2622
      %2655 = vst [vmem:[#allocation2 + $0x2c0] sm:$0xf] %v2623
      %2656 = vst [vmem:[#allocation2 + $0x2e4] sm:$0xf] %v2624
      %2657 = vst [vmem:[#allocation2 + $0x308] sm:$0xf] %v2625
      %2658 = vst [vmem:[#allocation2 + $0x32c] sm:$0xf] %v2626
      %2659 = vst [vmem:[#allocation2 + $0x350] sm:$0xf] %v2627
      %2660 = vst [vmem:[#allocation2 + $0x374] sm:$0xf] %v2628
      %2661 = vst [vmem:[#allocation2 + $0x398] sm:$0xf] %v2629
      %2662 = vst [vmem:[#allocation2 + $0x3bc] sm:$0xf] %v2630
      %2663 = vst [vmem:[#allocation2 + $0x3e0] sm:$0xf] %v2631
      %2664 = vst [vmem:[#allocation2 + $0x404] sm:$0xf] %v2632
      %2665 = vst [vmem:[#allocation2 + $0x428] sm:$0xf] %v2633
      %2666 = vst [vmem:[#allocation2 + $0x44c] sm:$0xf] %v2634
      %2667 = vst [vmem:[#allocation2 + $0x470] sm:$0xf] %v2635
      %v2668 = vadd.s32 %v810, 1
      %v2669 = vadd.s32 %v811, 1
      %v2670 = vadd.s32 %v812, 1
      %v2671 = vadd.s32 %v813, 1
      %v2672 = vadd.s32 %v814, 1
      %v2673 = vadd.s32 %v815, 1
      %v2674 = vadd.s32 %v816, 1
      %v2675 = vadd.s32 %v817, 1
      %v2676 = vadd.s32 %v818, 1
      %v2677 = vadd.s32 %v819, 1
      %v2678 = vadd.s32 %v820, 1
      %v2679 = vadd.s32 %v821, 1
      %v2680 = vadd.s32 %v822, 1
      %v2681 = vadd.s32 %v823, 1
      %v2682 = vadd.s32 %v824, 1
      %v2683 = vadd.s32 %v825, 1
      %v2684 = vadd.s32 %v826, 1
      %v2685 = vadd.s32 %v827, 1
      %v2686 = vadd.s32 %v828, 1
      %v2687 = vadd.s32 %v829, 1
      %v2688 = vadd.s32 %v830, 1
      %v2689 = vadd.s32 %v831, 1
      %v2690 = vadd.s32 %v832, 1
      %v2691 = vadd.s32 %v833, 1
      %v2692 = vadd.s32 %v834, 1
      %v2693 = vadd.s32 %v835, 1
      %v2694 = vadd.s32 %v836, 1
      %v2695 = vadd.s32 %v837, 1
      %v2696 = vadd.s32 %v838, 1
      %v2697 = vadd.s32 %v839, 1
      %v2698 = vadd.s32 %v840, 1
      %v2699 = vadd.s32 %v841, 1
      %vm2700 = vcmp.ge.s32.totalorder %v2668, 0
      %vm2701 = vcmp.ge.s32.totalorder %v2669, 0
      %vm2702 = vcmp.ge.s32.totalorder %v2670, 0
      %vm2703 = vcmp.ge.s32.totalorder %v2671, 0
      %vm2704 = vcmp.ge.s32.totalorder %v2672, 0
      %vm2705 = vcmp.ge.s32.totalorder %v2673, 0
      %vm2706 = vcmp.ge.s32.totalorder %v2674, 0
      %vm2707 = vcmp.ge.s32.totalorder %v2675, 0
      %vm2708 = vcmp.ge.s32.totalorder %v2676, 0
      %vm2709 = vcmp.ge.s32.totalorder %v2677, 0
      %vm2710 = vcmp.ge.s32.totalorder %v2678, 0
      %vm2711 = vcmp.ge.s32.totalorder %v2679, 0
      %vm2712 = vcmp.ge.s32.totalorder %v2680, 0
      %vm2713 = vcmp.ge.s32.totalorder %v2681, 0
      %vm2714 = vcmp.ge.s32.totalorder %v2682, 0
      %vm2715 = vcmp.ge.s32.totalorder %v2683, 0
      %vm2716 = vcmp.ge.s32.totalorder %v2684, 0
      %vm2717 = vcmp.ge.s32.totalorder %v2685, 0
      %vm2718 = vcmp.ge.s32.totalorder %v2686, 0
      %vm2719 = vcmp.ge.s32.totalorder %v2687, 0
      %vm2720 = vcmp.ge.s32.totalorder %v2688, 0
      %vm2721 = vcmp.ge.s32.totalorder %v2689, 0
      %vm2722 = vcmp.ge.s32.totalorder %v2690, 0
      %vm2723 = vcmp.ge.s32.totalorder %v2691, 0
      %vm2724 = vcmp.ge.s32.totalorder %v2692, 0
      %vm2725 = vcmp.ge.s32.totalorder %v2693, 0
      %vm2726 = vcmp.ge.s32.totalorder %v2694, 0
      %vm2727 = vcmp.ge.s32.totalorder %v2695, 0
      %vm2728 = vcmp.ge.s32.totalorder %v2696, 0
      %vm2729 = vcmp.ge.s32.totalorder %v2697, 0
      %vm2730 = vcmp.ge.s32.totalorder %v2698, 0
      %vm2731 = vcmp.ge.s32.totalorder %v2699, 0
      %vm2732 = vcmp.lt.s32.totalorder %v2668, 16
      %vm2733 = vcmp.lt.s32.totalorder %v2669, 16
      %vm2734 = vcmp.lt.s32.totalorder %v2670, 16
      %vm2735 = vcmp.lt.s32.totalorder %v2671, 16
      %vm2736 = vcmp.lt.s32.totalorder %v2672, 16
      %vm2737 = vcmp.lt.s32.totalorder %v2673, 16
      %vm2738 = vcmp.lt.s32.totalorder %v2674, 16
      %vm2739 = vcmp.lt.s32.totalorder %v2675, 16
      %vm2740 = vcmp.lt.s32.totalorder %v2676, 16
      %vm2741 = vcmp.lt.s32.totalorder %v2677, 16
      %vm2742 = vcmp.lt.s32.totalorder %v2678, 16
      %vm2743 = vcmp.lt.s32.totalorder %v2679, 16
      %vm2744 = vcmp.lt.s32.totalorder %v2680, 16
      %vm2745 = vcmp.lt.s32.totalorder %v2681, 16
      %vm2746 = vcmp.lt.s32.totalorder %v2682, 16
      %vm2747 = vcmp.lt.s32.totalorder %v2683, 16
      %vm2748 = vcmp.lt.s32.totalorder %v2684, 16
      %vm2749 = vcmp.lt.s32.totalorder %v2685, 16
      %vm2750 = vcmp.lt.s32.totalorder %v2686, 16
      %vm2751 = vcmp.lt.s32.totalorder %v2687, 16
      %vm2752 = vcmp.lt.s32.totalorder %v2688, 16
      %vm2753 = vcmp.lt.s32.totalorder %v2689, 16
      %vm2754 = vcmp.lt.s32.totalorder %v2690, 16
      %vm2755 = vcmp.lt.s32.totalorder %v2691, 16
      %vm2756 = vcmp.lt.s32.totalorder %v2692, 16
      %vm2757 = vcmp.lt.s32.totalorder %v2693, 16
      %vm2758 = vcmp.lt.s32.totalorder %v2694, 16
      %vm2759 = vcmp.lt.s32.totalorder %v2695, 16
      %vm2760 = vcmp.lt.s32.totalorder %v2696, 16
      %vm2761 = vcmp.lt.s32.totalorder %v2697, 16
      %vm2762 = vcmp.lt.s32.totalorder %v2698, 16
      %vm2763 = vcmp.lt.s32.totalorder %v2699, 16
      %vm2764 = vmand %vm2700, %vm2732
      %vm2765 = vmand %vm2701, %vm2733
      %vm2766 = vmand %vm2702, %vm2734
      %vm2767 = vmand %vm2703, %vm2735
      %vm2768 = vmand %vm2704, %vm2736
      %vm2769 = vmand %vm2705, %vm2737
      %vm2770 = vmand %vm2706, %vm2738
      %vm2771 = vmand %vm2707, %vm2739
      %vm2772 = vmand %vm2708, %vm2740
      %vm2773 = vmand %vm2709, %vm2741
      %vm2774 = vmand %vm2710, %vm2742
      %vm2775 = vmand %vm2711, %vm2743
      %vm2776 = vmand %vm2712, %vm2744
      %vm2777 = vmand %vm2713, %vm2745
      %vm2778 = vmand %vm2714, %vm2746
      %vm2779 = vmand %vm2715, %vm2747
      %vm2780 = vmand %vm2716, %vm2748
      %vm2781 = vmand %vm2717, %vm2749
      %vm2782 = vmand %vm2718, %vm2750
      %vm2783 = vmand %vm2719, %vm2751
      %vm2784 = vmand %vm2720, %vm2752
      %vm2785 = vmand %vm2721, %vm2753
      %vm2786 = vmand %vm2722, %vm2754
      %vm2787 = vmand %vm2723, %vm2755
      %vm2788 = vmand %vm2724, %vm2756
      %vm2789 = vmand %vm2725, %vm2757
      %vm2790 = vmand %vm2726, %vm2758
      %vm2791 = vmand %vm2727, %vm2759
      %vm2792 = vmand %vm2728, %vm2760
      %vm2793 = vmand %vm2729, %vm2761
      %vm2794 = vmand %vm2730, %vm2762
      %vm2795 = vmand %vm2731, %vm2763
      %vm2796 = vmand %vm2764, %vm1099
      %vm2797 = vmand %vm2765, %vm1100
      %vm2798 = vmand %vm2766, %vm1101
      %vm2799 = vmand %vm2767, %vm1102
      %vm2800 = vmand %vm2768, %vm1103
      %vm2801 = vmand %vm2769, %vm1104
      %vm2802 = vmand %vm2770, %vm1105
      %vm2803 = vmand %vm2771, %vm1106
      %vm2804 = vmand %vm2772, %vm1107
      %vm2805 = vmand %vm2773, %vm1108
      %vm2806 = vmand %vm2774, %vm1109
      %vm2807 = vmand %vm2775, %vm1110
      %vm2808 = vmand %vm2776, %vm1111
      %vm2809 = vmand %vm2777, %vm1112
      %vm2810 = vmand %vm2778, %vm1113
      %vm2811 = vmand %vm2779, %vm1114
      %vm2812 = vmand %vm2780, %vm1115
      %vm2813 = vmand %vm2781, %vm1116
      %vm2814 = vmand %vm2782, %vm1117
      %vm2815 = vmand %vm2783, %vm1118
      %vm2816 = vmand %vm2784, %vm1119
      %vm2817 = vmand %vm2785, %vm1120
      %vm2818 = vmand %vm2786, %vm1121
      %vm2819 = vmand %vm2787, %vm1122
      %vm2820 = vmand %vm2788, %vm1123
      %vm2821 = vmand %vm2789, %vm1124
      %vm2822 = vmand %vm2790, %vm1125
      %vm2823 = vmand %vm2791, %vm1126
      %vm2824 = vmand %vm2792, %vm1127
      %vm2825 = vmand %vm2793, %vm1128
      %vm2826 = vmand %vm2794, %vm1129
      %vm2827 = vmand %vm2795, %vm1130
      %vm2828 = vmand %vm2796, %vm1163
      %vm2829 = vmand %vm2797, %vm1164
      %vm2830 = vmand %vm2798, %vm1165
      %vm2831 = vmand %vm2799, %vm1166
      %vm2832 = vmand %vm2800, %vm1167
      %vm2833 = vmand %vm2801, %vm1168
      %vm2834 = vmand %vm2802, %vm1169
      %vm2835 = vmand %vm2803, %vm1170
      %vm2836 = vmand %vm2804, %vm1171
      %vm2837 = vmand %vm2805, %vm1172
      %vm2838 = vmand %vm2806, %vm1173
      %vm2839 = vmand %vm2807, %vm1174
      %vm2840 = vmand %vm2808, %vm1175
      %vm2841 = vmand %vm2809, %vm1176
      %vm2842 = vmand %vm2810, %vm1177
      %vm2843 = vmand %vm2811, %vm1178
      %vm2844 = vmand %vm2812, %vm1179
      %vm2845 = vmand %vm2813, %vm1180
      %vm2846 = vmand %vm2814, %vm1181
      %vm2847 = vmand %vm2815, %vm1182
      %vm2848 = vmand %vm2816, %vm1183
      %vm2849 = vmand %vm2817, %vm1184
      %vm2850 = vmand %vm2818, %vm1185
      %vm2851 = vmand %vm2819, %vm1186
      %vm2852 = vmand %vm2820, %vm1187
      %vm2853 = vmand %vm2821, %vm1188
      %vm2854 = vmand %vm2822, %vm1189
      %vm2855 = vmand %vm2823, %vm1190
      %vm2856 = vmand %vm2824, %vm1191
      %vm2857 = vmand %vm2825, %vm1192
      %vm2858 = vmand %vm2826, %vm1193
      %vm2859 = vmand %vm2827, %vm1194
      %v2860 = vsel %vm2828, 1, 0
      %v2861 = vsel %vm2829, 1, 0
      %v2862 = vsel %vm2830, 1, 0
      %v2863 = vsel %vm2831, 1, 0
      %v2864 = vsel %vm2832, 1, 0
      %v2865 = vsel %vm2833, 1, 0
      %v2866 = vsel %vm2834, 1, 0
      %v2867 = vsel %vm2835, 1, 0
      %v2868 = vsel %vm2836, 1, 0
      %v2869 = vsel %vm2837, 1, 0
      %v2870 = vsel %vm2838, 1, 0
      %v2871 = vsel %vm2839, 1, 0
      %v2872 = vsel %vm2840, 1, 0
      %v2873 = vsel %vm2841, 1, 0
      %v2874 = vsel %vm2842, 1, 0
      %v2875 = vsel %vm2843, 1, 0
      %v2876 = vsel %vm2844, 1, 0
      %v2877 = vsel %vm2845, 1, 0
      %v2878 = vsel %vm2846, 1, 0
      %v2879 = vsel %vm2847, 1, 0
      %v2880 = vsel %vm2848, 1, 0
      %v2881 = vsel %vm2849, 1, 0
      %v2882 = vsel %vm2850, 1, 0
      %v2883 = vsel %vm2851, 1, 0
      %v2884 = vsel %vm2852, 1, 0
      %v2885 = vsel %vm2853, 1, 0
      %v2886 = vsel %vm2854, 1, 0
      %v2887 = vsel %vm2855, 1, 0
      %v2888 = vsel %vm2856, 1, 0
      %v2889 = vsel %vm2857, 1, 0
      %v2890 = vsel %vm2858, 1, 0
      %v2891 = vsel %vm2859, 1, 0
      %vm2892 = vcmp.eq.s32.totalorder %v2860, 1
      %vm2893 = vcmp.eq.s32.totalorder %v2861, 1
      %vm2894 = vcmp.eq.s32.totalorder %v2862, 1
      %vm2895 = vcmp.eq.s32.totalorder %v2863, 1
      %vm2896 = vcmp.eq.s32.totalorder %v2864, 1
      %vm2897 = vcmp.eq.s32.totalorder %v2865, 1
      %vm2898 = vcmp.eq.s32.totalorder %v2866, 1
      %vm2899 = vcmp.eq.s32.totalorder %v2867, 1
      %vm2900 = vcmp.eq.s32.totalorder %v2868, 1
      %vm2901 = vcmp.eq.s32.totalorder %v2869, 1
      %vm2902 = vcmp.eq.s32.totalorder %v2870, 1
      %vm2903 = vcmp.eq.s32.totalorder %v2871, 1
      %vm2904 = vcmp.eq.s32.totalorder %v2872, 1
      %vm2905 = vcmp.eq.s32.totalorder %v2873, 1
      %vm2906 = vcmp.eq.s32.totalorder %v2874, 1
      %vm2907 = vcmp.eq.s32.totalorder %v2875, 1
      %vm2908 = vcmp.eq.s32.totalorder %v2876, 1
      %vm2909 = vcmp.eq.s32.totalorder %v2877, 1
      %vm2910 = vcmp.eq.s32.totalorder %v2878, 1
      %vm2911 = vcmp.eq.s32.totalorder %v2879, 1
      %vm2912 = vcmp.eq.s32.totalorder %v2880, 1
      %vm2913 = vcmp.eq.s32.totalorder %v2881, 1
      %vm2914 = vcmp.eq.s32.totalorder %v2882, 1
      %vm2915 = vcmp.eq.s32.totalorder %v2883, 1
      %vm2916 = vcmp.eq.s32.totalorder %v2884, 1
      %vm2917 = vcmp.eq.s32.totalorder %v2885, 1
      %vm2918 = vcmp.eq.s32.totalorder %v2886, 1
      %vm2919 = vcmp.eq.s32.totalorder %v2887, 1
      %vm2920 = vcmp.eq.s32.totalorder %v2888, 1
      %vm2921 = vcmp.eq.s32.totalorder %v2889, 1
      %vm2922 = vcmp.eq.s32.totalorder %v2890, 1
      %vm2923 = vcmp.eq.s32.totalorder %v2891, 1
      %v2924 = vsel %vm2892, %v936, 0.0
      %v2925 = vsel %vm2893, %v935, 0.0
      %v2926 = vsel %vm2894, %v934, 0.0
      %v2927 = vsel %vm2895, %v933, 0.0
      %v2928 = vsel %vm2896, %v932, 0.0
      %v2929 = vsel %vm2897, %v931, 0.0
      %v2930 = vsel %vm2898, %v930, 0.0
      %v2931 = vsel %vm2899, %v929, 0.0
      %v2932 = vsel %vm2900, %v928, 0.0
      %v2933 = vsel %vm2901, %v927, 0.0
      %v2934 = vsel %vm2902, %v926, 0.0
      %v2935 = vsel %vm2903, %v925, 0.0
      %v2936 = vsel %vm2904, %v924, 0.0
      %v2937 = vsel %vm2905, %v923, 0.0
      %v2938 = vsel %vm2906, %v922, 0.0
      %v2939 = vsel %vm2907, %v921, 0.0
      %v2940 = vsel %vm2908, %v920, 0.0
      %v2941 = vsel %vm2909, %v919, 0.0
      %v2942 = vsel %vm2910, %v918, 0.0
      %v2943 = vsel %vm2911, %v917, 0.0
      %v2944 = vsel %vm2912, %v916, 0.0
      %v2945 = vsel %vm2913, %v915, 0.0
      %v2946 = vsel %vm2914, %v914, 0.0
      %v2947 = vsel %vm2915, %v913, 0.0
      %v2948 = vsel %vm2916, %v912, 0.0
      %v2949 = vsel %vm2917, %v911, 0.0
      %v2950 = vsel %vm2918, %v910, 0.0
      %v2951 = vsel %vm2919, %v909, 0.0
      %v2952 = vsel %vm2920, %v908, 0.0
      %v2953 = vsel %vm2921, %v907, 0.0
      %v2954 = vsel %vm2922, %v938, 0.0
      %v2955 = vsel %vm2923, %v937, 0.0
      %v2956 = vpack.c.bf16 %v2924, %v2924
      %v2957 = vpack.c.bf16 %v2925, %v2925
      %v2958 = vpack.c.bf16 %v2926, %v2926
      %v2959 = vpack.c.bf16 %v2927, %v2927
      %v2960 = vpack.c.bf16 %v2928, %v2928
      %v2961 = vpack.c.bf16 %v2929, %v2929
      %v2962 = vpack.c.bf16 %v2930, %v2930
      %v2963 = vpack.c.bf16 %v2931, %v2931
      %v2964 = vpack.c.bf16 %v2932, %v2932
      %v2965 = vpack.c.bf16 %v2933, %v2933
      %v2966 = vpack.c.bf16 %v2934, %v2934
      %v2967 = vpack.c.bf16 %v2935, %v2935
      %v2968 = vpack.c.bf16 %v2936, %v2936
      %v2969 = vpack.c.bf16 %v2937, %v2937
      %v2970 = vpack.c.bf16 %v2938, %v2938
      %v2971 = vpack.c.bf16 %v2939, %v2939
      %v2972 = vpack.c.bf16 %v2940, %v2940
      %v2973 = vpack.c.bf16 %v2941, %v2941
      %v2974 = vpack.c.bf16 %v2942, %v2942
      %v2975 = vpack.c.bf16 %v2943, %v2943
      %v2976 = vpack.c.bf16 %v2944, %v2944
      %v2977 = vpack.c.bf16 %v2945, %v2945
      %v2978 = vpack.c.bf16 %v2946, %v2946
      %v2979 = vpack.c.bf16 %v2947, %v2947
      %v2980 = vpack.c.bf16 %v2948, %v2948
      %v2981 = vpack.c.bf16 %v2949, %v2949
      %v2982 = vpack.c.bf16 %v2950, %v2950
      %v2983 = vpack.c.bf16 %v2951, %v2951
      %v2984 = vpack.c.bf16 %v2952, %v2952
      %v2985 = vpack.c.bf16 %v2953, %v2953
      %v2986 = vpack.c.bf16 %v2954, %v2954
      %v2987 = vpack.c.bf16 %v2955, %v2955
      %2988 = vst [vmem:[#allocation2 + $0x18] sm:$0xf] %v2956
      %2989 = vst [vmem:[#allocation2 + $0x3c] sm:$0xf] %v2957
      %2990 = vst [vmem:[#allocation2 + $0x60] sm:$0xf] %v2958
      %2991 = vst [vmem:[#allocation2 + $0x84] sm:$0xf] %v2959
      %2992 = vst [vmem:[#allocation2 + $0xa8] sm:$0xf] %v2960
      %2993 = vst [vmem:[#allocation2 + $0xcc] sm:$0xf] %v2961
      %2994 = vst [vmem:[#allocation2 + $0xf0] sm:$0xf] %v2962
      %2995 = vst [vmem:[#allocation2 + $0x114] sm:$0xf] %v2963
      %2996 = vst [vmem:[#allocation2 + $0x138] sm:$0xf] %v2964
      %2997 = vst [vmem:[#allocation2 + $0x15c] sm:$0xf] %v2965
      %2998 = vst [vmem:[#allocation2 + $0x180] sm:$0xf] %v2966
      %2999 = vst [vmem:[#allocation2 + $0x1a4] sm:$0xf] %v2967
      %3000 = vst [vmem:[#allocation2 + $0x1c8] sm:$0xf] %v2968
      %3001 = vst [vmem:[#allocation2 + $0x1ec] sm:$0xf] %v2969
      %3002 = vst [vmem:[#allocation2 + $0x210] sm:$0xf] %v2970
      %3003 = vst [vmem:[#allocation2 + $0x234] sm:$0xf] %v2971
      %3004 = vst [vmem:[#allocation2 + $0x258] sm:$0xf] %v2972
      %3005 = vst [vmem:[#allocation2 + $0x27c] sm:$0xf] %v2973
      %3006 = vst [vmem:[#allocation2 + $0x2a0] sm:$0xf] %v2974
      %3007 = vst [vmem:[#allocation2 + $0x2c4] sm:$0xf] %v2975
      %3008 = vst [vmem:[#allocation2 + $0x2e8] sm:$0xf] %v2976
      %3009 = vst [vmem:[#allocation2 + $0x30c] sm:$0xf] %v2977
      %3010 = vst [vmem:[#allocation2 + $0x330] sm:$0xf] %v2978
      %3011 = vst [vmem:[#allocation2 + $0x354] sm:$0xf] %v2979
      %3012 = vst [vmem:[#allocation2 + $0x378] sm:$0xf] %v2980
      %3013 = vst [vmem:[#allocation2 + $0x39c] sm:$0xf] %v2981
      %3014 = vst [vmem:[#allocation2 + $0x3c0] sm:$0xf] %v2982
      %3015 = vst [vmem:[#allocation2 + $0x3e4] sm:$0xf] %v2983
      %3016 = vst [vmem:[#allocation2 + $0x408] sm:$0xf] %v2984
      %3017 = vst [vmem:[#allocation2 + $0x42c] sm:$0xf] %v2985
      %3018 = vst [vmem:[#allocation2 + $0x450] sm:$0xf] %v2986
      %3019 = vst [vmem:[#allocation2 + $0x474] sm:$0xf] %v2987
      %vm3020 = vmand %vm2764, %vm1387
      %vm3021 = vmand %vm2765, %vm1388
      %vm3022 = vmand %vm2766, %vm1389
      %vm3023 = vmand %vm2767, %vm1390
      %vm3024 = vmand %vm2768, %vm1391
      %vm3025 = vmand %vm2769, %vm1392
      %vm3026 = vmand %vm2770, %vm1393
      %vm3027 = vmand %vm2771, %vm1394
      %vm3028 = vmand %vm2772, %vm1395
      %vm3029 = vmand %vm2773, %vm1396
      %vm3030 = vmand %vm2774, %vm1397
      %vm3031 = vmand %vm2775, %vm1398
      %vm3032 = vmand %vm2776, %vm1399
      %vm3033 = vmand %vm2777, %vm1400
      %vm3034 = vmand %vm2778, %vm1401
      %vm3035 = vmand %vm2779, %vm1402
      %vm3036 = vmand %vm2780, %vm1403
      %vm3037 = vmand %vm2781, %vm1404
      %vm3038 = vmand %vm2782, %vm1405
      %vm3039 = vmand %vm2783, %vm1406
      %vm3040 = vmand %vm2784, %vm1407
      %vm3041 = vmand %vm2785, %vm1408
      %vm3042 = vmand %vm2786, %vm1409
      %vm3043 = vmand %vm2787, %vm1410
      %vm3044 = vmand %vm2788, %vm1411
      %vm3045 = vmand %vm2789, %vm1412
      %vm3046 = vmand %vm2790, %vm1413
      %vm3047 = vmand %vm2791, %vm1414
      %vm3048 = vmand %vm2792, %vm1415
      %vm3049 = vmand %vm2793, %vm1416
      %vm3050 = vmand %vm2794, %vm1417
      %vm3051 = vmand %vm2795, %vm1418
      %vm3052 = vmand %vm3020, %vm1451
      %vm3053 = vmand %vm3021, %vm1452
      %vm3054 = vmand %vm3022, %vm1453
      %vm3055 = vmand %vm3023, %vm1454
      %vm3056 = vmand %vm3024, %vm1455
      %vm3057 = vmand %vm3025, %vm1456
      %vm3058 = vmand %vm3026, %vm1457
      %vm3059 = vmand %vm3027, %vm1458
      %vm3060 = vmand %vm3028, %vm1459
      %vm3061 = vmand %vm3029, %vm1460
      %vm3062 = vmand %vm3030, %vm1461
      %vm3063 = vmand %vm3031, %vm1462
      %vm3064 = vmand %vm3032, %vm1463
      %vm3065 = vmand %vm3033, %vm1464
      %vm3066 = vmand %vm3034, %vm1465
      %vm3067 = vmand %vm3035, %vm1466
      %vm3068 = vmand %vm3036, %vm1467
      %vm3069 = vmand %vm3037, %vm1468
      %vm3070 = vmand %vm3038, %vm1469
      %vm3071 = vmand %vm3039, %vm1470
      %vm3072 = vmand %vm3040, %vm1471
      %vm3073 = vmand %vm3041, %vm1472
      %vm3074 = vmand %vm3042, %vm1473
      %vm3075 = vmand %vm3043, %vm1474
      %vm3076 = vmand %vm3044, %vm1475
      %vm3077 = vmand %vm3045, %vm1476
      %vm3078 = vmand %vm3046, %vm1477
      %vm3079 = vmand %vm3047, %vm1478
      %vm3080 = vmand %vm3048, %vm1479
      %vm3081 = vmand %vm3049, %vm1480
      %vm3082 = vmand %vm3050, %vm1481
      %vm3083 = vmand %vm3051, %vm1482
      %v3084 = vsel %vm3052, 1, 0
      %v3085 = vsel %vm3053, 1, 0
      %v3086 = vsel %vm3054, 1, 0
      %v3087 = vsel %vm3055, 1, 0
      %v3088 = vsel %vm3056, 1, 0
      %v3089 = vsel %vm3057, 1, 0
      %v3090 = vsel %vm3058, 1, 0
      %v3091 = vsel %vm3059, 1, 0
      %v3092 = vsel %vm3060, 1, 0
      %v3093 = vsel %vm3061, 1, 0
      %v3094 = vsel %vm3062, 1, 0
      %v3095 = vsel %vm3063, 1, 0
      %v3096 = vsel %vm3064, 1, 0
      %v3097 = vsel %vm3065, 1, 0
      %v3098 = vsel %vm3066, 1, 0
      %v3099 = vsel %vm3067, 1, 0
      %v3100 = vsel %vm3068, 1, 0
      %v3101 = vsel %vm3069, 1, 0
      %v3102 = vsel %vm3070, 1, 0
      %v3103 = vsel %vm3071, 1, 0
      %v3104 = vsel %vm3072, 1, 0
      %v3105 = vsel %vm3073, 1, 0
      %v3106 = vsel %vm3074, 1, 0
      %v3107 = vsel %vm3075, 1, 0
      %v3108 = vsel %vm3076, 1, 0
      %v3109 = vsel %vm3077, 1, 0
      %v3110 = vsel %vm3078, 1, 0
      %v3111 = vsel %vm3079, 1, 0
      %v3112 = vsel %vm3080, 1, 0
      %v3113 = vsel %vm3081, 1, 0
      %v3114 = vsel %vm3082, 1, 0
      %v3115 = vsel %vm3083, 1, 0
      %vm3116 = vcmp.eq.s32.totalorder %v3084, 1
      %vm3117 = vcmp.eq.s32.totalorder %v3085, 1
      %vm3118 = vcmp.eq.s32.totalorder %v3086, 1
      %vm3119 = vcmp.eq.s32.totalorder %v3087, 1
      %vm3120 = vcmp.eq.s32.totalorder %v3088, 1
      %vm3121 = vcmp.eq.s32.totalorder %v3089, 1
      %vm3122 = vcmp.eq.s32.totalorder %v3090, 1
      %vm3123 = vcmp.eq.s32.totalorder %v3091, 1
      %vm3124 = vcmp.eq.s32.totalorder %v3092, 1
      %vm3125 = vcmp.eq.s32.totalorder %v3093, 1
      %vm3126 = vcmp.eq.s32.totalorder %v3094, 1
      %vm3127 = vcmp.eq.s32.totalorder %v3095, 1
      %vm3128 = vcmp.eq.s32.totalorder %v3096, 1
      %vm3129 = vcmp.eq.s32.totalorder %v3097, 1
      %vm3130 = vcmp.eq.s32.totalorder %v3098, 1
      %vm3131 = vcmp.eq.s32.totalorder %v3099, 1
      %vm3132 = vcmp.eq.s32.totalorder %v3100, 1
      %vm3133 = vcmp.eq.s32.totalorder %v3101, 1
      %vm3134 = vcmp.eq.s32.totalorder %v3102, 1
      %vm3135 = vcmp.eq.s32.totalorder %v3103, 1
      %vm3136 = vcmp.eq.s32.totalorder %v3104, 1
      %vm3137 = vcmp.eq.s32.totalorder %v3105, 1
      %vm3138 = vcmp.eq.s32.totalorder %v3106, 1
      %vm3139 = vcmp.eq.s32.totalorder %v3107, 1
      %vm3140 = vcmp.eq.s32.totalorder %v3108, 1
      %vm3141 = vcmp.eq.s32.totalorder %v3109, 1
      %vm3142 = vcmp.eq.s32.totalorder %v3110, 1
      %vm3143 = vcmp.eq.s32.totalorder %v3111, 1
      %vm3144 = vcmp.eq.s32.totalorder %v3112, 1
      %vm3145 = vcmp.eq.s32.totalorder %v3113, 1
      %vm3146 = vcmp.eq.s32.totalorder %v3114, 1
      %vm3147 = vcmp.eq.s32.totalorder %v3115, 1
      %v3148 = vsel %vm3116, %v715, 0.0
      %v3149 = vsel %vm3117, %v716, 0.0
      %v3150 = vsel %vm3118, %v717, 0.0
      %v3151 = vsel %vm3119, %v718, 0.0
      %v3152 = vsel %vm3120, %v719, 0.0
      %v3153 = vsel %vm3121, %v720, 0.0
      %v3154 = vsel %vm3122, %v721, 0.0
      %v3155 = vsel %vm3123, %v722, 0.0
      %v3156 = vsel %vm3124, %v723, 0.0
      %v3157 = vsel %vm3125, %v724, 0.0
      %v3158 = vsel %vm3126, %v725, 0.0
      %v3159 = vsel %vm3127, %v726, 0.0
      %v3160 = vsel %vm3128, %v727, 0.0
      %v3161 = vsel %vm3129, %v728, 0.0
      %v3162 = vsel %vm3130, %v729, 0.0
      %v3163 = vsel %vm3131, %v730, 0.0
      %v3164 = vsel %vm3132, %v731, 0.0
      %v3165 = vsel %vm3133, %v732, 0.0
      %v3166 = vsel %vm3134, %v733, 0.0
      %v3167 = vsel %vm3135, %v734, 0.0
      %v3168 = vsel %vm3136, %v735, 0.0
      %v3169 = vsel %vm3137, %v736, 0.0
      %v3170 = vsel %vm3138, %v737, 0.0
      %v3171 = vsel %vm3139, %v738, 0.0
      %v3172 = vsel %vm3140, %v739, 0.0
      %v3173 = vsel %vm3141, %v740, 0.0
      %v3174 = vsel %vm3142, %v741, 0.0
      %v3175 = vsel %vm3143, %v742, 0.0
      %v3176 = vsel %vm3144, %v743, 0.0
      %v3177 = vsel %vm3145, %v744, 0.0
      %v3178 = vsel %vm3146, %v713, 0.0
      %v3179 = vsel %vm3147, %v714, 0.0
      %v3180 = vpack.c.bf16 %v3148, %v3148
      %v3181 = vpack.c.bf16 %v3149, %v3149
      %v3182 = vpack.c.bf16 %v3150, %v3150
      %v3183 = vpack.c.bf16 %v3151, %v3151
      %v3184 = vpack.c.bf16 %v3152, %v3152
      %v3185 = vpack.c.bf16 %v3153, %v3153
      %v3186 = vpack.c.bf16 %v3154, %v3154
      %v3187 = vpack.c.bf16 %v3155, %v3155
      %v3188 = vpack.c.bf16 %v3156, %v3156
      %v3189 = vpack.c.bf16 %v3157, %v3157
      %v3190 = vpack.c.bf16 %v3158, %v3158
      %v3191 = vpack.c.bf16 %v3159, %v3159
      %v3192 = vpack.c.bf16 %v3160, %v3160
      %v3193 = vpack.c.bf16 %v3161, %v3161
      %v3194 = vpack.c.bf16 %v3162, %v3162
      %v3195 = vpack.c.bf16 %v3163, %v3163
      %v3196 = vpack.c.bf16 %v3164, %v3164
      %v3197 = vpack.c.bf16 %v3165, %v3165
      %v3198 = vpack.c.bf16 %v3166, %v3166
      %v3199 = vpack.c.bf16 %v3167, %v3167
      %v3200 = vpack.c.bf16 %v3168, %v3168
      %v3201 = vpack.c.bf16 %v3169, %v3169
      %v3202 = vpack.c.bf16 %v3170, %v3170
      %v3203 = vpack.c.bf16 %v3171, %v3171
      %v3204 = vpack.c.bf16 %v3172, %v3172
      %v3205 = vpack.c.bf16 %v3173, %v3173
      %v3206 = vpack.c.bf16 %v3174, %v3174
      %v3207 = vpack.c.bf16 %v3175, %v3175
      %v3208 = vpack.c.bf16 %v3176, %v3176
      %v3209 = vpack.c.bf16 %v3177, %v3177
      %v3210 = vpack.c.bf16 %v3178, %v3178
      %v3211 = vpack.c.bf16 %v3179, %v3179
      %3212 = vst [vmem:[#allocation2 + $0x1c] sm:$0xf] %v3180
      %3213 = vst [vmem:[#allocation2 + $0x40] sm:$0xf] %v3181
      %3214 = vst [vmem:[#allocation2 + $0x64] sm:$0xf] %v3182
      %3215 = vst [vmem:[#allocation2 + $0x88] sm:$0xf] %v3183
      %3216 = vst [vmem:[#allocation2 + $0xac] sm:$0xf] %v3184
      %3217 = vst [vmem:[#allocation2 + $0xd0] sm:$0xf] %v3185
      %3218 = vst [vmem:[#allocation2 + $0xf4] sm:$0xf] %v3186
      %3219 = vst [vmem:[#allocation2 + $0x118] sm:$0xf] %v3187
      %3220 = vst [vmem:[#allocation2 + $0x13c] sm:$0xf] %v3188
      %3221 = vst [vmem:[#allocation2 + $0x160] sm:$0xf] %v3189
      %3222 = vst [vmem:[#allocation2 + $0x184] sm:$0xf] %v3190
      %3223 = vst [vmem:[#allocation2 + $0x1a8] sm:$0xf] %v3191
      %3224 = vst [vmem:[#allocation2 + $0x1cc] sm:$0xf] %v3192
      %3225 = vst [vmem:[#allocation2 + $0x1f0] sm:$0xf] %v3193
      %3226 = vst [vmem:[#allocation2 + $0x214] sm:$0xf] %v3194
      %3227 = vst [vmem:[#allocation2 + $0x238] sm:$0xf] %v3195
      %3228 = vst [vmem:[#allocation2 + $0x25c] sm:$0xf] %v3196
      %3229 = vst [vmem:[#allocation2 + $0x280] sm:$0xf] %v3197
      %3230 = vst [vmem:[#allocation2 + $0x2a4] sm:$0xf] %v3198
      %3231 = vst [vmem:[#allocation2 + $0x2c8] sm:$0xf] %v3199
      %3232 = vst [vmem:[#allocation2 + $0x2ec] sm:$0xf] %v3200
      %3233 = vst [vmem:[#allocation2 + $0x310] sm:$0xf] %v3201
      %3234 = vst [vmem:[#allocation2 + $0x334] sm:$0xf] %v3202
      %3235 = vst [vmem:[#allocation2 + $0x358] sm:$0xf] %v3203
      %3236 = vst [vmem:[#allocation2 + $0x37c] sm:$0xf] %v3204
      %3237 = vst [vmem:[#allocation2 + $0x3a0] sm:$0xf] %v3205
      %3238 = vst [vmem:[#allocation2 + $0x3c4] sm:$0xf] %v3206
      %3239 = vst [vmem:[#allocation2 + $0x3e8] sm:$0xf] %v3207
      %3240 = vst [vmem:[#allocation2 + $0x40c] sm:$0xf] %v3208
      %3241 = vst [vmem:[#allocation2 + $0x430] sm:$0xf] %v3209
      %3242 = vst [vmem:[#allocation2 + $0x454] sm:$0xf] %v3210
      %3243 = vst [vmem:[#allocation2 + $0x478] sm:$0xf] %v3211
      %vm3244 = vmand %vm2764, %vm1772
      %vm3245 = vmand %vm2765, %vm1773
      %vm3246 = vmand %vm2766, %vm1774
      %vm3247 = vmand %vm2767, %vm1775
      %vm3248 = vmand %vm2768, %vm1776
      %vm3249 = vmand %vm2769, %vm1777
      %vm3250 = vmand %vm2770, %vm1778
      %vm3251 = vmand %vm2771, %vm1779
      %vm3252 = vmand %vm2772, %vm1780
      %vm3253 = vmand %vm2773, %vm1781
      %vm3254 = vmand %vm2774, %vm1782
      %vm3255 = vmand %vm2775, %vm1783
      %vm3256 = vmand %vm2776, %vm1784
      %vm3257 = vmand %vm2777, %vm1785
      %vm3258 = vmand %vm2778, %vm1786
      %vm3259 = vmand %vm2779, %vm1787
      %vm3260 = vmand %vm2780, %vm1788
      %vm3261 = vmand %vm2781, %vm1789
      %vm3262 = vmand %vm2782, %vm1790
      %vm3263 = vmand %vm2783, %vm1791
      %vm3264 = vmand %vm2784, %vm1792
      %vm3265 = vmand %vm2785, %vm1793
      %vm3266 = vmand %vm2786, %vm1794
      %vm3267 = vmand %vm2787, %vm1795
      %vm3268 = vmand %vm2788, %vm1796
      %vm3269 = vmand %vm2789, %vm1797
      %vm3270 = vmand %vm2790, %vm1798
      %vm3271 = vmand %vm2791, %vm1799
      %vm3272 = vmand %vm2792, %vm1800
      %vm3273 = vmand %vm2793, %vm1801
      %vm3274 = vmand %vm2794, %vm1802
      %vm3275 = vmand %vm2795, %vm1803
      %vm3276 = vmand %vm3244, %vm1836
      %vm3277 = vmand %vm3245, %vm1837
      %vm3278 = vmand %vm3246, %vm1838
      %vm3279 = vmand %vm3247, %vm1839
      %vm3280 = vmand %vm3248, %vm1840
      %vm3281 = vmand %vm3249, %vm1841
      %vm3282 = vmand %vm3250, %vm1842
      %vm3283 = vmand %vm3251, %vm1843
      %vm3284 = vmand %vm3252, %vm1844
      %vm3285 = vmand %vm3253, %vm1845
      %vm3286 = vmand %vm3254, %vm1846
      %vm3287 = vmand %vm3255, %vm1847
      %vm3288 = vmand %vm3256, %vm1848
      %vm3289 = vmand %vm3257, %vm1849
      %vm3290 = vmand %vm3258, %vm1850
      %vm3291 = vmand %vm3259, %vm1851
      %vm3292 = vmand %vm3260, %vm1852
      %vm3293 = vmand %vm3261, %vm1853
      %vm3294 = vmand %vm3262, %vm1854
      %vm3295 = vmand %vm3263, %vm1855
      %vm3296 = vmand %vm3264, %vm1856
      %vm3297 = vmand %vm3265, %vm1857
      %vm3298 = vmand %vm3266, %vm1858
      %vm3299 = vmand %vm3267, %vm1859
      %vm3300 = vmand %vm3268, %vm1860
      %vm3301 = vmand %vm3269, %vm1861
      %vm3302 = vmand %vm3270, %vm1862
      %vm3303 = vmand %vm3271, %vm1863
      %vm3304 = vmand %vm3272, %vm1864
      %vm3305 = vmand %vm3273, %vm1865
      %vm3306 = vmand %vm3274, %vm1866
      %vm3307 = vmand %vm3275, %vm1867
      %v3308 = vsel %vm3276, 1, 0
      %v3309 = vsel %vm3277, 1, 0
      %v3310 = vsel %vm3278, 1, 0
      %v3311 = vsel %vm3279, 1, 0
      %v3312 = vsel %vm3280, 1, 0
      %v3313 = vsel %vm3281, 1, 0
      %v3314 = vsel %vm3282, 1, 0
      %v3315 = vsel %vm3283, 1, 0
      %v3316 = vsel %vm3284, 1, 0
      %v3317 = vsel %vm3285, 1, 0
      %v3318 = vsel %vm3286, 1, 0
      %v3319 = vsel %vm3287, 1, 0
      %v3320 = vsel %vm3288, 1, 0
      %v3321 = vsel %vm3289, 1, 0
      %v3322 = vsel %vm3290, 1, 0
      %v3323 = vsel %vm3291, 1, 0
      %v3324 = vsel %vm3292, 1, 0
      %v3325 = vsel %vm3293, 1, 0
      %v3326 = vsel %vm3294, 1, 0
      %v3327 = vsel %vm3295, 1, 0
      %v3328 = vsel %vm3296, 1, 0
      %v3329 = vsel %vm3297, 1, 0
      %v3330 = vsel %vm3298, 1, 0
      %v3331 = vsel %vm3299, 1, 0
      %v3332 = vsel %vm3300, 1, 0
      %v3333 = vsel %vm3301, 1, 0
      %v3334 = vsel %vm3302, 1, 0
      %v3335 = vsel %vm3303, 1, 0
      %v3336 = vsel %vm3304, 1, 0
      %v3337 = vsel %vm3305, 1, 0
      %v3338 = vsel %vm3306, 1, 0
      %v3339 = vsel %vm3307, 1, 0
      %vm3340 = vcmp.eq.s32.totalorder %v3308, 1
      %vm3341 = vcmp.eq.s32.totalorder %v3309, 1
      %vm3342 = vcmp.eq.s32.totalorder %v3310, 1
      %vm3343 = vcmp.eq.s32.totalorder %v3311, 1
      %vm3344 = vcmp.eq.s32.totalorder %v3312, 1
      %vm3345 = vcmp.eq.s32.totalorder %v3313, 1
      %vm3346 = vcmp.eq.s32.totalorder %v3314, 1
      %vm3347 = vcmp.eq.s32.totalorder %v3315, 1
      %vm3348 = vcmp.eq.s32.totalorder %v3316, 1
      %vm3349 = vcmp.eq.s32.totalorder %v3317, 1
      %vm3350 = vcmp.eq.s32.totalorder %v3318, 1
      %vm3351 = vcmp.eq.s32.totalorder %v3319, 1
      %vm3352 = vcmp.eq.s32.totalorder %v3320, 1
      %vm3353 = vcmp.eq.s32.totalorder %v3321, 1
      %vm3354 = vcmp.eq.s32.totalorder %v3322, 1
      %vm3355 = vcmp.eq.s32.totalorder %v3323, 1
      %vm3356 = vcmp.eq.s32.totalorder %v3324, 1
      %vm3357 = vcmp.eq.s32.totalorder %v3325, 1
      %vm3358 = vcmp.eq.s32.totalorder %v3326, 1
      %vm3359 = vcmp.eq.s32.totalorder %v3327, 1
      %vm3360 = vcmp.eq.s32.totalorder %v3328, 1
      %vm3361 = vcmp.eq.s32.totalorder %v3329, 1
      %vm3362 = vcmp.eq.s32.totalorder %v3330, 1
      %vm3363 = vcmp.eq.s32.totalorder %v3331, 1
      %vm3364 = vcmp.eq.s32.totalorder %v3332, 1
      %vm3365 = vcmp.eq.s32.totalorder %v3333, 1
      %vm3366 = vcmp.eq.s32.totalorder %v3334, 1
      %vm3367 = vcmp.eq.s32.totalorder %v3335, 1
      %vm3368 = vcmp.eq.s32.totalorder %v3336, 1
      %vm3369 = vcmp.eq.s32.totalorder %v3337, 1
      %vm3370 = vcmp.eq.s32.totalorder %v3338, 1
      %vm3371 = vcmp.eq.s32.totalorder %v3339, 1
      %v3372 = vsel %vm3340, %v1736, 0.0
      %v3373 = vsel %vm3341, %v1735, 0.0
      %v3374 = vsel %vm3342, %v1734, 0.0
      %v3375 = vsel %vm3343, %v1733, 0.0
      %v3376 = vsel %vm3344, %v1732, 0.0
      %v3377 = vsel %vm3345, %v1731, 0.0
      %v3378 = vsel %vm3346, %v1730, 0.0
      %v3379 = vsel %vm3347, %v1729, 0.0
      %v3380 = vsel %vm3348, %v1728, 0.0
      %v3381 = vsel %vm3349, %v1727, 0.0
      %v3382 = vsel %vm3350, %v1726, 0.0
      %v3383 = vsel %vm3351, %v1725, 0.0
      %v3384 = vsel %vm3352, %v1724, 0.0
      %v3385 = vsel %vm3353, %v1723, 0.0
      %v3386 = vsel %vm3354, %v1722, 0.0
      %v3387 = vsel %vm3355, %v1721, 0.0
      %v3388 = vsel %vm3356, %v1720, 0.0
      %v3389 = vsel %vm3357, %v1719, 0.0
      %v3390 = vsel %vm3358, %v1718, 0.0
      %v3391 = vsel %vm3359, %v1717, 0.0
      %v3392 = vsel %vm3360, %v1716, 0.0
      %v3393 = vsel %vm3361, %v1715, 0.0
      %v3394 = vsel %vm3362, %v1714, 0.0
      %v3395 = vsel %vm3363, %v1713, 0.0
      %v3396 = vsel %vm3364, %v1712, 0.0
      %v3397 = vsel %vm3365, %v1711, 0.0
      %v3398 = vsel %vm3366, %v1710, 0.0
      %v3399 = vsel %vm3367, %v1709, 0.0
      %v3400 = vsel %vm3368, %v1708, 0.0
      %v3401 = vsel %vm3369, %v1739, 0.0
      %v3402 = vsel %vm3370, %v1738, 0.0
      %v3403 = vsel %vm3371, %v1737, 0.0
      %v3404 = vpack.c.bf16 %v3372, %v3372
      %v3405 = vpack.c.bf16 %v3373, %v3373
      %v3406 = vpack.c.bf16 %v3374, %v3374
      %v3407 = vpack.c.bf16 %v3375, %v3375
      %v3408 = vpack.c.bf16 %v3376, %v3376
      %v3409 = vpack.c.bf16 %v3377, %v3377
      %v3410 = vpack.c.bf16 %v3378, %v3378
      %v3411 = vpack.c.bf16 %v3379, %v3379
      %v3412 = vpack.c.bf16 %v3380, %v3380
      %v3413 = vpack.c.bf16 %v3381, %v3381
      %v3414 = vpack.c.bf16 %v3382, %v3382
      %v3415 = vpack.c.bf16 %v3383, %v3383
      %v3416 = vpack.c.bf16 %v3384, %v3384
      %v3417 = vpack.c.bf16 %v3385, %v3385
      %v3418 = vpack.c.bf16 %v3386, %v3386
      %v3419 = vpack.c.bf16 %v3387, %v3387
      %v3420 = vpack.c.bf16 %v3388, %v3388
      %v3421 = vpack.c.bf16 %v3389, %v3389
      %v3422 = vpack.c.bf16 %v3390, %v3390
      %v3423 = vpack.c.bf16 %v3391, %v3391
      %v3424 = vpack.c.bf16 %v3392, %v3392
      %v3425 = vpack.c.bf16 %v3393, %v3393
      %v3426 = vpack.c.bf16 %v3394, %v3394
      %v3427 = vpack.c.bf16 %v3395, %v3395
      %v3428 = vpack.c.bf16 %v3396, %v3396
      %v3429 = vpack.c.bf16 %v3397, %v3397
      %v3430 = vpack.c.bf16 %v3398, %v3398
      %v3431 = vpack.c.bf16 %v3399, %v3399
      %v3432 = vpack.c.bf16 %v3400, %v3400
      %v3433 = vpack.c.bf16 %v3401, %v3401
      %v3434 = vpack.c.bf16 %v3402, %v3402
      %v3435 = vpack.c.bf16 %v3403, %v3403
      %3436 = vst [vmem:[#allocation2 + $0x20] sm:$0xf] %v3404
      %3437 = vst [vmem:[#allocation2 + $0x44] sm:$0xf] %v3405
      %3438 = vst [vmem:[#allocation2 + $0x68] sm:$0xf] %v3406
      %3439 = vst [vmem:[#allocation2 + $0x8c] sm:$0xf] %v3407
      %3440 = vst [vmem:[#allocation2 + $0xb0] sm:$0xf] %v3408
      %3441 = vst [vmem:[#allocation2 + $0xd4] sm:$0xf] %v3409
      %3442 = vst [vmem:[#allocation2 + $0xf8] sm:$0xf] %v3410
      %3443 = vst [vmem:[#allocation2 + $0x11c] sm:$0xf] %v3411
      %3444 = vst [vmem:[#allocation2 + $0x140] sm:$0xf] %v3412
      %3445 = vst [vmem:[#allocation2 + $0x164] sm:$0xf] %v3413
      %3446 = vst [vmem:[#allocation2 + $0x188] sm:$0xf] %v3414
      %3447 = vst [vmem:[#allocation2 + $0x1ac] sm:$0xf] %v3415
      %3448 = vst [vmem:[#allocation2 + $0x1d0] sm:$0xf] %v3416
      %3449 = vst [vmem:[#allocation2 + $0x1f4] sm:$0xf] %v3417
      %3450 = vst [vmem:[#allocation2 + $0x218] sm:$0xf] %v3418
      %3451 = vst [vmem:[#allocation2 + $0x23c] sm:$0xf] %v3419
      %3452 = vst [vmem:[#allocation2 + $0x260] sm:$0xf] %v3420
      %3453 = vst [vmem:[#allocation2 + $0x284] sm:$0xf] %v3421
      %3454 = vst [vmem:[#allocation2 + $0x2a8] sm:$0xf] %v3422
      %3455 = vst [vmem:[#allocation2 + $0x2cc] sm:$0xf] %v3423
      %3456 = vst [vmem:[#allocation2 + $0x2f0] sm:$0xf] %v3424
      %3457 = vst [vmem:[#allocation2 + $0x314] sm:$0xf] %v3425
      %3458 = vst [vmem:[#allocation2 + $0x338] sm:$0xf] %v3426
      %3459 = vst [vmem:[#allocation2 + $0x35c] sm:$0xf] %v3427
      %3460 = vst [vmem:[#allocation2 + $0x380] sm:$0xf] %v3428
      %3461 = vst [vmem:[#allocation2 + $0x3a4] sm:$0xf] %v3429
      %3462 = vst [vmem:[#allocation2 + $0x3c8] sm:$0xf] %v3430
      %3463 = vst [vmem:[#allocation2 + $0x3ec] sm:$0xf] %v3431
      %3464 = vst [vmem:[#allocation2 + $0x410] sm:$0xf] %v3432
      %3465 = vst [vmem:[#allocation2 + $0x434] sm:$0xf] %v3433
      %3466 = vst [vmem:[#allocation2 + $0x458] sm:$0xf] %v3434
      %3467 = vst [vmem:[#allocation2 + $0x47c] sm:$0xf] %v3435
      %v3468 = vld [vmem:[#allocation2] sm:$0xff]
      %v3469 = vld [vmem:[#allocation2 + $0x8] sm:$0xff]
      %v3470 = vld [vmem:[#allocation2 + $0x10] sm:$0xff]
      %v3471 = vld [vmem:[#allocation2 + $0x18] sm:$0xff]
      %v3472 = vld [vmem:[#allocation2 + $0x20] sm:$0xf]
      %v3473 = vld [vmem:[#allocation2 + $0x24] sm:$0xff]
      %v3474 = vld [vmem:[#allocation2 + $0x2c] sm:$0xff]
      %v3475 = vld [vmem:[#allocation2 + $0x34] sm:$0xff]
      %v3476 = vld [vmem:[#allocation2 + $0x3c] sm:$0xff]
      %v3477 = vld [vmem:[#allocation2 + $0x44] sm:$0xf]
      %v3478 = vld [vmem:[#allocation2 + $0x48] sm:$0xff]
      %v3479 = vld [vmem:[#allocation2 + $0x50] sm:$0xff]
      %v3480 = vld [vmem:[#allocation2 + $0x58] sm:$0xff]
      %v3481 = vld [vmem:[#allocation2 + $0x60] sm:$0xff]
      %v3482 = vld [vmem:[#allocation2 + $0x68] sm:$0xf]
      %v3483 = vld [vmem:[#allocation2 + $0x6c] sm:$0xff]
      %v3484 = vld [vmem:[#allocation2 + $0x74] sm:$0xff]
      %v3485 = vld [vmem:[#allocation2 + $0x7c] sm:$0xff]
      %v3486 = vld [vmem:[#allocation2 + $0x84] sm:$0xff]
      %v3487 = vld [vmem:[#allocation2 + $0x8c] sm:$0xf]
      %v3488 = vld [vmem:[#allocation2 + $0x90] sm:$0xff]
      %v3489 = vld [vmem:[#allocation2 + $0x98] sm:$0xff]
      %v3490 = vld [vmem:[#allocation2 + $0xa0] sm:$0xff]
      %v3491 = vld [vmem:[#allocation2 + $0xa8] sm:$0xff]
      %v3492 = vld [vmem:[#allocation2 + $0xb0] sm:$0xf]
      %v3493 = vld [vmem:[#allocation2 + $0xb4] sm:$0xff]
      %v3494 = vld [vmem:[#allocation2 + $0xbc] sm:$0xff]
      %v3495 = vld [vmem:[#allocation2 + $0xc4] sm:$0xff]
      %v3496 = vld [vmem:[#allocation2 + $0xcc] sm:$0xff]
      %v3497 = vld [vmem:[#allocation2 + $0xd4] sm:$0xf]
      %v3498 = vld [vmem:[#allocation2 + $0xd8] sm:$0xff]
      %v3499 = vld [vmem:[#allocation2 + $0xe0] sm:$0xff]
      %v3500 = vld [vmem:[#allocation2 + $0xe8] sm:$0xff]
      %v3501 = vld [vmem:[#allocation2 + $0xf0] sm:$0xff]
      %v3502 = vld [vmem:[#allocation2 + $0xf8] sm:$0xf]
      %v3503 = vld [vmem:[#allocation2 + $0xfc] sm:$0xff]
      %v3504 = vld [vmem:[#allocation2 + $0x104] sm:$0xff]
      %v3505 = vld [vmem:[#allocation2 + $0x10c] sm:$0xff]
      %v3506 = vld [vmem:[#allocation2 + $0x114] sm:$0xff]
      %v3507 = vld [vmem:[#allocation2 + $0x11c] sm:$0xf]
      %v3508 = vld [vmem:[#allocation2 + $0x120] sm:$0xff]
      %v3509 = vld [vmem:[#allocation2 + $0x128] sm:$0xff]
      %v3510 = vld [vmem:[#allocation2 + $0x130] sm:$0xff]
      %v3511 = vld [vmem:[#allocation2 + $0x138] sm:$0xff]
      %v3512 = vld [vmem:[#allocation2 + $0x140] sm:$0xf]
      %v3513 = vld [vmem:[#allocation2 + $0x144] sm:$0xff]
      %v3514 = vld [vmem:[#allocation2 + $0x14c] sm:$0xff]
      %v3515 = vld [vmem:[#allocation2 + $0x154] sm:$0xff]
      %v3516 = vld [vmem:[#allocation2 + $0x15c] sm:$0xff]
      %v3517 = vld [vmem:[#allocation2 + $0x164] sm:$0xf]
      %v3518 = vld [vmem:[#allocation2 + $0x168] sm:$0xff]
      %v3519 = vld [vmem:[#allocation2 + $0x170] sm:$0xff]
      %v3520 = vld [vmem:[#allocation2 + $0x178] sm:$0xff]
      %v3521 = vld [vmem:[#allocation2 + $0x180] sm:$0xff]
      %v3522 = vld [vmem:[#allocation2 + $0x188] sm:$0xf]
      %v3523 = vld [vmem:[#allocation2 + $0x18c] sm:$0xff]
      %v3524 = vld [vmem:[#allocation2 + $0x194] sm:$0xff]
      %v3525 = vld [vmem:[#allocation2 + $0x19c] sm:$0xff]
      %v3526 = vld [vmem:[#allocation2 + $0x1a4] sm:$0xff]
      %v3527 = vld [vmem:[#allocation2 + $0x1ac] sm:$0xf]
      %v3528 = vld [vmem:[#allocation2 + $0x1b0] sm:$0xff]
      %v3529 = vld [vmem:[#allocation2 + $0x1b8] sm:$0xff]
      %v3530 = vld [vmem:[#allocation2 + $0x1c0] sm:$0xff]
      %v3531 = vld [vmem:[#allocation2 + $0x1c8] sm:$0xff]
      %v3532 = vld [vmem:[#allocation2 + $0x1d0] sm:$0xf]
      %v3533 = vld [vmem:[#allocation2 + $0x1d4] sm:$0xff]
      %v3534 = vld [vmem:[#allocation2 + $0x1dc] sm:$0xff]
      %v3535 = vld [vmem:[#allocation2 + $0x1e4] sm:$0xff]
      %v3536 = vld [vmem:[#allocation2 + $0x1ec] sm:$0xff]
      %v3537 = vld [vmem:[#allocation2 + $0x1f4] sm:$0xf]
      %v3538 = vld [vmem:[#allocation2 + $0x1f8] sm:$0xff]
      %v3539 = vld [vmem:[#allocation2 + $0x200] sm:$0xff]
      %v3540 = vld [vmem:[#allocation2 + $0x208] sm:$0xff]
      %v3541 = vld [vmem:[#allocation2 + $0x210] sm:$0xff]
      %v3542 = vld [vmem:[#allocation2 + $0x218] sm:$0xf]
      %v3543 = vld [vmem:[#allocation2 + $0x21c] sm:$0xff]
      %v3544 = vld [vmem:[#allocation2 + $0x224] sm:$0xff]
      %v3545 = vld [vmem:[#allocation2 + $0x22c] sm:$0xff]
      %v3546 = vld [vmem:[#allocation2 + $0x234] sm:$0xff]
      %v3547 = vld [vmem:[#allocation2 + $0x23c] sm:$0xf]
      %v3548 = vld [vmem:[#allocation2 + $0x240] sm:$0xff]
      %v3549 = vld [vmem:[#allocation2 + $0x248] sm:$0xff]
      %v3550 = vld [vmem:[#allocation2 + $0x250] sm:$0xff]
      %v3551 = vld [vmem:[#allocation2 + $0x258] sm:$0xff]
      %v3552 = vld [vmem:[#allocation2 + $0x260] sm:$0xf]
      %v3553 = vld [vmem:[#allocation2 + $0x264] sm:$0xff]
      %v3554 = vld [vmem:[#allocation2 + $0x26c] sm:$0xff]
      %v3555 = vld [vmem:[#allocation2 + $0x274] sm:$0xff]
      %v3556 = vld [vmem:[#allocation2 + $0x27c] sm:$0xff]
      %v3557 = vld [vmem:[#allocation2 + $0x284] sm:$0xf]
      %v3558 = vld [vmem:[#allocation2 + $0x288] sm:$0xff]
      %v3559 = vld [vmem:[#allocation2 + $0x290] sm:$0xff]
      %v3560 = vld [vmem:[#allocation2 + $0x298] sm:$0xff]
      %v3561 = vld [vmem:[#allocation2 + $0x2a0] sm:$0xff]
      %v3562 = vld [vmem:[#allocation2 + $0x2a8] sm:$0xf]
      %v3563 = vld [vmem:[#allocation2 + $0x2ac] sm:$0xff]
      %v3564 = vld [vmem:[#allocation2 + $0x2b4] sm:$0xff]
      %v3565 = vld [vmem:[#allocation2 + $0x2bc] sm:$0xff]
      %v3566 = vld [vmem:[#allocation2 + $0x2c4] sm:$0xff]
      %v3567 = vld [vmem:[#allocation2 + $0x2cc] sm:$0xf]
      %v3568 = vld [vmem:[#allocation2 + $0x2d0] sm:$0xff]
      %v3569 = vld [vmem:[#allocation2 + $0x2d8] sm:$0xff]
      %v3570 = vld [vmem:[#allocation2 + $0x2e0] sm:$0xff]
      %v3571 = vld [vmem:[#allocation2 + $0x2e8] sm:$0xff]
      %v3572 = vld [vmem:[#allocation2 + $0x2f0] sm:$0xf]
      %v3573 = vld [vmem:[#allocation2 + $0x2f4] sm:$0xff]
      %v3574 = vld [vmem:[#allocation2 + $0x2fc] sm:$0xff]
      %v3575 = vld [vmem:[#allocation2 + $0x304] sm:$0xff]
      %v3576 = vld [vmem:[#allocation2 + $0x30c] sm:$0xff]
      %v3577 = vld [vmem:[#allocation2 + $0x314] sm:$0xf]
      %v3578 = vld [vmem:[#allocation2 + $0x318] sm:$0xff]
      %v3579 = vld [vmem:[#allocation2 + $0x320] sm:$0xff]
      %v3580 = vld [vmem:[#allocation2 + $0x328] sm:$0xff]
      %v3581 = vld [vmem:[#allocation2 + $0x330] sm:$0xff]
      %v3582 = vld [vmem:[#allocation2 + $0x338] sm:$0xf]
      %v3583 = vld [vmem:[#allocation2 + $0x33c] sm:$0xff]
      %v3584 = vld [vmem:[#allocation2 + $0x344] sm:$0xff]
      %v3585 = vld [vmem:[#allocation2 + $0x34c] sm:$0xff]
      %v3586 = vld [vmem:[#allocation2 + $0x354] sm:$0xff]
      %v3587 = vld [vmem:[#allocation2 + $0x35c] sm:$0xf]
      %v3588 = vld [vmem:[#allocation2 + $0x360] sm:$0xff]
      %v3589 = vld [vmem:[#allocation2 + $0x368] sm:$0xff]
      %v3590 = vld [vmem:[#allocation2 + $0x370] sm:$0xff]
      %v3591 = vld [vmem:[#allocation2 + $0x378] sm:$0xff]
      %v3592 = vld [vmem:[#allocation2 + $0x380] sm:$0xf]
      %v3593 = vld [vmem:[#allocation2 + $0x384] sm:$0xff]
      %v3594 = vld [vmem:[#allocation2 + $0x38c] sm:$0xff]
      %v3595 = vld [vmem:[#allocation2 + $0x394] sm:$0xff]
      %v3596 = vld [vmem:[#allocation2 + $0x39c] sm:$0xff]
      %v3597 = vld [vmem:[#allocation2 + $0x3a4] sm:$0xf]
      %v3598 = vld [vmem:[#allocation2 + $0x3a8] sm:$0xff]
      %v3599 = vld [vmem:[#allocation2 + $0x3b0] sm:$0xff]
      %v3600 = vld [vmem:[#allocation2 + $0x3b8] sm:$0xff]
      %v3601 = vld [vmem:[#allocation2 + $0x3c0] sm:$0xff]
      %v3602 = vld [vmem:[#allocation2 + $0x3c8] sm:$0xf]
      %v3603 = vld [vmem:[#allocation2 + $0x3cc] sm:$0xff]
      %v3604 = vld [vmem:[#allocation2 + $0x3d4] sm:$0xff]
      %v3605 = vld [vmem:[#allocation2 + $0x3dc] sm:$0xff]
      %v3606 = vld [vmem:[#allocation2 + $0x3e4] sm:$0xff]
      %v3607 = vld [vmem:[#allocation2 + $0x3ec] sm:$0xf]
      %v3608 = vld [vmem:[#allocation2 + $0x3f0] sm:$0xff]
      %v3609 = vld [vmem:[#allocation2 + $0x3f8] sm:$0xff]
      %v3610 = vld [vmem:[#allocation2 + $0x400] sm:$0xff]
      %v3611 = vld [vmem:[#allocation2 + $0x408] sm:$0xff]
      %v3612 = vld [vmem:[#allocation2 + $0x410] sm:$0xf]
      %v3613 = vld [vmem:[#allocation2 + $0x414] sm:$0xff]
      %v3614 = vld [vmem:[#allocation2 + $0x41c] sm:$0xff]
      %v3615 = vld [vmem:[#allocation2 + $0x424] sm:$0xff]
      %v3616 = vld [vmem:[#allocation2 + $0x42c] sm:$0xff]
      %v3617 = vld [vmem:[#allocation2 + $0x434] sm:$0xf]
      %v3618 = vld [vmem:[#allocation2 + $0x438] sm:$0xff]
      %v3619 = vld [vmem:[#allocation2 + $0x440] sm:$0xff]
      %v3620 = vld [vmem:[#allocation2 + $0x448] sm:$0xff]
      %v3621 = vld [vmem:[#allocation2 + $0x450] sm:$0xff]
      %v3622 = vld [vmem:[#allocation2 + $0x458] sm:$0xf]
      %v3623 = vld [vmem:[#allocation2 + $0x45c] sm:$0xff]
      %v3624 = vld [vmem:[#allocation2 + $0x464] sm:$0xff]
      %v3625 = vld [vmem:[#allocation2 + $0x46c] sm:$0xff]
      %v3626 = vld [vmem:[#allocation2 + $0x474] sm:$0xff]
      %v3627 = vld [vmem:[#allocation2 + $0x47c] sm:$0xf]
      %v3628 = vld [vmem:[%s4] sm:$0xf]
      %v3629 = vld [vmem:[%s4 + $0x4] sm:$0xf]
      %v3630 = vld [vmem:[%s4 + $0x8] sm:$0xf]
      %v3631 = vld [vmem:[%s4 + $0xc] sm:$0xf]
      %v3632 = vld [vmem:[%s4 + $0x10] sm:$0xf]
      %v3633 = vld [vmem:[%s4 + $0x14] sm:$0xf]
      %v3634 = vld [vmem:[%s4 + $0x18] sm:$0xf]
      %v3635 = vld [vmem:[%s4 + $0x1c] sm:$0xf]
      %v3636 = vld [vmem:[%s4 + $0x20] sm:$0xf]
      %v3637 = vld [vmem:[%s4 + $0x24] sm:$0xf]
      %v3638 = vld [vmem:[%s4 + $0x28] sm:$0xf]
      %v3639 = vld [vmem:[%s4 + $0x2c] sm:$0xf]
      %v3640 = vld [vmem:[%s4 + $0x30] sm:$0xf]
      %v3641 = vld [vmem:[%s4 + $0x34] sm:$0xf]
      %v3642 = vld [vmem:[%s4 + $0x38] sm:$0xf]
      %v3643 = vld [vmem:[%s4 + $0x3c] sm:$0xf]
      %v3644 = vld [vmem:[%s4 + $0x40] sm:$0xf]
      %v3645 = vld [vmem:[%s4 + $0x44] sm:$0xf]
      %v3646 = vld [vmem:[%s4 + $0x48] sm:$0xf]
      %v3647 = vld [vmem:[%s4 + $0x4c] sm:$0xf]
      %v3648 = vld [vmem:[%s4 + $0x50] sm:$0xf]
      %v3649 = vld [vmem:[%s4 + $0x54] sm:$0xf]
      %v3650 = vld [vmem:[%s4 + $0x58] sm:$0xf]
      %v3651 = vld [vmem:[%s4 + $0x5c] sm:$0xf]
      %v3652 = vld [vmem:[%s4 + $0x60] sm:$0xf]
      %v3653 = vld [vmem:[%s4 + $0x64] sm:$0xf]
      %v3654 = vld [vmem:[%s4 + $0x68] sm:$0xf]
      %v3655 = vld [vmem:[%s4 + $0x6c] sm:$0xf]
      %v3656 = vld [vmem:[%s4 + $0x70] sm:$0xf]
      %v3657 = vld [vmem:[%s4 + $0x74] sm:$0xf]
      %v3658 = vld [vmem:[%s4 + $0x78] sm:$0xf]
      %v3659 = vld [vmem:[%s4 + $0x7c] sm:$0xf]
      %v3660 = vld [vmem:[%s4 + $0x80] sm:$0xf]
      %v3661 = vld [vmem:[%s4 + $0x84] sm:$0xf]
      %v3662 = vld [vmem:[%s4 + $0x88] sm:$0xf]
      %v3663 = vld [vmem:[%s4 + $0x8c] sm:$0xf]
      %v3664 = vld [vmem:[%s4 + $0x90] sm:$0xf]
      %v3665 = vld [vmem:[%s4 + $0x94] sm:$0xf]
      %v3666 = vld [vmem:[%s4 + $0x98] sm:$0xf]
      %v3667 = vld [vmem:[%s4 + $0x9c] sm:$0xf]
      %v3668 = vld [vmem:[%s4 + $0xa0] sm:$0xf]
      %v3669 = vld [vmem:[%s4 + $0xa4] sm:$0xf]
      %v3670 = vld [vmem:[%s4 + $0xa8] sm:$0xf]
      %v3671 = vld [vmem:[%s4 + $0xac] sm:$0xf]
      %v3672 = vld [vmem:[%s4 + $0xb0] sm:$0xf]
      %v3673 = vld [vmem:[%s4 + $0xb4] sm:$0xf]
      %v3674 = vld [vmem:[%s4 + $0xb8] sm:$0xf]
      %v3675 = vld [vmem:[%s4 + $0xbc] sm:$0xf]
      %v3676 = vld [vmem:[%s4 + $0xc0] sm:$0xf]
      %v3677 = vld [vmem:[%s4 + $0xc4] sm:$0xf]
      %v3678 = vld [vmem:[%s4 + $0xc8] sm:$0xf]
      %v3679 = vld [vmem:[%s4 + $0xcc] sm:$0xf]
      %v3680 = vld [vmem:[%s4 + $0xd0] sm:$0xf]
      %v3681 = vld [vmem:[%s4 + $0xd4] sm:$0xf]
      %v3682 = vld [vmem:[%s4 + $0xd8] sm:$0xf]
      %v3683 = vld [vmem:[%s4 + $0xdc] sm:$0xf]
      %v3684 = vld [vmem:[%s4 + $0xe0] sm:$0xf]
      %v3685 = vld [vmem:[%s4 + $0xe4] sm:$0xf]
      %v3686 = vld [vmem:[%s4 + $0xe8] sm:$0xf]
      %v3687 = vld [vmem:[%s4 + $0xec] sm:$0xf]
      %v3688 = vld [vmem:[%s4 + $0xf0] sm:$0xf]
      %v3689 = vld [vmem:[%s4 + $0xf4] sm:$0xf]
      %v3690 = vld [vmem:[%s4 + $0xf8] sm:$0xf]
      %v3691 = vld [vmem:[%s4 + $0xfc] sm:$0xf]
      %v3692 = vld [vmem:[%s4 + $0x100] sm:$0xf]
      %v3693 = vld [vmem:[%s4 + $0x104] sm:$0xf]
      %v3694 = vld [vmem:[%s4 + $0x108] sm:$0xf]
      %v3695 = vld [vmem:[%s4 + $0x10c] sm:$0xf]
      %v3696 = vld [vmem:[%s4 + $0x110] sm:$0xf]
      %v3697 = vld [vmem:[%s4 + $0x114] sm:$0xf]
      %v3698 = vld [vmem:[%s4 + $0x118] sm:$0xf]
      %v3699 = vld [vmem:[%s4 + $0x11c] sm:$0xf]
      %v3700 = vld [vmem:[%s4 + $0x120] sm:$0xf]
      %v3701 = vld [vmem:[%s4 + $0x124] sm:$0xf]
      %v3702 = vld [vmem:[%s4 + $0x128] sm:$0xf]
      %v3703 = vld [vmem:[%s4 + $0x12c] sm:$0xf]
      %v3704 = vld [vmem:[%s4 + $0x130] sm:$0xf]
      %v3705 = vld [vmem:[%s4 + $0x134] sm:$0xf]
      %v3706 = vld [vmem:[%s4 + $0x138] sm:$0xf]
      %v3707 = vld [vmem:[%s4 + $0x13c] sm:$0xf]
      %v3708 = vld [vmem:[%s4 + $0x140] sm:$0xf]
      %v3709 = vld [vmem:[%s4 + $0x144] sm:$0xf]
      %v3710 = vld [vmem:[%s4 + $0x148] sm:$0xf]
      %v3711 = vld [vmem:[%s4 + $0x14c] sm:$0xf]
      %v3712 = vld [vmem:[%s4 + $0x150] sm:$0xf]
      %v3713 = vld [vmem:[%s4 + $0x154] sm:$0xf]
      %v3714 = vld [vmem:[%s4 + $0x158] sm:$0xf]
      %v3715 = vld [vmem:[%s4 + $0x15c] sm:$0xf]
      %v3716 = vld [vmem:[%s4 + $0x160] sm:$0xf]
      %v3717 = vld [vmem:[%s4 + $0x164] sm:$0xf]
      %v3718 = vld [vmem:[%s4 + $0x168] sm:$0xf]
      %v3719 = vld [vmem:[%s4 + $0x16c] sm:$0xf]
      %v3720 = vld [vmem:[%s4 + $0x170] sm:$0xf]
      %v3721 = vld [vmem:[%s4 + $0x174] sm:$0xf]
      %v3722 = vld [vmem:[%s4 + $0x178] sm:$0xf]
      %v3723 = vld [vmem:[%s4 + $0x17c] sm:$0xf]
      %v3724 = vld [vmem:[%s4 + $0x180] sm:$0xf]
      %v3725 = vld [vmem:[%s4 + $0x184] sm:$0xf]
      %v3726 = vld [vmem:[%s4 + $0x188] sm:$0xf]
      %v3727 = vld [vmem:[%s4 + $0x18c] sm:$0xf]
      %v3728 = vld [vmem:[%s4 + $0x190] sm:$0xf]
      %v3729 = vld [vmem:[%s4 + $0x194] sm:$0xf]
      %v3730 = vld [vmem:[%s4 + $0x198] sm:$0xf]
      %v3731 = vld [vmem:[%s4 + $0x19c] sm:$0xf]
      %v3732 = vld [vmem:[%s4 + $0x1a0] sm:$0xf]
      %v3733 = vld [vmem:[%s4 + $0x1a4] sm:$0xf]
      %v3734 = vld [vmem:[%s4 + $0x1a8] sm:$0xf]
      %v3735 = vld [vmem:[%s4 + $0x1ac] sm:$0xf]
      %v3736 = vld [vmem:[%s4 + $0x1b0] sm:$0xf]
      %v3737 = vld [vmem:[%s4 + $0x1b4] sm:$0xf]
      %v3738 = vld [vmem:[%s4 + $0x1b8] sm:$0xf]
      %v3739 = vld [vmem:[%s4 + $0x1bc] sm:$0xf]
      %v3740 = vld [vmem:[%s4 + $0x1c0] sm:$0xf]
      %v3741 = vld [vmem:[%s4 + $0x1c4] sm:$0xf]
      %v3742 = vld [vmem:[%s4 + $0x1c8] sm:$0xf]
      %v3743 = vld [vmem:[%s4 + $0x1cc] sm:$0xf]
      %v3744 = vld [vmem:[%s4 + $0x1d0] sm:$0xf]
      %v3745 = vld [vmem:[%s4 + $0x1d4] sm:$0xf]
      %v3746 = vld [vmem:[%s4 + $0x1d8] sm:$0xf]
      %v3747 = vld [vmem:[%s4 + $0x1dc] sm:$0xf]
      %v3748 = vld [vmem:[%s4 + $0x1e0] sm:$0xf]
      %v3749 = vld [vmem:[%s4 + $0x1e4] sm:$0xf]
      %v3750 = vld [vmem:[%s4 + $0x1e8] sm:$0xf]
      %v3751 = vld [vmem:[%s4 + $0x1ec] sm:$0xf]
      %v3752 = vld [vmem:[%s4 + $0x1f0] sm:$0xf]
      %v3753 = vld [vmem:[%s4 + $0x1f4] sm:$0xf]
      %v3754 = vld [vmem:[%s4 + $0x1f8] sm:$0xf]
      %v3755 = vld [vmem:[%s4 + $0x1fc] sm:$0xf]
      %v3756 = vld [vmem:[%s4 + $0x200] sm:$0xf]
      %v3757 = vld [vmem:[%s4 + $0x204] sm:$0xf]
      %v3758 = vld [vmem:[%s4 + $0x208] sm:$0xf]
      %v3759 = vld [vmem:[%s4 + $0x20c] sm:$0xf]
      %v3760 = vld [vmem:[%s4 + $0x210] sm:$0xf]
      %v3761 = vld [vmem:[%s4 + $0x214] sm:$0xf]
      %v3762 = vld [vmem:[%s4 + $0x218] sm:$0xf]
      %v3763 = vld [vmem:[%s4 + $0x21c] sm:$0xf]
      %v3764 = vld [vmem:[%s4 + $0x220] sm:$0xf]
      %v3765 = vld [vmem:[%s4 + $0x224] sm:$0xf]
      %v3766 = vld [vmem:[%s4 + $0x228] sm:$0xf]
      %v3767 = vld [vmem:[%s4 + $0x22c] sm:$0xf]
      %v3768 = vld [vmem:[%s4 + $0x230] sm:$0xf]
      %v3769 = vld [vmem:[%s4 + $0x234] sm:$0xf]
      %v3770 = vld [vmem:[%s4 + $0x238] sm:$0xf]
      %v3771 = vld [vmem:[%s4 + $0x23c] sm:$0xf]
      %v3932 = vunpack.c.l.b16 %v3468
      %v3933 = vunpack.c.h.b16 %v3468
      %v3934 = vunpack.c.l.b16 %v3469
      %v3935 = vunpack.c.h.b16 %v3469
      %v3936 = vunpack.c.l.b16 %v3470
      %v3937 = vunpack.c.h.b16 %v3470
      %v3938 = vunpack.c.l.b16 %v3471
      %v3939 = vunpack.c.h.b16 %v3471
      %v3940 = vunpack.c.l.b16 %v3472
      %v3941 = vunpack.c.l.b16 %v3473
      %v3942 = vunpack.c.h.b16 %v3473
      %v3943 = vunpack.c.l.b16 %v3474
      %v3944 = vunpack.c.h.b16 %v3474
      %v3945 = vunpack.c.l.b16 %v3475
      %v3946 = vunpack.c.h.b16 %v3475
      %v3947 = vunpack.c.l.b16 %v3476
      %v3948 = vunpack.c.h.b16 %v3476
      %v3949 = vunpack.c.l.b16 %v3477
      %v3950 = vunpack.c.l.b16 %v3478
      %v3951 = vunpack.c.h.b16 %v3478
      %v3952 = vunpack.c.l.b16 %v3479
      %v3953 = vunpack.c.h.b16 %v3479
      %v3954 = vunpack.c.l.b16 %v3480
      %v3955 = vunpack.c.h.b16 %v3480
      %v3956 = vunpack.c.l.b16 %v3481
      %v3957 = vunpack.c.h.b16 %v3481
      %v3958 = vunpack.c.l.b16 %v3482
      %v3959 = vunpack.c.l.b16 %v3483
      %v3960 = vunpack.c.h.b16 %v3483
      %v3961 = vunpack.c.l.b16 %v3484
      %v3962 = vunpack.c.h.b16 %v3484
      %v3963 = vunpack.c.l.b16 %v3485
      %v3964 = vunpack.c.h.b16 %v3485
      %v3965 = vunpack.c.l.b16 %v3486
      %v3966 = vunpack.c.h.b16 %v3486
      %v3967 = vunpack.c.l.b16 %v3487
      %v3968 = vunpack.c.l.b16 %v3488
      %v3969 = vunpack.c.h.b16 %v3488
      %v3970 = vunpack.c.l.b16 %v3489
      %v3971 = vunpack.c.h.b16 %v3489
      %v3972 = vunpack.c.l.b16 %v3490
      %v3973 = vunpack.c.h.b16 %v3490
      %v3974 = vunpack.c.l.b16 %v3491
      %v3975 = vunpack.c.h.b16 %v3491
      %v3976 = vunpack.c.l.b16 %v3492
      %v3977 = vunpack.c.l.b16 %v3493
      %v3978 = vunpack.c.h.b16 %v3493
      %v3979 = vunpack.c.l.b16 %v3494
      %v3980 = vunpack.c.h.b16 %v3494
      %v3981 = vunpack.c.l.b16 %v3495
      %v3982 = vunpack.c.h.b16 %v3495
      %v3983 = vunpack.c.l.b16 %v3496
      %v3984 = vunpack.c.h.b16 %v3496
      %v3985 = vunpack.c.l.b16 %v3497
      %v3986 = vunpack.c.l.b16 %v3498
      %v3987 = vunpack.c.h.b16 %v3498
      %v3988 = vunpack.c.l.b16 %v3499
      %v3989 = vunpack.c.h.b16 %v3499
      %v3990 = vunpack.c.l.b16 %v3500
      %v3991 = vunpack.c.h.b16 %v3500
      %v3992 = vunpack.c.l.b16 %v3501
      %v3993 = vunpack.c.h.b16 %v3501
      %v3994 = vunpack.c.l.b16 %v3502
      %v3995 = vunpack.c.l.b16 %v3503
      %v3996 = vunpack.c.h.b16 %v3503
      %v3997 = vunpack.c.l.b16 %v3504
      %v3998 = vunpack.c.h.b16 %v3504
      %v3999 = vunpack.c.l.b16 %v3505
      %v4000 = vunpack.c.h.b16 %v3505
      %v4001 = vunpack.c.l.b16 %v3506
      %v4002 = vunpack.c.h.b16 %v3506
      %v4003 = vunpack.c.l.b16 %v3507
      %v4004 = vunpack.c.l.b16 %v3508
      %v4005 = vunpack.c.h.b16 %v3508
      %v4006 = vunpack.c.l.b16 %v3509
      %v4007 = vunpack.c.h.b16 %v3509
      %v4008 = vunpack.c.l.b16 %v3510
      %v4009 = vunpack.c.h.b16 %v3510
      %v4010 = vunpack.c.l.b16 %v3511
      %v4011 = vunpack.c.h.b16 %v3511
      %v4012 = vunpack.c.l.b16 %v3512
      %v4013 = vunpack.c.l.b16 %v3513
      %v4014 = vunpack.c.h.b16 %v3513
      %v4015 = vunpack.c.l.b16 %v3514
      %v4016 = vunpack.c.h.b16 %v3514
      %v4017 = vunpack.c.l.b16 %v3515
      %v4018 = vunpack.c.h.b16 %v3515
      %v4019 = vunpack.c.l.b16 %v3516
      %v4020 = vunpack.c.h.b16 %v3516
      %v4021 = vunpack.c.l.b16 %v3517
      %v4022 = vunpack.c.l.b16 %v3518
      %v4023 = vunpack.c.h.b16 %v3518
      %v4024 = vunpack.c.l.b16 %v3519
      %v4025 = vunpack.c.h.b16 %v3519
      %v4026 = vunpack.c.l.b16 %v3520
      %v4027 = vunpack.c.h.b16 %v3520
      %v4028 = vunpack.c.l.b16 %v3521
      %v4029 = vunpack.c.h.b16 %v3521
      %v4030 = vunpack.c.l.b16 %v3522
      %v4031 = vunpack.c.l.b16 %v3523
      %v4032 = vunpack.c.h.b16 %v3523
      %v4033 = vunpack.c.l.b16 %v3524
      %v4034 = vunpack.c.h.b16 %v3524
      %v4035 = vunpack.c.l.b16 %v3525
      %v4036 = vunpack.c.h.b16 %v3525
      %v4037 = vunpack.c.l.b16 %v3526
      %v4038 = vunpack.c.h.b16 %v3526
      %v4039 = vunpack.c.l.b16 %v3527
      %v4040 = vunpack.c.l.b16 %v3528
      %v4041 = vunpack.c.h.b16 %v3528
      %v4042 = vunpack.c.l.b16 %v3529
      %v4043 = vunpack.c.h.b16 %v3529
      %v4044 = vunpack.c.l.b16 %v3530
      %v4045 = vunpack.c.h.b16 %v3530
      %v4046 = vunpack.c.l.b16 %v3531
      %v4047 = vunpack.c.h.b16 %v3531
      %v4048 = vunpack.c.l.b16 %v3532
      %v4049 = vunpack.c.l.b16 %v3533
      %v4050 = vunpack.c.h.b16 %v3533
      %v4051 = vunpack.c.l.b16 %v3534
      %v4052 = vunpack.c.h.b16 %v3534
      %v4053 = vunpack.c.l.b16 %v3535
      %v4054 = vunpack.c.h.b16 %v3535
      %v4055 = vunpack.c.l.b16 %v3536
      %v4056 = vunpack.c.h.b16 %v3536
      %v4057 = vunpack.c.l.b16 %v3537
      %v4058 = vunpack.c.l.b16 %v3538
      %v4059 = vunpack.c.h.b16 %v3538
      %v4060 = vunpack.c.l.b16 %v3539
      %v4061 = vunpack.c.h.b16 %v3539
      %v4062 = vunpack.c.l.b16 %v3540
      %v4063 = vunpack.c.h.b16 %v3540
      %v4064 = vunpack.c.l.b16 %v3541
      %v4065 = vunpack.c.h.b16 %v3541
      %v4066 = vunpack.c.l.b16 %v3542
      %v4067 = vunpack.c.l.b16 %v3543
      %v4068 = vunpack.c.h.b16 %v3543
      %v4069 = vunpack.c.l.b16 %v3544
      %v4070 = vunpack.c.h.b16 %v3544
      %v4071 = vunpack.c.l.b16 %v3545
      %v4072 = vunpack.c.h.b16 %v3545
      %v4073 = vunpack.c.l.b16 %v3546
      %v4074 = vunpack.c.h.b16 %v3546
      %v4075 = vunpack.c.l.b16 %v3547
      %v4076 = vunpack.c.l.b16 %v3548
      %v4077 = vunpack.c.h.b16 %v3548
      %v4078 = vunpack.c.l.b16 %v3549
      %v4079 = vunpack.c.h.b16 %v3549
      %v4080 = vunpack.c.l.b16 %v3550
      %v4081 = vunpack.c.h.b16 %v3550
      %v4082 = vunpack.c.l.b16 %v3551
      %v4083 = vunpack.c.h.b16 %v3551
      %v4084 = vunpack.c.l.b16 %v3552
      %v4085 = vunpack.c.l.b16 %v3553
      %v4086 = vunpack.c.h.b16 %v3553
      %v4087 = vunpack.c.l.b16 %v3554
      %v4088 = vunpack.c.h.b16 %v3554
      %v4089 = vunpack.c.l.b16 %v3555
      %v4090 = vunpack.c.h.b16 %v3555
      %v4091 = vunpack.c.l.b16 %v3556
      %v4092 = vunpack.c.h.b16 %v3556
      %v4093 = vunpack.c.l.b16 %v3557
      %v4094 = vunpack.c.l.b16 %v3558
      %v4095 = vunpack.c.h.b16 %v3558
      %v4096 = vunpack.c.l.b16 %v3559
      %v4097 = vunpack.c.h.b16 %v3559
      %v4098 = vunpack.c.l.b16 %v3560
      %v4099 = vunpack.c.h.b16 %v3560
      %v4100 = vunpack.c.l.b16 %v3561
      %v4101 = vunpack.c.h.b16 %v3561
      %v4102 = vunpack.c.l.b16 %v3562
      %v4103 = vunpack.c.l.b16 %v3563
      %v4104 = vunpack.c.h.b16 %v3563
      %v4105 = vunpack.c.l.b16 %v3564
      %v4106 = vunpack.c.h.b16 %v3564
      %v4107 = vunpack.c.l.b16 %v3565
      %v4108 = vunpack.c.h.b16 %v3565
      %v4109 = vunpack.c.l.b16 %v3566
      %v4110 = vunpack.c.h.b16 %v3566
      %v4111 = vunpack.c.l.b16 %v3567
      %v4112 = vunpack.c.l.b16 %v3568
      %v4113 = vunpack.c.h.b16 %v3568
      %v4114 = vunpack.c.l.b16 %v3569
      %v4115 = vunpack.c.h.b16 %v3569
      %v4116 = vunpack.c.l.b16 %v3570
      %v4117 = vunpack.c.h.b16 %v3570
      %v4118 = vunpack.c.l.b16 %v3571
      %v4119 = vunpack.c.h.b16 %v3571
      %v4120 = vunpack.c.l.b16 %v3572
      %v4121 = vunpack.c.l.b16 %v3573
      %v4122 = vunpack.c.h.b16 %v3573
      %v4123 = vunpack.c.l.b16 %v3574
      %v4124 = vunpack.c.h.b16 %v3574
      %v4125 = vunpack.c.l.b16 %v3575
      %v4126 = vunpack.c.h.b16 %v3575
      %v4127 = vunpack.c.l.b16 %v3576
      %v4128 = vunpack.c.h.b16 %v3576
      %v4129 = vunpack.c.l.b16 %v3577
      %v4130 = vunpack.c.l.b16 %v3578
      %v4131 = vunpack.c.h.b16 %v3578
      %v4132 = vunpack.c.l.b16 %v3579
      %v4133 = vunpack.c.h.b16 %v3579
      %v4134 = vunpack.c.l.b16 %v3580
      %v4135 = vunpack.c.h.b16 %v3580
      %v4136 = vunpack.c.l.b16 %v3581
      %v4137 = vunpack.c.h.b16 %v3581
      %v4138 = vunpack.c.l.b16 %v3582
      %v4139 = vunpack.c.l.b16 %v3583
      %v4140 = vunpack.c.h.b16 %v3583
      %v4141 = vunpack.c.l.b16 %v3584
      %v4142 = vunpack.c.h.b16 %v3584
      %v4143 = vunpack.c.l.b16 %v3585
      %v4144 = vunpack.c.h.b16 %v3585
      %v4145 = vunpack.c.l.b16 %v3586
      %v4146 = vunpack.c.h.b16 %v3586
      %v4147 = vunpack.c.l.b16 %v3587
      %v4148 = vunpack.c.l.b16 %v3588
      %v4149 = vunpack.c.h.b16 %v3588
      %v4150 = vunpack.c.l.b16 %v3589
      %v4151 = vunpack.c.h.b16 %v3589
      %v4152 = vunpack.c.l.b16 %v3590
      %v4153 = vunpack.c.h.b16 %v3590
      %v4154 = vunpack.c.l.b16 %v3591
      %v4155 = vunpack.c.h.b16 %v3591
      %v4156 = vunpack.c.l.b16 %v3592
      %v4157 = vunpack.c.l.b16 %v3593
      %v4158 = vunpack.c.h.b16 %v3593
      %v4159 = vunpack.c.l.b16 %v3594
      %v4160 = vunpack.c.h.b16 %v3594
      %v4161 = vunpack.c.l.b16 %v3595
      %v4162 = vunpack.c.h.b16 %v3595
      %v4163 = vunpack.c.l.b16 %v3596
      %v4164 = vunpack.c.h.b16 %v3596
      %v4165 = vunpack.c.l.b16 %v3597
      %v4166 = vunpack.c.l.b16 %v3598
      %v4167 = vunpack.c.h.b16 %v3598
      %v4168 = vunpack.c.l.b16 %v3599
      %v4169 = vunpack.c.h.b16 %v3599
      %v4170 = vunpack.c.l.b16 %v3600
      %v4171 = vunpack.c.h.b16 %v3600
      %v4172 = vunpack.c.l.b16 %v3601
      %v4173 = vunpack.c.h.b16 %v3601
      %v4174 = vunpack.c.l.b16 %v3602
      %v4175 = vunpack.c.l.b16 %v3603
      %v4176 = vunpack.c.h.b16 %v3603
      %v4177 = vunpack.c.l.b16 %v3604
      %v4178 = vunpack.c.h.b16 %v3604
      %v4179 = vunpack.c.l.b16 %v3605
      %v4180 = vunpack.c.h.b16 %v3605
      %v4181 = vunpack.c.l.b16 %v3606
      %v4182 = vunpack.c.h.b16 %v3606
      %v4183 = vunpack.c.l.b16 %v3607
      %v4184 = vunpack.c.l.b16 %v3608
      %v4185 = vunpack.c.h.b16 %v3608
      %v4186 = vunpack.c.l.b16 %v3609
      %v4187 = vunpack.c.h.b16 %v3609
      %v4188 = vunpack.c.l.b16 %v3610
      %v4189 = vunpack.c.h.b16 %v3610
      %v4190 = vunpack.c.l.b16 %v3611
      %v4191 = vunpack.c.h.b16 %v3611
      %v4192 = vunpack.c.l.b16 %v3612
      %v4193 = vunpack.c.l.b16 %v3613
      %v4194 = vunpack.c.h.b16 %v3613
      %v4195 = vunpack.c.l.b16 %v3614
      %v4196 = vunpack.c.h.b16 %v3614
      %v4197 = vunpack.c.l.b16 %v3615
      %v4198 = vunpack.c.h.b16 %v3615
      %v4199 = vunpack.c.l.b16 %v3616
      %v4200 = vunpack.c.h.b16 %v3616
      %v4201 = vunpack.c.l.b16 %v3617
      %v4202 = vunpack.c.l.b16 %v3618
      %v4203 = vunpack.c.h.b16 %v3618
      %v4204 = vunpack.c.l.b16 %v3619
      %v4205 = vunpack.c.h.b16 %v3619
      %v4206 = vunpack.c.l.b16 %v3620
      %v4207 = vunpack.c.h.b16 %v3620
      %v4208 = vunpack.c.l.b16 %v3621
      %v4209 = vunpack.c.h.b16 %v3621
      %v4210 = vunpack.c.l.b16 %v3622
      %v4211 = vunpack.c.l.b16 %v3623
      %v4212 = vunpack.c.h.b16 %v3623
      %v4213 = vunpack.c.l.b16 %v3624
      %v4214 = vunpack.c.h.b16 %v3624
      %v4215 = vunpack.c.l.b16 %v3625
      %v4216 = vunpack.c.h.b16 %v3625
      %v4217 = vunpack.c.l.b16 %v3626
      %v4218 = vunpack.c.h.b16 %v3626
      %v4219 = vunpack.c.l.b16 %v3627
      %v4220 = vpack.c.b16 %v3941, %v3932
      %v4221 = vpack.c.b16 %v3942, %v3933
      %v4222 = vpack.c.b16 %v3943, %v3934
      %v4223 = vpack.c.b16 %v3944, %v3935
      %v4224 = vpack.c.b16 %v3945, %v3936
      %v4225 = vpack.c.b16 %v3946, %v3937
      %v4226 = vpack.c.b16 %v3947, %v3938
      %v4227 = vpack.c.b16 %v3948, %v3939
      %v4228 = vpack.c.b16 %v3949, %v3940
      %v4229 = vpack.c.b16 %v3959, %v3950
      %v4230 = vpack.c.b16 %v3960, %v3951
      %v4231 = vpack.c.b16 %v3961, %v3952
      %v4232 = vpack.c.b16 %v3962, %v3953
      %v4233 = vpack.c.b16 %v3963, %v3954
      %v4234 = vpack.c.b16 %v3964, %v3955
      %v4235 = vpack.c.b16 %v3965, %v3956
      %v4236 = vpack.c.b16 %v3966, %v3957
      %v4237 = vpack.c.b16 %v3967, %v3958
      %v4238 = vpack.c.b16 %v3977, %v3968
      %v4239 = vpack.c.b16 %v3978, %v3969
      %v4240 = vpack.c.b16 %v3979, %v3970
      %v4241 = vpack.c.b16 %v3980, %v3971
      %v4242 = vpack.c.b16 %v3981, %v3972
      %v4243 = vpack.c.b16 %v3982, %v3973
      %v4244 = vpack.c.b16 %v3983, %v3974
      %v4245 = vpack.c.b16 %v3984, %v3975
      %v4246 = vpack.c.b16 %v3985, %v3976
      %v4247 = vpack.c.b16 %v3995, %v3986
      %v4248 = vpack.c.b16 %v3996, %v3987
      %v4249 = vpack.c.b16 %v3997, %v3988
      %v4250 = vpack.c.b16 %v3998, %v3989
      %v4251 = vpack.c.b16 %v3999, %v3990
      %v4252 = vpack.c.b16 %v4000, %v3991
      %v4253 = vpack.c.b16 %v4001, %v3992
      %v4254 = vpack.c.b16 %v4002, %v3993
      %v4255 = vpack.c.b16 %v4003, %v3994
      %v4256 = vpack.c.b16 %v4013, %v4004
      %v4257 = vpack.c.b16 %v4014, %v4005
      %v4258 = vpack.c.b16 %v4015, %v4006
      %v4259 = vpack.c.b16 %v4016, %v4007
      %v4260 = vpack.c.b16 %v4017, %v4008
      %v4261 = vpack.c.b16 %v4018, %v4009
      %v4262 = vpack.c.b16 %v4019, %v4010
      %v4263 = vpack.c.b16 %v4020, %v4011
      %v4264 = vpack.c.b16 %v4021, %v4012
      %v4265 = vpack.c.b16 %v4031, %v4022
      %v4266 = vpack.c.b16 %v4032, %v4023
      %v4267 = vpack.c.b16 %v4033, %v4024
      %v4268 = vpack.c.b16 %v4034, %v4025
      %v4269 = vpack.c.b16 %v4035, %v4026
      %v4270 = vpack.c.b16 %v4036, %v4027
      %v4271 = vpack.c.b16 %v4037, %v4028
      %v4272 = vpack.c.b16 %v4038, %v4029
      %v4273 = vpack.c.b16 %v4039, %v4030
      %v4274 = vpack.c.b16 %v4049, %v4040
      %v4275 = vpack.c.b16 %v4050, %v4041
      %v4276 = vpack.c.b16 %v4051, %v4042
      %v4277 = vpack.c.b16 %v4052, %v4043
      %v4278 = vpack.c.b16 %v4053, %v4044
      %v4279 = vpack.c.b16 %v4054, %v4045
      %v4280 = vpack.c.b16 %v4055, %v4046
      %v4281 = vpack.c.b16 %v4056, %v4047
      %v4282 = vpack.c.b16 %v4057, %v4048
      %v4283 = vpack.c.b16 %v4067, %v4058
      %v4284 = vpack.c.b16 %v4068, %v4059
      %v4285 = vpack.c.b16 %v4069, %v4060
      %v4286 = vpack.c.b16 %v4070, %v4061
      %v4287 = vpack.c.b16 %v4071, %v4062
      %v4288 = vpack.c.b16 %v4072, %v4063
      %v4289 = vpack.c.b16 %v4073, %v4064
      %v4290 = vpack.c.b16 %v4074, %v4065
      %v4291 = vpack.c.b16 %v4075, %v4066
      %v4292 = vpack.c.b16 %v4085, %v4076
      %v4293 = vpack.c.b16 %v4086, %v4077
      %v4294 = vpack.c.b16 %v4087, %v4078
      %v4295 = vpack.c.b16 %v4088, %v4079
      %v4296 = vpack.c.b16 %v4089, %v4080
      %v4297 = vpack.c.b16 %v4090, %v4081
      %v4298 = vpack.c.b16 %v4091, %v4082
      %v4299 = vpack.c.b16 %v4092, %v4083
      %v4300 = vpack.c.b16 %v4093, %v4084
      %v4301 = vpack.c.b16 %v4103, %v4094
      %v4302 = vpack.c.b16 %v4104, %v4095
      %v4303 = vpack.c.b16 %v4105, %v4096
      %v4304 = vpack.c.b16 %v4106, %v4097
      %v4305 = vpack.c.b16 %v4107, %v4098
      %v4306 = vpack.c.b16 %v4108, %v4099
      %v4307 = vpack.c.b16 %v4109, %v4100
      %v4308 = vpack.c.b16 %v4110, %v4101
      %v4309 = vpack.c.b16 %v4111, %v4102
      %v4310 = vpack.c.b16 %v4121, %v4112
      %v4311 = vpack.c.b16 %v4122, %v4113
      %v4312 = vpack.c.b16 %v4123, %v4114
      %v4313 = vpack.c.b16 %v4124, %v4115
      %v4314 = vpack.c.b16 %v4125, %v4116
      %v4315 = vpack.c.b16 %v4126, %v4117
      %v4316 = vpack.c.b16 %v4127, %v4118
      %v4317 = vpack.c.b16 %v4128, %v4119
      %v4318 = vpack.c.b16 %v4129, %v4120
      %v4319 = vpack.c.b16 %v4139, %v4130
      %v4320 = vpack.c.b16 %v4140, %v4131
      %v4321 = vpack.c.b16 %v4141, %v4132
      %v4322 = vpack.c.b16 %v4142, %v4133
      %v4323 = vpack.c.b16 %v4143, %v4134
      %v4324 = vpack.c.b16 %v4144, %v4135
      %v4325 = vpack.c.b16 %v4145, %v4136
      %v4326 = vpack.c.b16 %v4146, %v4137
      %v4327 = vpack.c.b16 %v4147, %v4138
      %v4328 = vpack.c.b16 %v4157, %v4148
      %v4329 = vpack.c.b16 %v4158, %v4149
      %v4330 = vpack.c.b16 %v4159, %v4150
      %v4331 = vpack.c.b16 %v4160, %v4151
      %v4332 = vpack.c.b16 %v4161, %v4152
      %v4333 = vpack.c.b16 %v4162, %v4153
      %v4334 = vpack.c.b16 %v4163, %v4154
      %v4335 = vpack.c.b16 %v4164, %v4155
      %v4336 = vpack.c.b16 %v4165, %v4156
      %v4337 = vpack.c.b16 %v4175, %v4166
      %v4338 = vpack.c.b16 %v4176, %v4167
      %v4339 = vpack.c.b16 %v4177, %v4168
      %v4340 = vpack.c.b16 %v4178, %v4169
      %v4341 = vpack.c.b16 %v4179, %v4170
      %v4342 = vpack.c.b16 %v4180, %v4171
      %v4343 = vpack.c.b16 %v4181, %v4172
      %v4344 = vpack.c.b16 %v4182, %v4173
      %v4345 = vpack.c.b16 %v4183, %v4174
      %v4346 = vpack.c.b16 %v4193, %v4184
      %v4347 = vpack.c.b16 %v4194, %v4185
      %v4348 = vpack.c.b16 %v4195, %v4186
      %v4349 = vpack.c.b16 %v4196, %v4187
      %v4350 = vpack.c.b16 %v4197, %v4188
      %v4351 = vpack.c.b16 %v4198, %v4189
      %v4352 = vpack.c.b16 %v4199, %v4190
      %v4353 = vpack.c.b16 %v4200, %v4191
      %v4354 = vpack.c.b16 %v4201, %v4192
      %v4355 = vpack.c.b16 %v4211, %v4202
      %v4356 = vpack.c.b16 %v4212, %v4203
      %v4357 = vpack.c.b16 %v4213, %v4204
      %v4358 = vpack.c.b16 %v4214, %v4205
      %v4359 = vpack.c.b16 %v4215, %v4206
      %v4360 = vpack.c.b16 %v4216, %v4207
      %v4361 = vpack.c.b16 %v4217, %v4208
      %v4362 = vpack.c.b16 %v4218, %v4209
      %v4363 = vpack.c.b16 %v4219, %v4210
      %v4652 = vunpack.c.l.b16 %v3628
      %v4653 = vunpack.c.l.b16 %v3629
      %v4654 = vunpack.c.l.b16 %v3630
      %v4655 = vunpack.c.l.b16 %v3631
      %v4656 = vunpack.c.l.b16 %v3632
      %v4657 = vunpack.c.l.b16 %v3633
      %v4658 = vunpack.c.l.b16 %v3634
      %v4659 = vunpack.c.l.b16 %v3635
      %v4660 = vunpack.c.l.b16 %v3636
      %v4661 = vunpack.c.l.b16 %v3637
      %v4662 = vunpack.c.l.b16 %v3638
      %v4663 = vunpack.c.l.b16 %v3639
      %v4664 = vunpack.c.l.b16 %v3640
      %v4665 = vunpack.c.l.b16 %v3641
      %v4666 = vunpack.c.l.b16 %v3642
      %v4667 = vunpack.c.l.b16 %v3643
      %v4668 = vunpack.c.l.b16 %v3644
      %v4669 = vunpack.c.l.b16 %v3645
      %v4670 = vunpack.c.l.b16 %v3646
      %v4671 = vunpack.c.l.b16 %v3647
      %v4672 = vunpack.c.l.b16 %v3648
      %v4673 = vunpack.c.l.b16 %v3649
      %v4674 = vunpack.c.l.b16 %v3650
      %v4675 = vunpack.c.l.b16 %v3651
      %v4676 = vunpack.c.l.b16 %v3652
      %v4677 = vunpack.c.l.b16 %v3653
      %v4678 = vunpack.c.l.b16 %v3654
      %v4679 = vunpack.c.l.b16 %v3655
      %v4680 = vunpack.c.l.b16 %v3656
      %v4681 = vunpack.c.l.b16 %v3657
      %v4682 = vunpack.c.l.b16 %v3658
      %v4683 = vunpack.c.l.b16 %v3659
      %v4684 = vunpack.c.l.b16 %v3660
      %v4685 = vunpack.c.l.b16 %v3661
      %v4686 = vunpack.c.l.b16 %v3662
      %v4687 = vunpack.c.l.b16 %v3663
      %v4688 = vunpack.c.l.b16 %v3664
      %v4689 = vunpack.c.l.b16 %v3665
      %v4690 = vunpack.c.l.b16 %v3666
      %v4691 = vunpack.c.l.b16 %v3667
      %v4692 = vunpack.c.l.b16 %v3668
      %v4693 = vunpack.c.l.b16 %v3669
      %v4694 = vunpack.c.l.b16 %v3670
      %v4695 = vunpack.c.l.b16 %v3671
      %v4696 = vunpack.c.l.b16 %v3672
      %v4697 = vunpack.c.l.b16 %v3673
      %v4698 = vunpack.c.l.b16 %v3674
      %v4699 = vunpack.c.l.b16 %v3675
      %v4700 = vunpack.c.l.b16 %v3676
      %v4701 = vunpack.c.l.b16 %v3677
      %v4702 = vunpack.c.l.b16 %v3678
      %v4703 = vunpack.c.l.b16 %v3679
      %v4704 = vunpack.c.l.b16 %v3680
      %v4705 = vunpack.c.l.b16 %v3681
      %v4706 = vunpack.c.l.b16 %v3682
      %v4707 = vunpack.c.l.b16 %v3683
      %v4708 = vunpack.c.l.b16 %v3684
      %v4709 = vunpack.c.l.b16 %v3685
      %v4710 = vunpack.c.l.b16 %v3686
      %v4711 = vunpack.c.l.b16 %v3687
      %v4712 = vunpack.c.l.b16 %v3688
      %v4713 = vunpack.c.l.b16 %v3689
      %v4714 = vunpack.c.l.b16 %v3690
      %v4715 = vunpack.c.l.b16 %v3691
      %v4716 = vunpack.c.l.b16 %v3692
      %v4717 = vunpack.c.l.b16 %v3693
      %v4718 = vunpack.c.l.b16 %v3694
      %v4719 = vunpack.c.l.b16 %v3695
      %v4720 = vunpack.c.l.b16 %v3696
      %v4721 = vunpack.c.l.b16 %v3697
      %v4722 = vunpack.c.l.b16 %v3698
      %v4723 = vunpack.c.l.b16 %v3699
      %v4724 = vunpack.c.l.b16 %v3700
      %v4725 = vunpack.c.l.b16 %v3701
      %v4726 = vunpack.c.l.b16 %v3702
      %v4727 = vunpack.c.l.b16 %v3703
      %v4728 = vunpack.c.l.b16 %v3704
      %v4729 = vunpack.c.l.b16 %v3705
      %v4730 = vunpack.c.l.b16 %v3706
      %v4731 = vunpack.c.l.b16 %v3707
      %v4732 = vunpack.c.l.b16 %v3708
      %v4733 = vunpack.c.l.b16 %v3709
      %v4734 = vunpack.c.l.b16 %v3710
      %v4735 = vunpack.c.l.b16 %v3711
      %v4736 = vunpack.c.l.b16 %v3712
      %v4737 = vunpack.c.l.b16 %v3713
      %v4738 = vunpack.c.l.b16 %v3714
      %v4739 = vunpack.c.l.b16 %v3715
      %v4740 = vunpack.c.l.b16 %v3716
      %v4741 = vunpack.c.l.b16 %v3717
      %v4742 = vunpack.c.l.b16 %v3718
      %v4743 = vunpack.c.l.b16 %v3719
      %v4744 = vunpack.c.l.b16 %v3720
      %v4745 = vunpack.c.l.b16 %v3721
      %v4746 = vunpack.c.l.b16 %v3722
      %v4747 = vunpack.c.l.b16 %v3723
      %v4748 = vunpack.c.l.b16 %v3724
      %v4749 = vunpack.c.l.b16 %v3725
      %v4750 = vunpack.c.l.b16 %v3726
      %v4751 = vunpack.c.l.b16 %v3727
      %v4752 = vunpack.c.l.b16 %v3728
      %v4753 = vunpack.c.l.b16 %v3729
      %v4754 = vunpack.c.l.b16 %v3730
      %v4755 = vunpack.c.l.b16 %v3731
      %v4756 = vunpack.c.l.b16 %v3732
      %v4757 = vunpack.c.l.b16 %v3733
      %v4758 = vunpack.c.l.b16 %v3734
      %v4759 = vunpack.c.l.b16 %v3735
      %v4760 = vunpack.c.l.b16 %v3736
      %v4761 = vunpack.c.l.b16 %v3737
      %v4762 = vunpack.c.l.b16 %v3738
      %v4763 = vunpack.c.l.b16 %v3739
      %v4764 = vunpack.c.l.b16 %v3740
      %v4765 = vunpack.c.l.b16 %v3741
      %v4766 = vunpack.c.l.b16 %v3742
      %v4767 = vunpack.c.l.b16 %v3743
      %v4768 = vunpack.c.l.b16 %v3744
      %v4769 = vunpack.c.l.b16 %v3745
      %v4770 = vunpack.c.l.b16 %v3746
      %v4771 = vunpack.c.l.b16 %v3747
      %v4772 = vunpack.c.l.b16 %v3748
      %v4773 = vunpack.c.l.b16 %v3749
      %v4774 = vunpack.c.l.b16 %v3750
      %v4775 = vunpack.c.l.b16 %v3751
      %v4776 = vunpack.c.l.b16 %v3752
      %v4777 = vunpack.c.l.b16 %v3753
      %v4778 = vunpack.c.l.b16 %v3754
      %v4779 = vunpack.c.l.b16 %v3755
      %v4780 = vunpack.c.l.b16 %v3756
      %v4781 = vunpack.c.l.b16 %v3757
      %v4782 = vunpack.c.l.b16 %v3758
      %v4783 = vunpack.c.l.b16 %v3759
      %v4784 = vunpack.c.l.b16 %v3760
      %v4785 = vunpack.c.l.b16 %v3761
      %v4786 = vunpack.c.l.b16 %v3762
      %v4787 = vunpack.c.l.b16 %v3763
      %v4788 = vunpack.c.l.b16 %v3764
      %v4789 = vunpack.c.l.b16 %v3765
      %v4790 = vunpack.c.l.b16 %v3766
      %v4791 = vunpack.c.l.b16 %v3767
      %v4792 = vunpack.c.l.b16 %v3768
      %v4793 = vunpack.c.l.b16 %v3769
      %v4794 = vunpack.c.l.b16 %v3770
      %v4795 = vunpack.c.l.b16 %v3771
      %v4796 = vpack.c.b16 %v4653, %v4652
      %v4797 = vpack.c.b16 %v4655, %v4654
      %v4798 = vpack.c.b16 %v4657, %v4656
      %v4799 = vpack.c.b16 %v4659, %v4658
      %v4800 = vpack.c.b16 %v4661, %v4660
      %v4801 = vpack.c.b16 %v4663, %v4662
      %v4802 = vpack.c.b16 %v4665, %v4664
      %v4803 = vpack.c.b16 %v4667, %v4666
      %v4804 = vpack.c.b16 %v4669, %v4668
      %v4805 = vpack.c.b16 %v4671, %v4670
      %v4806 = vpack.c.b16 %v4673, %v4672
      %v4807 = vpack.c.b16 %v4675, %v4674
      %v4808 = vpack.c.b16 %v4677, %v4676
      %v4809 = vpack.c.b16 %v4679, %v4678
      %v4810 = vpack.c.b16 %v4681, %v4680
      %v4811 = vpack.c.b16 %v4683, %v4682
      %v4812 = vpack.c.b16 %v4685, %v4684
      %v4813 = vpack.c.b16 %v4687, %v4686
      %v4814 = vpack.c.b16 %v4689, %v4688
      %v4815 = vpack.c.b16 %v4691, %v4690
      %v4816 = vpack.c.b16 %v4693, %v4692
      %v4817 = vpack.c.b16 %v4695, %v4694
      %v4818 = vpack.c.b16 %v4697, %v4696
      %v4819 = vpack.c.b16 %v4699, %v4698
      %v4820 = vpack.c.b16 %v4701, %v4700
      %v4821 = vpack.c.b16 %v4703, %v4702
      %v4822 = vpack.c.b16 %v4705, %v4704
      %v4823 = vpack.c.b16 %v4707, %v4706
      %v4824 = vpack.c.b16 %v4709, %v4708
      %v4825 = vpack.c.b16 %v4711, %v4710
      %v4826 = vpack.c.b16 %v4713, %v4712
      %v4827 = vpack.c.b16 %v4715, %v4714
      %v4828 = vpack.c.b16 %v4717, %v4716
      %v4829 = vpack.c.b16 %v4719, %v4718
      %v4830 = vpack.c.b16 %v4721, %v4720
      %v4831 = vpack.c.b16 %v4723, %v4722
      %v4832 = vpack.c.b16 %v4725, %v4724
      %v4833 = vpack.c.b16 %v4727, %v4726
      %v4834 = vpack.c.b16 %v4729, %v4728
      %v4835 = vpack.c.b16 %v4731, %v4730
      %v4836 = vpack.c.b16 %v4733, %v4732
      %v4837 = vpack.c.b16 %v4735, %v4734
      %v4838 = vpack.c.b16 %v4737, %v4736
      %v4839 = vpack.c.b16 %v4739, %v4738
      %v4840 = vpack.c.b16 %v4741, %v4740
      %v4841 = vpack.c.b16 %v4743, %v4742
      %v4842 = vpack.c.b16 %v4745, %v4744
      %v4843 = vpack.c.b16 %v4747, %v4746
      %v4844 = vpack.c.b16 %v4749, %v4748
      %v4845 = vpack.c.b16 %v4751, %v4750
      %v4846 = vpack.c.b16 %v4753, %v4752
      %v4847 = vpack.c.b16 %v4755, %v4754
      %v4848 = vpack.c.b16 %v4757, %v4756
      %v4849 = vpack.c.b16 %v4759, %v4758
      %v4850 = vpack.c.b16 %v4761, %v4760
      %v4851 = vpack.c.b16 %v4763, %v4762
      %v4852 = vpack.c.b16 %v4765, %v4764
      %v4853 = vpack.c.b16 %v4767, %v4766
      %v4854 = vpack.c.b16 %v4769, %v4768
      %v4855 = vpack.c.b16 %v4771, %v4770
      %v4856 = vpack.c.b16 %v4773, %v4772
      %v4857 = vpack.c.b16 %v4775, %v4774
      %v4858 = vpack.c.b16 %v4777, %v4776
      %v4859 = vpack.c.b16 %v4779, %v4778
      %v4860 = vpack.c.b16 %v4781, %v4780
      %v4861 = vpack.c.b16 %v4783, %v4782
      %v4862 = vpack.c.b16 %v4785, %v4784
      %v4863 = vpack.c.b16 %v4787, %v4786
      %v4864 = vpack.c.b16 %v4789, %v4788
      %v4865 = vpack.c.b16 %v4791, %v4790
      %v4866 = vpack.c.b16 %v4793, %v4792
      %v4867 = vpack.c.b16 %v4795, %v4794
      %4940 = vmatpush.bf16.msra.mxu0 %v4803
      %4941 = vmatpush.bf16.msra.mxu0 %v4802
      %4942 = vmatpush.bf16.msra.mxu0 %v4801
      %4943 = vmatpush.bf16.msra.mxu0 %v4800
      %4944 = vmatpush.bf16.msra.mxu0 %v4799
      %4945 = vmatpush.bf16.msra.mxu0 %v4798
      %4946 = vmatpush.bf16.msra.mxu0 %v4797
      %4947 = vmatpush.bf16.msra.mxu0 %v4796
      %4948 = vmatmul.bf16.gmra.mxu0 %v4220
      %v4949 = vpop.f32.mrf.mxu0
      %v4950 = vadd.f32 0.0, %v4949
      %v4951 = vpop.f32.mrf.mxu0
      %v4952 = vadd.f32 0.0, %v4951
      %4953 = vmatmul.bf16.gmra.mxu0 %v4229
      %v4954 = vpop.f32.mrf.mxu0
      %v4955 = vadd.f32 0.0, %v4954
      %v4956 = vpop.f32.mrf.mxu0
      %v4957 = vadd.f32 0.0, %v4956
      %4958 = vmatmul.bf16.gmra.mxu0 %v4238
      %v4959 = vpop.f32.mrf.mxu0
      %v4960 = vadd.f32 0.0, %v4959
      %v4961 = vpop.f32.mrf.mxu0
      %v4962 = vadd.f32 0.0, %v4961
      %4963 = vmatmul.bf16.gmra.mxu0 %v4247
      %v4964 = vpop.f32.mrf.mxu0
      %v4965 = vadd.f32 0.0, %v4964
      %v4966 = vpop.f32.mrf.mxu0
      %v4967 = vadd.f32 0.0, %v4966
      %4968 = vmatmul.bf16.gmra.mxu0 %v4256
      %v4969 = vpop.f32.mrf.mxu0
      %v4970 = vadd.f32 0.0, %v4969
      %v4971 = vpop.f32.mrf.mxu0
      %v4972 = vadd.f32 0.0, %v4971
      %4973 = vmatmul.bf16.gmra.mxu0 %v4265
      %v4974 = vpop.f32.mrf.mxu0
      %v4975 = vadd.f32 0.0, %v4974
      %v4976 = vpop.f32.mrf.mxu0
      %v4977 = vadd.f32 0.0, %v4976
      %4978 = vmatmul.bf16.gmra.mxu0 %v4274
      %v4979 = vpop.f32.mrf.mxu0
      %v4980 = vadd.f32 0.0, %v4979
      %v4981 = vpop.f32.mrf.mxu0
      %v4982 = vadd.f32 0.0, %v4981
      %4983 = vmatmul.bf16.gmra.mxu0 %v4283
      %v4984 = vpop.f32.mrf.mxu0
      %v4985 = vadd.f32 0.0, %v4984
      %v4986 = vpop.f32.mrf.mxu0
      %v4987 = vadd.f32 0.0, %v4986
      %4988 = vmatmul.bf16.gmra.mxu0 %v4292
      %v4989 = vpop.f32.mrf.mxu0
      %v4990 = vadd.f32 0.0, %v4989
      %v4991 = vpop.f32.mrf.mxu0
      %v4992 = vadd.f32 0.0, %v4991
      %4993 = vmatmul.bf16.gmra.mxu0 %v4301
      %v4994 = vpop.f32.mrf.mxu0
      %v4995 = vadd.f32 0.0, %v4994
      %v4996 = vpop.f32.mrf.mxu0
      %v4997 = vadd.f32 0.0, %v4996
      %4998 = vmatmul.bf16.gmra.mxu0 %v4310
      %v4999 = vpop.f32.mrf.mxu0
      %v5000 = vadd.f32 0.0, %v4999
      %v5001 = vpop.f32.mrf.mxu0
      %v5002 = vadd.f32 0.0, %v5001
      %5003 = vmatmul.bf16.gmra.mxu0 %v4319
      %v5004 = vpop.f32.mrf.mxu0
      %v5005 = vadd.f32 0.0, %v5004
      %v5006 = vpop.f32.mrf.mxu0
      %v5007 = vadd.f32 0.0, %v5006
      %5008 = vmatmul.bf16.gmra.mxu0 %v4328
      %v5009 = vpop.f32.mrf.mxu0
      %v5010 = vadd.f32 0.0, %v5009
      %v5011 = vpop.f32.mrf.mxu0
      %v5012 = vadd.f32 0.0, %v5011
      %5013 = vmatmul.bf16.gmra.mxu0 %v4337
      %v5014 = vpop.f32.mrf.mxu0
      %v5015 = vadd.f32 0.0, %v5014
      %v5016 = vpop.f32.mrf.mxu0
      %v5017 = vadd.f32 0.0, %v5016
      %5018 = vmatmul.bf16.gmra.mxu0 %v4346
      %v5019 = vpop.f32.mrf.mxu0
      %v5020 = vadd.f32 0.0, %v5019
      %v5021 = vpop.f32.mrf.mxu0
      %v5022 = vadd.f32 0.0, %v5021
      %5023 = vmatmul.bf16.gmra.mxu0 %v4355
      %v5024 = vpop.f32.mrf.mxu0
      %v5025 = vadd.f32 0.0, %v5024
      %v5026 = vpop.f32.mrf.mxu0
      %v5027 = vadd.f32 0.0, %v5026
      %5028 = vdwg.mxu0
      %5029 = vmatpush.bf16.msra.mxu0 %v4811
      %5030 = vmatpush.bf16.msra.mxu0 %v4810
      %5031 = vmatpush.bf16.msra.mxu0 %v4809
      %5032 = vmatpush.bf16.msra.mxu0 %v4808
      %5033 = vmatpush.bf16.msra.mxu0 %v4807
      %5034 = vmatpush.bf16.msra.mxu0 %v4806
      %5035 = vmatpush.bf16.msra.mxu0 %v4805
      %5036 = vmatpush.bf16.msra.mxu0 %v4804
      %5037 = vmatmul.bf16.gmra.mxu0 %v4221
      %v5038 = vpop.f32.mrf.mxu0
      %v5039 = vadd.f32 %v4950, %v5038
      %v5040 = vpop.f32.mrf.mxu0
      %v5041 = vadd.f32 %v4952, %v5040
      %5042 = vmatmul.bf16.gmra.mxu0 %v4230
      %v5043 = vpop.f32.mrf.mxu0
      %v5044 = vadd.f32 %v4955, %v5043
      %v5045 = vpop.f32.mrf.mxu0
      %v5046 = vadd.f32 %v4957, %v5045
      %5047 = vmatmul.bf16.gmra.mxu0 %v4239
      %v5048 = vpop.f32.mrf.mxu0
      %v5049 = vadd.f32 %v4960, %v5048
      %v5050 = vpop.f32.mrf.mxu0
      %v5051 = vadd.f32 %v4962, %v5050
      %5052 = vmatmul.bf16.gmra.mxu0 %v4248
      %v5053 = vpop.f32.mrf.mxu0
      %v5054 = vadd.f32 %v4965, %v5053
      %v5055 = vpop.f32.mrf.mxu0
      %v5056 = vadd.f32 %v4967, %v5055
      %5057 = vmatmul.bf16.gmra.mxu0 %v4257
      %v5058 = vpop.f32.mrf.mxu0
      %v5059 = vadd.f32 %v4970, %v5058
      %v5060 = vpop.f32.mrf.mxu0
      %v5061 = vadd.f32 %v4972, %v5060
      %5062 = vmatmul.bf16.gmra.mxu0 %v4266
      %v5063 = vpop.f32.mrf.mxu0
      %v5064 = vadd.f32 %v4975, %v5063
      %v5065 = vpop.f32.mrf.mxu0
      %v5066 = vadd.f32 %v4977, %v5065
      %5067 = vmatmul.bf16.gmra.mxu0 %v4275
      %v5068 = vpop.f32.mrf.mxu0
      %v5069 = vadd.f32 %v4980, %v5068
      %v5070 = vpop.f32.mrf.mxu0
      %v5071 = vadd.f32 %v4982, %v5070
      %5072 = vmatmul.bf16.gmra.mxu0 %v4284
      %v5073 = vpop.f32.mrf.mxu0
      %v5074 = vadd.f32 %v4985, %v5073
      %v5075 = vpop.f32.mrf.mxu0
      %v5076 = vadd.f32 %v4987, %v5075
      %5077 = vmatmul.bf16.gmra.mxu0 %v4293
      %v5078 = vpop.f32.mrf.mxu0
      %v5079 = vadd.f32 %v4990, %v5078
      %v5080 = vpop.f32.mrf.mxu0
      %v5081 = vadd.f32 %v4992, %v5080
      %5082 = vmatmul.bf16.gmra.mxu0 %v4302
      %v5083 = vpop.f32.mrf.mxu0
      %v5084 = vadd.f32 %v4995, %v5083
      %v5085 = vpop.f32.mrf.mxu0
      %v5086 = vadd.f32 %v4997, %v5085
      %5087 = vmatmul.bf16.gmra.mxu0 %v4311
      %v5088 = vpop.f32.mrf.mxu0
      %v5089 = vadd.f32 %v5000, %v5088
      %v5090 = vpop.f32.mrf.mxu0
      %v5091 = vadd.f32 %v5002, %v5090
      %5092 = vmatmul.bf16.gmra.mxu0 %v4320
      %v5093 = vpop.f32.mrf.mxu0
      %v5094 = vadd.f32 %v5005, %v5093
      %v5095 = vpop.f32.mrf.mxu0
      %v5096 = vadd.f32 %v5007, %v5095
      %5097 = vmatmul.bf16.gmra.mxu0 %v4329
      %v5098 = vpop.f32.mrf.mxu0
      %v5099 = vadd.f32 %v5010, %v5098
      %v5100 = vpop.f32.mrf.mxu0
      %v5101 = vadd.f32 %v5012, %v5100
      %5102 = vmatmul.bf16.gmra.mxu0 %v4338
      %v5103 = vpop.f32.mrf.mxu0
      %v5104 = vadd.f32 %v5015, %v5103
      %v5105 = vpop.f32.mrf.mxu0
      %v5106 = vadd.f32 %v5017, %v5105
      %5107 = vmatmul.bf16.gmra.mxu0 %v4347
      %v5108 = vpop.f32.mrf.mxu0
      %v5109 = vadd.f32 %v5020, %v5108
      %v5110 = vpop.f32.mrf.mxu0
      %v5111 = vadd.f32 %v5022, %v5110
      %5112 = vmatmul.bf16.gmra.mxu0 %v4356
      %v5113 = vpop.f32.mrf.mxu0
      %v5114 = vadd.f32 %v5025, %v5113
      %v5115 = vpop.f32.mrf.mxu0
      %v5116 = vadd.f32 %v5027, %v5115
      %5117 = vdwg.mxu0
      %5118 = vmatpush.bf16.msra.mxu0 %v4819
      %5119 = vmatpush.bf16.msra.mxu0 %v4818
      %5120 = vmatpush.bf16.msra.mxu0 %v4817
      %5121 = vmatpush.bf16.msra.mxu0 %v4816
      %5122 = vmatpush.bf16.msra.mxu0 %v4815
      %5123 = vmatpush.bf16.msra.mxu0 %v4814
      %5124 = vmatpush.bf16.msra.mxu0 %v4813
      %5125 = vmatpush.bf16.msra.mxu0 %v4812
      %5126 = vmatmul.bf16.gmra.mxu0 %v4222
      %v5127 = vpop.f32.mrf.mxu0
      %v5128 = vadd.f32 %v5039, %v5127
      %v5129 = vpop.f32.mrf.mxu0
      %v5130 = vadd.f32 %v5041, %v5129
      %5131 = vmatmul.bf16.gmra.mxu0 %v4231
      %v5132 = vpop.f32.mrf.mxu0
      %v5133 = vadd.f32 %v5044, %v5132
      %v5134 = vpop.f32.mrf.mxu0
      %v5135 = vadd.f32 %v5046, %v5134
      %5136 = vmatmul.bf16.gmra.mxu0 %v4240
      %v5137 = vpop.f32.mrf.mxu0
      %v5138 = vadd.f32 %v5049, %v5137
      %v5139 = vpop.f32.mrf.mxu0
      %v5140 = vadd.f32 %v5051, %v5139
      %5141 = vmatmul.bf16.gmra.mxu0 %v4249
      %v5142 = vpop.f32.mrf.mxu0
      %v5143 = vadd.f32 %v5054, %v5142
      %v5144 = vpop.f32.mrf.mxu0
      %v5145 = vadd.f32 %v5056, %v5144
      %5146 = vmatmul.bf16.gmra.mxu0 %v4258
      %v5147 = vpop.f32.mrf.mxu0
      %v5148 = vadd.f32 %v5059, %v5147
      %v5149 = vpop.f32.mrf.mxu0
      %v5150 = vadd.f32 %v5061, %v5149
      %5151 = vmatmul.bf16.gmra.mxu0 %v4267
      %v5152 = vpop.f32.mrf.mxu0
      %v5153 = vadd.f32 %v5064, %v5152
      %v5154 = vpop.f32.mrf.mxu0
      %v5155 = vadd.f32 %v5066, %v5154
      %5156 = vmatmul.bf16.gmra.mxu0 %v4276
      %v5157 = vpop.f32.mrf.mxu0
      %v5158 = vadd.f32 %v5069, %v5157
      %v5159 = vpop.f32.mrf.mxu0
      %v5160 = vadd.f32 %v5071, %v5159
      %5161 = vmatmul.bf16.gmra.mxu0 %v4285
      %v5162 = vpop.f32.mrf.mxu0
      %v5163 = vadd.f32 %v5074, %v5162
      %v5164 = vpop.f32.mrf.mxu0
      %v5165 = vadd.f32 %v5076, %v5164
      %5166 = vmatmul.bf16.gmra.mxu0 %v4294
      %v5167 = vpop.f32.mrf.mxu0
      %v5168 = vadd.f32 %v5079, %v5167
      %v5169 = vpop.f32.mrf.mxu0
      %v5170 = vadd.f32 %v5081, %v5169
      %5171 = vmatmul.bf16.gmra.mxu0 %v4303
      %v5172 = vpop.f32.mrf.mxu0
      %v5173 = vadd.f32 %v5084, %v5172
      %v5174 = vpop.f32.mrf.mxu0
      %v5175 = vadd.f32 %v5086, %v5174
      %5176 = vmatmul.bf16.gmra.mxu0 %v4312
      %v5177 = vpop.f32.mrf.mxu0
      %v5178 = vadd.f32 %v5089, %v5177
      %v5179 = vpop.f32.mrf.mxu0
      %v5180 = vadd.f32 %v5091, %v5179
      %5181 = vmatmul.bf16.gmra.mxu0 %v4321
      %v5182 = vpop.f32.mrf.mxu0
      %v5183 = vadd.f32 %v5094, %v5182
      %v5184 = vpop.f32.mrf.mxu0
      %v5185 = vadd.f32 %v5096, %v5184
      %5186 = vmatmul.bf16.gmra.mxu0 %v4330
      %v5187 = vpop.f32.mrf.mxu0
      %v5188 = vadd.f32 %v5099, %v5187
      %v5189 = vpop.f32.mrf.mxu0
      %v5190 = vadd.f32 %v5101, %v5189
      %5191 = vmatmul.bf16.gmra.mxu0 %v4339
      %v5192 = vpop.f32.mrf.mxu0
      %v5193 = vadd.f32 %v5104, %v5192
      %v5194 = vpop.f32.mrf.mxu0
      %v5195 = vadd.f32 %v5106, %v5194
      %5196 = vmatmul.bf16.gmra.mxu0 %v4348
      %v5197 = vpop.f32.mrf.mxu0
      %v5198 = vadd.f32 %v5109, %v5197
      %v5199 = vpop.f32.mrf.mxu0
      %v5200 = vadd.f32 %v5111, %v5199
      %5201 = vmatmul.bf16.gmra.mxu0 %v4357
      %v5202 = vpop.f32.mrf.mxu0
      %v5203 = vadd.f32 %v5114, %v5202
      %v5204 = vpop.f32.mrf.mxu0
      %v5205 = vadd.f32 %v5116, %v5204
      %5206 = vdwg.mxu0
      %5207 = vmatpush.bf16.msra.mxu0 %v4827
      %5208 = vmatpush.bf16.msra.mxu0 %v4826
      %5209 = vmatpush.bf16.msra.mxu0 %v4825
      %5210 = vmatpush.bf16.msra.mxu0 %v4824
      %5211 = vmatpush.bf16.msra.mxu0 %v4823
      %5212 = vmatpush.bf16.msra.mxu0 %v4822
      %5213 = vmatpush.bf16.msra.mxu0 %v4821
      %5214 = vmatpush.bf16.msra.mxu0 %v4820
      %5215 = vmatmul.bf16.gmra.mxu0 %v4223
      %v5216 = vpop.f32.mrf.mxu0
      %v5217 = vadd.f32 %v5128, %v5216
      %v5218 = vpop.f32.mrf.mxu0
      %v5219 = vadd.f32 %v5130, %v5218
      %5220 = vmatmul.bf16.gmra.mxu0 %v4232
      %v5221 = vpop.f32.mrf.mxu0
      %v5222 = vadd.f32 %v5133, %v5221
      %v5223 = vpop.f32.mrf.mxu0
      %v5224 = vadd.f32 %v5135, %v5223
      %5225 = vmatmul.bf16.gmra.mxu0 %v4241
      %v5226 = vpop.f32.mrf.mxu0
      %v5227 = vadd.f32 %v5138, %v5226
      %v5228 = vpop.f32.mrf.mxu0
      %v5229 = vadd.f32 %v5140, %v5228
      %5230 = vmatmul.bf16.gmra.mxu0 %v4250
      %v5231 = vpop.f32.mrf.mxu0
      %v5232 = vadd.f32 %v5143, %v5231
      %v5233 = vpop.f32.mrf.mxu0
      %v5234 = vadd.f32 %v5145, %v5233
      %5235 = vmatmul.bf16.gmra.mxu0 %v4259
      %v5236 = vpop.f32.mrf.mxu0
      %v5237 = vadd.f32 %v5148, %v5236
      %v5238 = vpop.f32.mrf.mxu0
      %v5239 = vadd.f32 %v5150, %v5238
      %5240 = vmatmul.bf16.gmra.mxu0 %v4268
      %v5241 = vpop.f32.mrf.mxu0
      %v5242 = vadd.f32 %v5153, %v5241
      %v5243 = vpop.f32.mrf.mxu0
      %v5244 = vadd.f32 %v5155, %v5243
      %5245 = vmatmul.bf16.gmra.mxu0 %v4277
      %v5246 = vpop.f32.mrf.mxu0
      %v5247 = vadd.f32 %v5158, %v5246
      %v5248 = vpop.f32.mrf.mxu0
      %v5249 = vadd.f32 %v5160, %v5248
      %5250 = vmatmul.bf16.gmra.mxu0 %v4286
      %v5251 = vpop.f32.mrf.mxu0
      %v5252 = vadd.f32 %v5163, %v5251
      %v5253 = vpop.f32.mrf.mxu0
      %v5254 = vadd.f32 %v5165, %v5253
      %5255 = vmatmul.bf16.gmra.mxu0 %v4295
      %v5256 = vpop.f32.mrf.mxu0
      %v5257 = vadd.f32 %v5168, %v5256
      %v5258 = vpop.f32.mrf.mxu0
      %v5259 = vadd.f32 %v5170, %v5258
      %5260 = vmatmul.bf16.gmra.mxu0 %v4304
      %v5261 = vpop.f32.mrf.mxu0
      %v5262 = vadd.f32 %v5173, %v5261
      %v5263 = vpop.f32.mrf.mxu0
      %v5264 = vadd.f32 %v5175, %v5263
      %5265 = vmatmul.bf16.gmra.mxu0 %v4313
      %v5266 = vpop.f32.mrf.mxu0
      %v5267 = vadd.f32 %v5178, %v5266
      %v5268 = vpop.f32.mrf.mxu0
      %v5269 = vadd.f32 %v5180, %v5268
      %5270 = vmatmul.bf16.gmra.mxu0 %v4322
      %v5271 = vpop.f32.mrf.mxu0
      %v5272 = vadd.f32 %v5183, %v5271
      %v5273 = vpop.f32.mrf.mxu0
      %v5274 = vadd.f32 %v5185, %v5273
      %5275 = vmatmul.bf16.gmra.mxu0 %v4331
      %v5276 = vpop.f32.mrf.mxu0
      %v5277 = vadd.f32 %v5188, %v5276
      %v5278 = vpop.f32.mrf.mxu0
      %v5279 = vadd.f32 %v5190, %v5278
      %5280 = vmatmul.bf16.gmra.mxu0 %v4340
      %v5281 = vpop.f32.mrf.mxu0
      %v5282 = vadd.f32 %v5193, %v5281
      %v5283 = vpop.f32.mrf.mxu0
      %v5284 = vadd.f32 %v5195, %v5283
      %5285 = vmatmul.bf16.gmra.mxu0 %v4349
      %v5286 = vpop.f32.mrf.mxu0
      %v5287 = vadd.f32 %v5198, %v5286
      %v5288 = vpop.f32.mrf.mxu0
      %v5289 = vadd.f32 %v5200, %v5288
      %5290 = vmatmul.bf16.gmra.mxu0 %v4358
      %v5291 = vpop.f32.mrf.mxu0
      %v5292 = vadd.f32 %v5203, %v5291
      %v5293 = vpop.f32.mrf.mxu0
      %v5294 = vadd.f32 %v5205, %v5293
      %5295 = vdwg.mxu0
      %5296 = vmatpush.bf16.msra.mxu0 %v4835
      %5297 = vmatpush.bf16.msra.mxu0 %v4834
      %5298 = vmatpush.bf16.msra.mxu0 %v4833
      %5299 = vmatpush.bf16.msra.mxu0 %v4832
      %5300 = vmatpush.bf16.msra.mxu0 %v4831
      %5301 = vmatpush.bf16.msra.mxu0 %v4830
      %5302 = vmatpush.bf16.msra.mxu0 %v4829
      %5303 = vmatpush.bf16.msra.mxu0 %v4828
      %5304 = vmatmul.bf16.gmra.mxu0 %v4224
      %v5305 = vpop.f32.mrf.mxu0
      %v5306 = vadd.f32 %v5217, %v5305
      %v5307 = vpop.f32.mrf.mxu0
      %v5308 = vadd.f32 %v5219, %v5307
      %5309 = vmatmul.bf16.gmra.mxu0 %v4233
      %v5310 = vpop.f32.mrf.mxu0
      %v5311 = vadd.f32 %v5222, %v5310
      %v5312 = vpop.f32.mrf.mxu0
      %v5313 = vadd.f32 %v5224, %v5312
      %5314 = vmatmul.bf16.gmra.mxu0 %v4242
      %v5315 = vpop.f32.mrf.mxu0
      %v5316 = vadd.f32 %v5227, %v5315
      %v5317 = vpop.f32.mrf.mxu0
      %v5318 = vadd.f32 %v5229, %v5317
      %5319 = vmatmul.bf16.gmra.mxu0 %v4251
      %v5320 = vpop.f32.mrf.mxu0
      %v5321 = vadd.f32 %v5232, %v5320
      %v5322 = vpop.f32.mrf.mxu0
      %v5323 = vadd.f32 %v5234, %v5322
      %5324 = vmatmul.bf16.gmra.mxu0 %v4260
      %v5325 = vpop.f32.mrf.mxu0
      %v5326 = vadd.f32 %v5237, %v5325
      %v5327 = vpop.f32.mrf.mxu0
      %v5328 = vadd.f32 %v5239, %v5327
      %5329 = vmatmul.bf16.gmra.mxu0 %v4269
      %v5330 = vpop.f32.mrf.mxu0
      %v5331 = vadd.f32 %v5242, %v5330
      %v5332 = vpop.f32.mrf.mxu0
      %v5333 = vadd.f32 %v5244, %v5332
      %5334 = vmatmul.bf16.gmra.mxu0 %v4278
      %v5335 = vpop.f32.mrf.mxu0
      %v5336 = vadd.f32 %v5247, %v5335
      %v5337 = vpop.f32.mrf.mxu0
      %v5338 = vadd.f32 %v5249, %v5337
      %5339 = vmatmul.bf16.gmra.mxu0 %v4287
      %v5340 = vpop.f32.mrf.mxu0
      %v5341 = vadd.f32 %v5252, %v5340
      %v5342 = vpop.f32.mrf.mxu0
      %v5343 = vadd.f32 %v5254, %v5342
      %5344 = vmatmul.bf16.gmra.mxu0 %v4296
      %v5345 = vpop.f32.mrf.mxu0
      %v5346 = vadd.f32 %v5257, %v5345
      %v5347 = vpop.f32.mrf.mxu0
      %v5348 = vadd.f32 %v5259, %v5347
      %5349 = vmatmul.bf16.gmra.mxu0 %v4305
      %v5350 = vpop.f32.mrf.mxu0
      %v5351 = vadd.f32 %v5262, %v5350
      %v5352 = vpop.f32.mrf.mxu0
      %v5353 = vadd.f32 %v5264, %v5352
      %5354 = vmatmul.bf16.gmra.mxu0 %v4314
      %v5355 = vpop.f32.mrf.mxu0
      %v5356 = vadd.f32 %v5267, %v5355
      %v5357 = vpop.f32.mrf.mxu0
      %v5358 = vadd.f32 %v5269, %v5357
      %5359 = vmatmul.bf16.gmra.mxu0 %v4323
      %v5360 = vpop.f32.mrf.mxu0
      %v5361 = vadd.f32 %v5272, %v5360
      %v5362 = vpop.f32.mrf.mxu0
      %v5363 = vadd.f32 %v5274, %v5362
      %5364 = vmatmul.bf16.gmra.mxu0 %v4332
      %v5365 = vpop.f32.mrf.mxu0
      %v5366 = vadd.f32 %v5277, %v5365
      %v5367 = vpop.f32.mrf.mxu0
      %v5368 = vadd.f32 %v5279, %v5367
      %5369 = vmatmul.bf16.gmra.mxu0 %v4341
      %v5370 = vpop.f32.mrf.mxu0
      %v5371 = vadd.f32 %v5282, %v5370
      %v5372 = vpop.f32.mrf.mxu0
      %v5373 = vadd.f32 %v5284, %v5372
      %5374 = vmatmul.bf16.gmra.mxu0 %v4350
      %v5375 = vpop.f32.mrf.mxu0
      %v5376 = vadd.f32 %v5287, %v5375
      %v5377 = vpop.f32.mrf.mxu0
      %v5378 = vadd.f32 %v5289, %v5377
      %5379 = vmatmul.bf16.gmra.mxu0 %v4359
      %v5380 = vpop.f32.mrf.mxu0
      %v5381 = vadd.f32 %v5292, %v5380
      %v5382 = vpop.f32.mrf.mxu0
      %v5383 = vadd.f32 %v5294, %v5382
      %5384 = vdwg.mxu0
      %5385 = vmatpush.bf16.msra.mxu0 %v4843
      %5386 = vmatpush.bf16.msra.mxu0 %v4842
      %5387 = vmatpush.bf16.msra.mxu0 %v4841
      %5388 = vmatpush.bf16.msra.mxu0 %v4840
      %5389 = vmatpush.bf16.msra.mxu0 %v4839
      %5390 = vmatpush.bf16.msra.mxu0 %v4838
      %5391 = vmatpush.bf16.msra.mxu0 %v4837
      %5392 = vmatpush.bf16.msra.mxu0 %v4836
      %5393 = vmatmul.bf16.gmra.mxu0 %v4225
      %v5394 = vpop.f32.mrf.mxu0
      %v5395 = vadd.f32 %v5306, %v5394
      %v5396 = vpop.f32.mrf.mxu0
      %v5397 = vadd.f32 %v5308, %v5396
      %5398 = vmatmul.bf16.gmra.mxu0 %v4234
      %v5399 = vpop.f32.mrf.mxu0
      %v5400 = vadd.f32 %v5311, %v5399
      %v5401 = vpop.f32.mrf.mxu0
      %v5402 = vadd.f32 %v5313, %v5401
      %5403 = vmatmul.bf16.gmra.mxu0 %v4243
      %v5404 = vpop.f32.mrf.mxu0
      %v5405 = vadd.f32 %v5316, %v5404
      %v5406 = vpop.f32.mrf.mxu0
      %v5407 = vadd.f32 %v5318, %v5406
      %5408 = vmatmul.bf16.gmra.mxu0 %v4252
      %v5409 = vpop.f32.mrf.mxu0
      %v5410 = vadd.f32 %v5321, %v5409
      %v5411 = vpop.f32.mrf.mxu0
      %v5412 = vadd.f32 %v5323, %v5411
      %5413 = vmatmul.bf16.gmra.mxu0 %v4261
      %v5414 = vpop.f32.mrf.mxu0
      %v5415 = vadd.f32 %v5326, %v5414
      %v5416 = vpop.f32.mrf.mxu0
      %v5417 = vadd.f32 %v5328, %v5416
      %5418 = vmatmul.bf16.gmra.mxu0 %v4270
      %v5419 = vpop.f32.mrf.mxu0
      %v5420 = vadd.f32 %v5331, %v5419
      %v5421 = vpop.f32.mrf.mxu0
      %v5422 = vadd.f32 %v5333, %v5421
      %5423 = vmatmul.bf16.gmra.mxu0 %v4279
      %v5424 = vpop.f32.mrf.mxu0
      %v5425 = vadd.f32 %v5336, %v5424
      %v5426 = vpop.f32.mrf.mxu0
      %v5427 = vadd.f32 %v5338, %v5426
      %5428 = vmatmul.bf16.gmra.mxu0 %v4288
      %v5429 = vpop.f32.mrf.mxu0
      %v5430 = vadd.f32 %v5341, %v5429
      %v5431 = vpop.f32.mrf.mxu0
      %v5432 = vadd.f32 %v5343, %v5431
      %5433 = vmatmul.bf16.gmra.mxu0 %v4297
      %v5434 = vpop.f32.mrf.mxu0
      %v5435 = vadd.f32 %v5346, %v5434
      %v5436 = vpop.f32.mrf.mxu0
      %v5437 = vadd.f32 %v5348, %v5436
      %5438 = vmatmul.bf16.gmra.mxu0 %v4306
      %v5439 = vpop.f32.mrf.mxu0
      %v5440 = vadd.f32 %v5351, %v5439
      %v5441 = vpop.f32.mrf.mxu0
      %v5442 = vadd.f32 %v5353, %v5441
      %5443 = vmatmul.bf16.gmra.mxu0 %v4315
      %v5444 = vpop.f32.mrf.mxu0
      %v5445 = vadd.f32 %v5356, %v5444
      %v5446 = vpop.f32.mrf.mxu0
      %v5447 = vadd.f32 %v5358, %v5446
      %5448 = vmatmul.bf16.gmra.mxu0 %v4324
      %v5449 = vpop.f32.mrf.mxu0
      %v5450 = vadd.f32 %v5361, %v5449
      %v5451 = vpop.f32.mrf.mxu0
      %v5452 = vadd.f32 %v5363, %v5451
      %5453 = vmatmul.bf16.gmra.mxu0 %v4333
      %v5454 = vpop.f32.mrf.mxu0
      %v5455 = vadd.f32 %v5366, %v5454
      %v5456 = vpop.f32.mrf.mxu0
      %v5457 = vadd.f32 %v5368, %v5456
      %5458 = vmatmul.bf16.gmra.mxu0 %v4342
      %v5459 = vpop.f32.mrf.mxu0
      %v5460 = vadd.f32 %v5371, %v5459
      %v5461 = vpop.f32.mrf.mxu0
      %v5462 = vadd.f32 %v5373, %v5461
      %5463 = vmatmul.bf16.gmra.mxu0 %v4351
      %v5464 = vpop.f32.mrf.mxu0
      %v5465 = vadd.f32 %v5376, %v5464
      %v5466 = vpop.f32.mrf.mxu0
      %v5467 = vadd.f32 %v5378, %v5466
      %5468 = vmatmul.bf16.gmra.mxu0 %v4360
      %v5469 = vpop.f32.mrf.mxu0
      %v5470 = vadd.f32 %v5381, %v5469
      %v5471 = vpop.f32.mrf.mxu0
      %v5472 = vadd.f32 %v5383, %v5471
      %5473 = vdwg.mxu0
      %5474 = vmatpush.bf16.msra.mxu0 %v4851
      %5475 = vmatpush.bf16.msra.mxu0 %v4850
      %5476 = vmatpush.bf16.msra.mxu0 %v4849
      %5477 = vmatpush.bf16.msra.mxu0 %v4848
      %5478 = vmatpush.bf16.msra.mxu0 %v4847
      %5479 = vmatpush.bf16.msra.mxu0 %v4846
      %5480 = vmatpush.bf16.msra.mxu0 %v4845
      %5481 = vmatpush.bf16.msra.mxu0 %v4844
      %5482 = vmatmul.bf16.gmra.mxu0 %v4226
      %v5483 = vpop.f32.mrf.mxu0
      %v5484 = vadd.f32 %v5395, %v5483
      %v5485 = vpop.f32.mrf.mxu0
      %v5486 = vadd.f32 %v5397, %v5485
      %5487 = vmatmul.bf16.gmra.mxu0 %v4235
      %v5488 = vpop.f32.mrf.mxu0
      %v5489 = vadd.f32 %v5400, %v5488
      %v5490 = vpop.f32.mrf.mxu0
      %v5491 = vadd.f32 %v5402, %v5490
      %5492 = vmatmul.bf16.gmra.mxu0 %v4244
      %v5493 = vpop.f32.mrf.mxu0
      %v5494 = vadd.f32 %v5405, %v5493
      %v5495 = vpop.f32.mrf.mxu0
      %v5496 = vadd.f32 %v5407, %v5495
      %5497 = vmatmul.bf16.gmra.mxu0 %v4253
      %v5498 = vpop.f32.mrf.mxu0
      %v5499 = vadd.f32 %v5410, %v5498
      %v5500 = vpop.f32.mrf.mxu0
      %v5501 = vadd.f32 %v5412, %v5500
      %5502 = vmatmul.bf16.gmra.mxu0 %v4262
      %v5503 = vpop.f32.mrf.mxu0
      %v5504 = vadd.f32 %v5415, %v5503
      %v5505 = vpop.f32.mrf.mxu0
      %v5506 = vadd.f32 %v5417, %v5505
      %5507 = vmatmul.bf16.gmra.mxu0 %v4271
      %v5508 = vpop.f32.mrf.mxu0
      %v5509 = vadd.f32 %v5420, %v5508
      %v5510 = vpop.f32.mrf.mxu0
      %v5511 = vadd.f32 %v5422, %v5510
      %5512 = vmatmul.bf16.gmra.mxu0 %v4280
      %v5513 = vpop.f32.mrf.mxu0
      %v5514 = vadd.f32 %v5425, %v5513
      %v5515 = vpop.f32.mrf.mxu0
      %v5516 = vadd.f32 %v5427, %v5515
      %5517 = vmatmul.bf16.gmra.mxu0 %v4289
      %v5518 = vpop.f32.mrf.mxu0
      %v5519 = vadd.f32 %v5430, %v5518
      %v5520 = vpop.f32.mrf.mxu0
      %v5521 = vadd.f32 %v5432, %v5520
      %5522 = vmatmul.bf16.gmra.mxu0 %v4298
      %v5523 = vpop.f32.mrf.mxu0
      %v5524 = vadd.f32 %v5435, %v5523
      %v5525 = vpop.f32.mrf.mxu0
      %v5526 = vadd.f32 %v5437, %v5525
      %5527 = vmatmul.bf16.gmra.mxu0 %v4307
      %v5528 = vpop.f32.mrf.mxu0
      %v5529 = vadd.f32 %v5440, %v5528
      %v5530 = vpop.f32.mrf.mxu0
      %v5531 = vadd.f32 %v5442, %v5530
      %5532 = vmatmul.bf16.gmra.mxu0 %v4316
      %v5533 = vpop.f32.mrf.mxu0
      %v5534 = vadd.f32 %v5445, %v5533
      %v5535 = vpop.f32.mrf.mxu0
      %v5536 = vadd.f32 %v5447, %v5535
      %5537 = vmatmul.bf16.gmra.mxu0 %v4325
      %v5538 = vpop.f32.mrf.mxu0
      %v5539 = vadd.f32 %v5450, %v5538
      %v5540 = vpop.f32.mrf.mxu0
      %v5541 = vadd.f32 %v5452, %v5540
      %5542 = vmatmul.bf16.gmra.mxu0 %v4334
      %v5543 = vpop.f32.mrf.mxu0
      %v5544 = vadd.f32 %v5455, %v5543
      %v5545 = vpop.f32.mrf.mxu0
      %v5546 = vadd.f32 %v5457, %v5545
      %5547 = vmatmul.bf16.gmra.mxu0 %v4343
      %v5548 = vpop.f32.mrf.mxu0
      %v5549 = vadd.f32 %v5460, %v5548
      %v5550 = vpop.f32.mrf.mxu0
      %v5551 = vadd.f32 %v5462, %v5550
      %5552 = vmatmul.bf16.gmra.mxu0 %v4352
      %v5553 = vpop.f32.mrf.mxu0
      %v5554 = vadd.f32 %v5465, %v5553
      %v5555 = vpop.f32.mrf.mxu0
      %v5556 = vadd.f32 %v5467, %v5555
      %5557 = vmatmul.bf16.gmra.mxu0 %v4361
      %v5558 = vpop.f32.mrf.mxu0
      %v5559 = vadd.f32 %v5470, %v5558
      %v5560 = vpop.f32.mrf.mxu0
      %v5561 = vadd.f32 %v5472, %v5560
      %5562 = vdwg.mxu0
      %5563 = vmatpush.bf16.msra.mxu0 %v4859
      %5564 = vmatpush.bf16.msra.mxu0 %v4858
      %5565 = vmatpush.bf16.msra.mxu0 %v4857
      %5566 = vmatpush.bf16.msra.mxu0 %v4856
      %5567 = vmatpush.bf16.msra.mxu0 %v4855
      %5568 = vmatpush.bf16.msra.mxu0 %v4854
      %5569 = vmatpush.bf16.msra.mxu0 %v4853
      %5570 = vmatpush.bf16.msra.mxu0 %v4852
      %5571 = vmatmul.bf16.gmra.mxu0 %v4227
      %v5572 = vpop.f32.mrf.mxu0
      %v5573 = vadd.f32 %v5484, %v5572
      %v5574 = vpop.f32.mrf.mxu0
      %v5575 = vadd.f32 %v5486, %v5574
      %5576 = vmatmul.bf16.gmra.mxu0 %v4236
      %v5577 = vpop.f32.mrf.mxu0
      %v5578 = vadd.f32 %v5489, %v5577
      %v5579 = vpop.f32.mrf.mxu0
      %v5580 = vadd.f32 %v5491, %v5579
      %5581 = vmatmul.bf16.gmra.mxu0 %v4245
      %v5582 = vpop.f32.mrf.mxu0
      %v5583 = vadd.f32 %v5494, %v5582
      %v5584 = vpop.f32.mrf.mxu0
      %v5585 = vadd.f32 %v5496, %v5584
      %5586 = vmatmul.bf16.gmra.mxu0 %v4254
      %v5587 = vpop.f32.mrf.mxu0
      %v5588 = vadd.f32 %v5499, %v5587
      %v5589 = vpop.f32.mrf.mxu0
      %v5590 = vadd.f32 %v5501, %v5589
      %5591 = vmatmul.bf16.gmra.mxu0 %v4263
      %v5592 = vpop.f32.mrf.mxu0
      %v5593 = vadd.f32 %v5504, %v5592
      %v5594 = vpop.f32.mrf.mxu0
      %v5595 = vadd.f32 %v5506, %v5594
      %5596 = vmatmul.bf16.gmra.mxu0 %v4272
      %v5597 = vpop.f32.mrf.mxu0
      %v5598 = vadd.f32 %v5509, %v5597
      %v5599 = vpop.f32.mrf.mxu0
      %v5600 = vadd.f32 %v5511, %v5599
      %5601 = vmatmul.bf16.gmra.mxu0 %v4281
      %v5602 = vpop.f32.mrf.mxu0
      %v5603 = vadd.f32 %v5514, %v5602
      %v5604 = vpop.f32.mrf.mxu0
      %v5605 = vadd.f32 %v5516, %v5604
      %5606 = vmatmul.bf16.gmra.mxu0 %v4290
      %v5607 = vpop.f32.mrf.mxu0
      %v5608 = vadd.f32 %v5519, %v5607
      %v5609 = vpop.f32.mrf.mxu0
      %v5610 = vadd.f32 %v5521, %v5609
      %5611 = vmatmul.bf16.gmra.mxu0 %v4299
      %v5612 = vpop.f32.mrf.mxu0
      %v5613 = vadd.f32 %v5524, %v5612
      %v5614 = vpop.f32.mrf.mxu0
      %v5615 = vadd.f32 %v5526, %v5614
      %5616 = vmatmul.bf16.gmra.mxu0 %v4308
      %v5617 = vpop.f32.mrf.mxu0
      %v5618 = vadd.f32 %v5529, %v5617
      %v5619 = vpop.f32.mrf.mxu0
      %v5620 = vadd.f32 %v5531, %v5619
      %5621 = vmatmul.bf16.gmra.mxu0 %v4317
      %v5622 = vpop.f32.mrf.mxu0
      %v5623 = vadd.f32 %v5534, %v5622
      %v5624 = vpop.f32.mrf.mxu0
      %v5625 = vadd.f32 %v5536, %v5624
      %5626 = vmatmul.bf16.gmra.mxu0 %v4326
      %v5627 = vpop.f32.mrf.mxu0
      %v5628 = vadd.f32 %v5539, %v5627
      %v5629 = vpop.f32.mrf.mxu0
      %v5630 = vadd.f32 %v5541, %v5629
      %5631 = vmatmul.bf16.gmra.mxu0 %v4335
      %v5632 = vpop.f32.mrf.mxu0
      %v5633 = vadd.f32 %v5544, %v5632
      %v5634 = vpop.f32.mrf.mxu0
      %v5635 = vadd.f32 %v5546, %v5634
      %5636 = vmatmul.bf16.gmra.mxu0 %v4344
      %v5637 = vpop.f32.mrf.mxu0
      %v5638 = vadd.f32 %v5549, %v5637
      %v5639 = vpop.f32.mrf.mxu0
      %v5640 = vadd.f32 %v5551, %v5639
      %5641 = vmatmul.bf16.gmra.mxu0 %v4353
      %v5642 = vpop.f32.mrf.mxu0
      %v5643 = vadd.f32 %v5554, %v5642
      %v5644 = vpop.f32.mrf.mxu0
      %v5645 = vadd.f32 %v5556, %v5644
      %5646 = vmatmul.bf16.gmra.mxu0 %v4362
      %v5647 = vpop.f32.mrf.mxu0
      %v5648 = vadd.f32 %v5559, %v5647
      %v5649 = vpop.f32.mrf.mxu0
      %v5650 = vadd.f32 %v5561, %v5649
      %5651 = vdwg.mxu0
      %5652 = vmatpush.bf16.msra.mxu0 %v4867
      %5653 = vmatpush.bf16.msra.mxu0 %v4866
      %5654 = vmatpush.bf16.msra.mxu0 %v4865
      %5655 = vmatpush.bf16.msra.mxu0 %v4864
      %5656 = vmatpush.bf16.msra.mxu0 %v4863
      %5657 = vmatpush.bf16.msra.mxu0 %v4862
      %5658 = vmatpush.bf16.msra.mxu0 %v4861
      %5659 = vmatpush.bf16.msra.mxu0 %v4860
      %5660 = vmatmul.bf16.gmra.mxu0 %v4228
      %v5661 = vpop.f32.mrf.mxu0
      %v5662 = vadd.f32 %v5573, %v5661
      %v5663 = vpop.f32.mrf.mxu0
      %v5664 = vadd.f32 %v5575, %v5663
      %5665 = vmatmul.bf16.gmra.mxu0 %v4237
      %v5666 = vpop.f32.mrf.mxu0
      %v5667 = vadd.f32 %v5578, %v5666
      %v5668 = vpop.f32.mrf.mxu0
      %v5669 = vadd.f32 %v5580, %v5668
      %5670 = vmatmul.bf16.gmra.mxu0 %v4246
      %v5671 = vpop.f32.mrf.mxu0
      %v5672 = vadd.f32 %v5583, %v5671
      %v5673 = vpop.f32.mrf.mxu0
      %v5674 = vadd.f32 %v5585, %v5673
      %5675 = vmatmul.bf16.gmra.mxu0 %v4255
      %v5676 = vpop.f32.mrf.mxu0
      %v5677 = vadd.f32 %v5588, %v5676
      %v5678 = vpop.f32.mrf.mxu0
      %v5679 = vadd.f32 %v5590, %v5678
      %5680 = vmatmul.bf16.gmra.mxu0 %v4264
      %v5681 = vpop.f32.mrf.mxu0
      %v5682 = vadd.f32 %v5593, %v5681
      %v5683 = vpop.f32.mrf.mxu0
      %v5684 = vadd.f32 %v5595, %v5683
      %5685 = vmatmul.bf16.gmra.mxu0 %v4273
      %v5686 = vpop.f32.mrf.mxu0
      %v5687 = vadd.f32 %v5598, %v5686
      %v5688 = vpop.f32.mrf.mxu0
      %v5689 = vadd.f32 %v5600, %v5688
      %5690 = vmatmul.bf16.gmra.mxu0 %v4282
      %v5691 = vpop.f32.mrf.mxu0
      %v5692 = vadd.f32 %v5603, %v5691
      %v5693 = vpop.f32.mrf.mxu0
      %v5694 = vadd.f32 %v5605, %v5693
      %5695 = vmatmul.bf16.gmra.mxu0 %v4291
      %v5696 = vpop.f32.mrf.mxu0
      %v5697 = vadd.f32 %v5608, %v5696
      %v5698 = vpop.f32.mrf.mxu0
      %v5699 = vadd.f32 %v5610, %v5698
      %5700 = vmatmul.bf16.gmra.mxu0 %v4300
      %v5701 = vpop.f32.mrf.mxu0
      %v5702 = vadd.f32 %v5613, %v5701
      %v5703 = vpop.f32.mrf.mxu0
      %v5704 = vadd.f32 %v5615, %v5703
      %5705 = vmatmul.bf16.gmra.mxu0 %v4309
      %v5706 = vpop.f32.mrf.mxu0
      %v5707 = vadd.f32 %v5618, %v5706
      %v5708 = vpop.f32.mrf.mxu0
      %v5709 = vadd.f32 %v5620, %v5708
      %5710 = vmatmul.bf16.gmra.mxu0 %v4318
      %v5711 = vpop.f32.mrf.mxu0
      %v5712 = vadd.f32 %v5623, %v5711
      %v5713 = vpop.f32.mrf.mxu0
      %v5714 = vadd.f32 %v5625, %v5713
      %5715 = vmatmul.bf16.gmra.mxu0 %v4327
      %v5716 = vpop.f32.mrf.mxu0
      %v5717 = vadd.f32 %v5628, %v5716
      %v5718 = vpop.f32.mrf.mxu0
      %v5719 = vadd.f32 %v5630, %v5718
      %5720 = vmatmul.bf16.gmra.mxu0 %v4336
      %v5721 = vpop.f32.mrf.mxu0
      %v5722 = vadd.f32 %v5633, %v5721
      %v5723 = vpop.f32.mrf.mxu0
      %v5724 = vadd.f32 %v5635, %v5723
      %5725 = vmatmul.bf16.gmra.mxu0 %v4345
      %v5726 = vpop.f32.mrf.mxu0
      %v5727 = vadd.f32 %v5638, %v5726
      %v5728 = vpop.f32.mrf.mxu0
      %v5729 = vadd.f32 %v5640, %v5728
      %5730 = vmatmul.bf16.gmra.mxu0 %v4354
      %v5731 = vpop.f32.mrf.mxu0
      %v5732 = vadd.f32 %v5643, %v5731
      %v5733 = vpop.f32.mrf.mxu0
      %v5734 = vadd.f32 %v5645, %v5733
      %5735 = vmatmul.bf16.gmra.mxu0 %v4363
      %v5736 = vpop.f32.mrf.mxu0
      %v5737 = vadd.f32 %v5648, %v5736
      %v5738 = vpop.f32.mrf.mxu0
      %v5739 = vadd.f32 %v5650, %v5738
      %5740 = vdwg.mxu0
      %v5741 = vld [vmem:[%s5] sm:$0x1]
      %v5743 = vperm.slane %v5741, 0
      %v5745 = vmul.f32 %v5662, %v5743
      %v5746 = vmul.f32 %v5664, %v5743
      %v5747 = vmul.f32 %v5667, %v5743
      %v5748 = vmul.f32 %v5669, %v5743
      %v5749 = vmul.f32 %v5672, %v5743
      %v5750 = vmul.f32 %v5674, %v5743
      %v5751 = vmul.f32 %v5677, %v5743
      %v5752 = vmul.f32 %v5679, %v5743
      %v5753 = vmul.f32 %v5682, %v5743
      %v5754 = vmul.f32 %v5684, %v5743
      %v5755 = vmul.f32 %v5687, %v5743
      %v5756 = vmul.f32 %v5689, %v5743
      %v5757 = vmul.f32 %v5692, %v5743
      %v5758 = vmul.f32 %v5694, %v5743
      %v5759 = vmul.f32 %v5697, %v5743
      %v5760 = vmul.f32 %v5699, %v5743
      %v5761 = vmul.f32 %v5702, %v5743
      %v5762 = vmul.f32 %v5704, %v5743
      %v5763 = vmul.f32 %v5707, %v5743
      %v5764 = vmul.f32 %v5709, %v5743
      %v5765 = vmul.f32 %v5712, %v5743
      %v5766 = vmul.f32 %v5714, %v5743
      %v5767 = vmul.f32 %v5717, %v5743
      %v5768 = vmul.f32 %v5719, %v5743
      %v5769 = vmul.f32 %v5722, %v5743
      %v5770 = vmul.f32 %v5724, %v5743
      %v5771 = vmul.f32 %v5727, %v5743
      %v5772 = vmul.f32 %v5729, %v5743
      %v5773 = vmul.f32 %v5732, %v5743
      %v5774 = vmul.f32 %v5734, %v5743
      %v5775 = vmul.f32 %v5737, %v5743
      %v5776 = vmul.f32 %v5739, %v5743
      %v5777 = vld [vmem:[%s6] sm:$0x1]
      %v5779 = vperm.slane %v5777, 0
      %v5781 = vadd.f32 %v5745, %v5779
      %v5782 = vadd.f32 %v5746, %v5779
      %v5783 = vadd.f32 %v5747, %v5779
      %v5784 = vadd.f32 %v5748, %v5779
      %v5785 = vadd.f32 %v5749, %v5779
      %v5786 = vadd.f32 %v5750, %v5779
      %v5787 = vadd.f32 %v5751, %v5779
      %v5788 = vadd.f32 %v5752, %v5779
      %v5789 = vadd.f32 %v5753, %v5779
      %v5790 = vadd.f32 %v5754, %v5779
      %v5791 = vadd.f32 %v5755, %v5779
      %v5792 = vadd.f32 %v5756, %v5779
      %v5793 = vadd.f32 %v5757, %v5779
      %v5794 = vadd.f32 %v5758, %v5779
      %v5795 = vadd.f32 %v5759, %v5779
      %v5796 = vadd.f32 %v5760, %v5779
      %v5797 = vadd.f32 %v5761, %v5779
      %v5798 = vadd.f32 %v5762, %v5779
      %v5799 = vadd.f32 %v5763, %v5779
      %v5800 = vadd.f32 %v5764, %v5779
      %v5801 = vadd.f32 %v5765, %v5779
      %v5802 = vadd.f32 %v5766, %v5779
      %v5803 = vadd.f32 %v5767, %v5779
      %v5804 = vadd.f32 %v5768, %v5779
      %v5805 = vadd.f32 %v5769, %v5779
      %v5806 = vadd.f32 %v5770, %v5779
      %v5807 = vadd.f32 %v5771, %v5779
      %v5808 = vadd.f32 %v5772, %v5779
      %v5809 = vadd.f32 %v5773, %v5779
      %v5810 = vadd.f32 %v5774, %v5779
      %v5811 = vadd.f32 %v5775, %v5779
      %v5812 = vadd.f32 %v5776, %v5779
      %v5813 = vmax.f32 %v5781, 0.0
      %v5814 = vmax.f32 %v5782, 0.0
      %v5815 = vmax.f32 %v5783, 0.0
      %v5816 = vmax.f32 %v5784, 0.0
      %v5817 = vmax.f32 %v5785, 0.0
      %v5818 = vmax.f32 %v5786, 0.0
      %v5819 = vmax.f32 %v5787, 0.0
      %v5820 = vmax.f32 %v5788, 0.0
      %v5821 = vmax.f32 %v5789, 0.0
      %v5822 = vmax.f32 %v5790, 0.0
      %v5823 = vmax.f32 %v5791, 0.0
      %v5824 = vmax.f32 %v5792, 0.0
      %v5825 = vmax.f32 %v5793, 0.0
      %v5826 = vmax.f32 %v5794, 0.0
      %v5827 = vmax.f32 %v5795, 0.0
      %v5828 = vmax.f32 %v5796, 0.0
      %v5829 = vmax.f32 %v5797, 0.0
      %v5830 = vmax.f32 %v5798, 0.0
      %v5831 = vmax.f32 %v5799, 0.0
      %v5832 = vmax.f32 %v5800, 0.0
      %v5833 = vmax.f32 %v5801, 0.0
      %v5834 = vmax.f32 %v5802, 0.0
      %v5835 = vmax.f32 %v5803, 0.0
      %v5836 = vmax.f32 %v5804, 0.0
      %v5837 = vmax.f32 %v5805, 0.0
      %v5838 = vmax.f32 %v5806, 0.0
      %v5839 = vmax.f32 %v5807, 0.0
      %v5840 = vmax.f32 %v5808, 0.0
      %v5841 = vmax.f32 %v5809, 0.0
      %v5842 = vmax.f32 %v5810, 0.0
      %v5843 = vmax.f32 %v5811, 0.0
      %v5844 = vmax.f32 %v5812, 0.0
      %v5845 = vld [vmem:[%s7] sm:$0xff]
      %v5846 = vld [vmem:[%s7 + $0x8] sm:$0xff]
      %5847 = vmatpush.msra.mxu0 %v5828
      %5848 = vmatpush.msra.mxu0 %v5827
      %5849 = vmatpush.msra.mxu0 %v5826
      %5850 = vmatpush.msra.mxu0 %v5825
      %5851 = vmatpush.msra.mxu0 %v5824
      %5852 = vmatpush.msra.mxu0 %v5823
      %5853 = vmatpush.msra.mxu0 %v5822
      %5854 = vmatpush.msra.mxu0 %v5821
      %5855 = vmatpush.msra.mxu0 %v5820
      %5856 = vmatpush.msra.mxu0 %v5819
      %5857 = vmatpush.msra.mxu0 %v5818
      %5858 = vmatpush.msra.mxu0 %v5817
      %5859 = vmatpush.msra.mxu0 %v5816
      %5860 = vmatpush.msra.mxu0 %v5815
      %5861 = vmatpush.msra.mxu0 %v5814
      %5862 = vmatpush.msra.mxu0 %v5813
      %5863 = vmatmul.f32.gmra.mxu0 %v5845
      %v5864 = vpop.f32.mrf.mxu0
      %v5865 = vadd.f32 0.0, %v5864
      %5866 = vdwg.mxu0
      %5867 = vmatpush.msra.mxu0 %v5844
      %5868 = vmatpush.msra.mxu0 %v5843
      %5869 = vmatpush.msra.mxu0 %v5842
      %5870 = vmatpush.msra.mxu0 %v5841
      %5871 = vmatpush.msra.mxu0 %v5840
      %5872 = vmatpush.msra.mxu0 %v5839
      %5873 = vmatpush.msra.mxu0 %v5838
      %5874 = vmatpush.msra.mxu0 %v5837
      %5875 = vmatpush.msra.mxu0 %v5836
      %5876 = vmatpush.msra.mxu0 %v5835
      %5877 = vmatpush.msra.mxu0 %v5834
      %5878 = vmatpush.msra.mxu0 %v5833
      %5879 = vmatpush.msra.mxu0 %v5832
      %5880 = vmatpush.msra.mxu0 %v5831
      %5881 = vmatpush.msra.mxu0 %v5830
      %5882 = vmatpush.msra.mxu0 %v5829
      %5883 = vmatmul.f32.gmra.mxu0 %v5846
      %v5884 = vpop.f32.mrf.mxu0
      %v5885 = vadd.f32 %v5865, %v5884
      %5886 = vdwg.mxu0
      %v5887 = vld [vmem:[%s8] sm:$0xff]
      %v5888 = vld [vmem:[%s8 + $0x8] sm:$0xff]
      %v5889 = vld [vmem:[%s8 + $0x10] sm:$0xff]
      %v5890 = vld [vmem:[%s8 + $0x18] sm:$0xff]
      %v5891 = vld [vmem:[%s8 + $0x20] sm:$0xff]
      %v5892 = vld [vmem:[%s8 + $0x28] sm:$0xff]
      %v5893 = vld [vmem:[%s8 + $0x30] sm:$0xff]
      %v5894 = vld [vmem:[%s8 + $0x38] sm:$0xff]
      %v5895 = vld [vmem:[%s8 + $0x40] sm:$0xff]
      %v5896 = vld [vmem:[%s8 + $0x48] sm:$0xff]
      %v5897 = vld [vmem:[%s8 + $0x50] sm:$0xff]
      %v5898 = vld [vmem:[%s8 + $0x58] sm:$0xff]
      %v5899 = vld [vmem:[%s8 + $0x60] sm:$0xff]
      %v5900 = vld [vmem:[%s8 + $0x68] sm:$0xff]
      %v5901 = vld [vmem:[%s8 + $0x70] sm:$0xff]
      %v5902 = vld [vmem:[%s8 + $0x78] sm:$0xff]
      %v5903 = vld [vmem:[%s9] sm:$0x1]
      %v5905 = vperm.slane %v5903, 0
      %5907 = vmatpush.msra.mxu0 %v5902
      %5908 = vmatpush.msra.mxu0 %v5901
      %5909 = vmatpush.msra.mxu0 %v5900
      %5910 = vmatpush.msra.mxu0 %v5899
      %5911 = vmatpush.msra.mxu0 %v5898
      %5912 = vmatpush.msra.mxu0 %v5897
      %5913 = vmatpush.msra.mxu0 %v5896
      %5914 = vmatpush.msra.mxu0 %v5895
      %5915 = vmatpush.msra.mxu0 %v5894
      %5916 = vmatpush.msra.mxu0 %v5893
      %5917 = vmatpush.msra.mxu0 %v5892
      %5918 = vmatpush.msra.mxu0 %v5891
      %5919 = vmatpush.msra.mxu0 %v5890
      %5920 = vmatpush.msra.mxu0 %v5889
      %5921 = vmatpush.msra.mxu0 %v5888
      %5922 = vmatpush.msra.mxu0 %v5887
      %5923 = vmatmul.f32.gmra.mxu0 %v5885
      %v5924 = vpop.f32.mrf.mxu0
      %v5925 = vadd.f32 %v5905, %v5924
      %5926 = vdwg.mxu0
      %5927 = vst [vmem:[%s359] sm:$0xff] %v5925
      %p5928 = scmp.lt.s32.totalorder %s21, 1
      %s5929 = scalar_select %p5928, %s21, 1
      %s5930 = smul.addr %s5929, 8
      %s5931 = scalar_lea.vmem %s10, %s5930
      // Predicated region
      $region61: #{timmnet_forward.1} parent=59 // pred_check
        %p5932 = pneg %p254
      $region62: #{timmnet_forward.1} parent=59 // pred_check_branch
        %5934 = sbr.rel (%p5932) target = $region64
      $region63: #{timmnet_forward.1} parent=59 // pred_region
        _
      $region64: #{timmnet_forward.1} parent=59 // pred_fallthru
        _
    $region60: #{timmnet_forward.1} parent=5 // pred_fallthru
      _
    %p5935 = scmp.le.s32.totalorder 2, %s16
    // Predicated region
    $region65: #{timmnet_forward.1} parent=5 // pred_check
      %p5936 = pneg %p5935
    $region66: #{timmnet_forward.1} parent=5 // pred_check_branch
      %5938 = sbr.rel (%p5936) target = $region68
    $region67: #{timmnet_forward.1} parent=5 // pred_region
      %s5939 = ssub.s32 %s16, 2
      // Predicated region
      $region69: #{timmnet_forward.1} parent=67 // pred_check
        %p5940 = pneg %p260
      $region70: #{timmnet_forward.1} parent=67 // pred_check_branch
        %5942 = sbr.rel (%p5940) target = $region72
      $region71: #{timmnet_forward.1} parent=67 // pred_region
        %p5943 = scmp.lt.s32.totalorder %s22, 1
        %s5944 = scalar_select %p5943, %s22, 1
        %s5945 = smul.addr %s5944, 8
        %s5946 = scalar_lea.vmem %s10, %s5945
      $region72: #{timmnet_forward.1} parent=67 // pred_fallthru
        _
    $region68: #{timmnet_forward.1} parent=5 // pred_fallthru
      _
  $region6: #{timmnet_forward.1} parent=0 // loop_footer
    %s20 = sadd.s32 1, %s16
  $region7: #{timmnet_forward.1} parent=0 // loop_footer_branch
    %15 = sbr.rel target = $region3
  $region8: #{timmnet_forward.1} parent=0 // loop_exit
    _

</llo_original>
